<compile_context>
chip_gen: v7x
topology: tpu7x:2x2x1
jax: 0.10.0
libtpu: 0.0.40
codegen_flags: <defaults>
</compile_context>

<pallas_src>
import jax
import jax.numpy as jnp
from jax.experimental import pallas as pl
from jax.experimental.pallas import tpu as pltpu

INPUT_SIZE = 32 * 32 * 3   # 3072
H1 = 512
H2 = 128
NUM_CLASSES = 10
C_PAD = 128                # class dim padded to one full lane group (dense vst)


def mlp_kernel(x_ref, w1_ref, b1_ref, w2_ref, b2_ref, w3_ref, b3_ref, o_ref):
    # Whole MLP fused in one pass: 3 MXU matmuls with f32 accumulation;
    # bias-add / ReLU stay in f32 on the VPU (v5e VPU has no bf16 path).
    x = x_ref[...]                                                        # (bm, 3072)
    h1 = jnp.dot(x, w1_ref[...], preferred_element_type=jnp.float32)      # (bm, 512) f32
    h1 = jnp.maximum(h1 + b1_ref[...], 0.0)
    h2 = jnp.dot(h1.astype(w2_ref.dtype), w2_ref[...],
                 preferred_element_type=jnp.float32)                      # (bm, 128) f32
    h2 = jnp.maximum(h2 + b2_ref[...], 0.0)
    out = jnp.dot(h2.astype(w3_ref.dtype), w3_ref[...],
                  preferred_element_type=jnp.float32)                     # (bm, 128) f32
    o_ref[...] = (out + b3_ref[...]).astype(o_ref.dtype)


def _round_up(x, m):
    return ((x + m - 1) // m) * m


def _tpu_vmem_capacity_bytes():
    """Per-core VMEM capacity; conservative 64 MiB (v7x) default if the query fails."""
    default = 64 * 1024 * 1024
    try:
        info = pltpu.get_tpu_info()
        return int(getattr(info, "vmem_capacity_bytes", default))
    except Exception:  # hardware-info query only; never masks kernel errors
        return default


def _derive_config(use_bf16):
    """Generation-aware tiling knobs, keyed off per-core VMEM size.
    128 MiB -> v5e/v6e (single TensorCore, huge VMEM); 64 MiB -> v7x (2 TCs/chip)."""
    vmem = _tpu_vmem_capacity_bytes()
    big_vmem = vmem >= 100 * 1024 * 1024
    if big_vmem:
        vmem_limit = 96 * 1024 * 1024
        bm_cap = 1024
        keep_two_steps = False      # single TC: fewest grid steps is best
    else:
        vmem_limit = 48 * 1024 * 1024
        bm_cap = 512 if use_bf16 else 256
        keep_two_steps = True       # v7x: keep >=2 steps so both TCs get work
    return vmem_limit, bm_cap, keep_two_steps


def _pick_bm(batch, bm_cap, align, keep_two_steps):
    """MXU-friendly, balanced batch tile.  Padding waste is bounded by ~align rows
    per grid step (boundary blocks are clipped by Pallas, no wrapper-side pad)."""
    b_al = _round_up(max(batch, 1), align)
    bm = min(bm_cap, b_al)
    n_steps = pl.cdiv(b_al, bm)
    if keep_two_steps and n_steps < 2 and b_al >= 256:
        n_steps = 2                 # dual-TC chips: give each core a >=128-row tile
    bm = _round_up(pl.cdiv(b_al, n_steps), align)
    return bm


def _build_call(bm, grid_m, batch, in_dtype, vmem_limit):
    itemsize = jnp.dtype(in_dtype).itemsize
    flops = 2 * batch * (INPUT_SIZE * H1 + H1 * H2 + H2 * C_PAD)
    bytes_accessed = int(
        batch * INPUT_SIZE * itemsize                              # x
        + (INPUT_SIZE * H1 + H1 * H2 + H2 * C_PAD) * itemsize      # weights
        + (H1 + H2 + C_PAD) * 4                                    # biases (f32)
        + batch * C_PAD * 4                                        # output (f32)
    )

    return pl.pallas_call(
        mlp_kernel,
        out_shape=jax.ShapeDtypeStruct((batch, C_PAD), jnp.float32),
        grid_spec=pltpu.PrefetchScalarGridSpec(
            num_scalar_prefetch=0,
            grid=(grid_m,),
            in_specs=[
                pl.BlockSpec((bm, INPUT_SIZE), lambda i: (i, 0)),   # x tile
                pl.BlockSpec((INPUT_SIZE, H1), lambda i: (0, 0)),   # W1 (grid-invariant)
                pl.BlockSpec((1, H1), lambda i: (0, 0)),            # b1
                pl.BlockSpec((H1, H2), lambda i: (0, 0)),           # W2
                pl.BlockSpec((1, H2), lambda i: (0, 0)),            # b2
                pl.BlockSpec((H2, C_PAD), lambda i: (0, 0)),        # W3 (lane-padded)
                pl.BlockSpec((1, C_PAD), lambda i: (0, 0)),         # b3 (lane-padded)
            ],
            out_specs=pl.BlockSpec((bm, C_PAD), lambda i: (i, 0)),  # lane-dense stores
        ),
        compiler_params=pltpu.CompilerParams(
            dimension_semantics=("parallel",),
            vmem_limit_bytes=vmem_limit,
        ),
        cost_estimate=pl.CostEstimate(
            flops=flops, transcendentals=0, bytes_accessed=bytes_accessed),
    )


def simple_mlp_forward(x_nchw, params, *, use_bf16=True):
    """x_nchw: (B, 3, 32, 32). Returns logits (B, 10) in float32."""
    w1, b1, w2, b2, w3, b3 = params
    B = x_nchw.shape[0]

    in_dtype = jnp.bfloat16 if use_bf16 else jnp.float32
    # torch.nn.Flatten (row-major) + a single cast pass (no f32 -> bf16 double cast).
    x = x_nchw.reshape(B, -1).astype(in_dtype)

    # Pad the class dimension to a full 128-lane block (sliced back below).
    w3p = jnp.zeros((H2, C_PAD), jnp.float32).at[:, :NUM_CLASSES].set(w3)
    b3p = jnp.zeros((1, C_PAD), jnp.float32).at[:, :NUM_CLASSES].set(b3)

    w1c, w2c, w3c = w1.astype(in_dtype), w2.astype(in_dtype), w3p.astype(in_dtype)
    b1c, b2c, b3c = b1.astype(jnp.float32), b2.astype(jnp.float32), b3p

    vmem_limit, bm_cap, keep_two_steps = _derive_config(use_bf16)
    align = 16 if use_bf16 else 8            # bf16 packs 2 rows per sublane
    bm = _pick_bm(B, bm_cap, align, keep_two_steps)
    grid_m = pl.cdiv(B, bm)

    call = _build_call(bm, grid_m, B, in_dtype, vmem_limit)
    out = call(x, w1c, b1c, w2c, b2c, w3c, b3c)
    return out[:, :NUM_CLASSES]


def init_params(key):
    """Deterministic init mimicking nn.Linear (uniform +/- 1/sqrt(fan_in)).
    Weights stored as (in, out) so the kernel computes y = x @ W + b."""
    def linear_init(k, fan_in, fan_out):
        kw, kb = jax.random.split(k)
        bound = 1.0 / jnp.sqrt(fan_in)
        w = jax.random.uniform(kw, (fan_in, fan_out), jnp.float32, -bound, bound)
        b = jax.random.uniform(kb, (1, fan_out), jnp.float32, -bound, bound)
        return w, b

    k1, k2, k3 = jax.random.split(key, 3)
    w1, b1 = linear_init(k1, INPUT_SIZE, H1)
    w2, b2 = linear_init(k2, H1, H2)
    w3, b3 = linear_init(k3, H2, NUM_CLASSES)
    return (w1, b1, w2, b2, w3, b3)


def _jax_reference(x_nchw, params):
    w1, b1, w2, b2, w3, b3 = params
    xf = x_nchw.reshape(x_nchw.shape[0], -1)
    h = jnp.maximum(xf @ w1 + b1, 0.0)
    h = jnp.maximum(h @ w2 + b2, 0.0)
    return h @ w3 + b3


if __name__ == "__main__":
    key = jax.random.PRNGKey(0)
    k_params, k_x = jax.random.split(key)

    params = init_params(k_params)
    # Small example input, NCHW like PyTorch (CIFAR-like: 3x32x32), batch=8.
    x = jax.random.normal(k_x, (8, 3, 32, 32), dtype=jnp.float32)
    ref = _jax_reference(x, params)

    # Default bf16 MXU path (f32 accumulation).
    logits = simple_mlp_forward(x, params)
    jax.block_until_ready(logits)
    assert logits.shape == (8, NUM_CLASSES)
    assert jnp.allclose(logits, ref, atol=5e-2, rtol=5e-2)

    # Full-precision path.
    logits_f32 = simple_mlp_forward(x, params, use_bf16=False)
    jax.block_until_ready(logits_f32)
    assert logits_f32.shape == (8, NUM_CLASSES)
    assert jnp.allclose(logits_f32, ref, atol=1e-4, rtol=1e-4)

    # Non-tile-aligned batch exercises the clipped boundary block (no wrapper pad).
    x_odd = jax.random.normal(jax.random.PRNGKey(1), (13, 3, 32, 32), dtype=jnp.float32)
    ref_odd = _jax_reference(x_odd, params)
    logits_odd = simple_mlp_forward(x_odd, params)
    jax.block_until_ready(logits_odd)
    assert logits_odd.shape == (13, NUM_CLASSES)
    assert jnp.allclose(logits_odd, ref_odd, atol=5e-2, rtol=5e-2)

    print("KERNEL_OK")
</pallas_src>

<mosaic_0001>
module attributes {stable_mosaic.version = 11 : i64} {
  func.func @mlp_kernel(%arg0: i32, %arg1: memref<16x3072xbf16, #tpu.memory_space<vmem>>, %arg2: memref<3072x512xbf16, #tpu.memory_space<vmem>>, %arg3: memref<1x512xf32, #tpu.memory_space<vmem>>, %arg4: memref<512x128xbf16, #tpu.memory_space<vmem>>, %arg5: memref<1x128xf32, #tpu.memory_space<vmem>>, %arg6: memref<128x128xbf16, #tpu.memory_space<vmem>>, %arg7: memref<1x128xf32, #tpu.memory_space<vmem>>, %arg8: memref<16x128xf32, #tpu.memory_space<vmem>>) attributes {dimension_semantics = [#tpu.dimension_semantics<parallel>], iteration_bounds = array<i64: 1>, scalar_prefetch = 0 : i64, scratch_operands = 0 : i64, tpu.core_type = #tpu.core_type<tc>, window_params = [{transform_indices = @transform_0, window_bounds = array<i64: 16, 3072>}, {pipeline_mode = #tpu.pipeline_mode<synchronous>, transform_indices = @transform_1, window_bounds = array<i64: 3072, 512>}, {pipeline_mode = #tpu.pipeline_mode<synchronous>, transform_indices = @transform_2, window_bounds = array<i64: 1, 512>}, {pipeline_mode = #tpu.pipeline_mode<synchronous>, transform_indices = @transform_3, window_bounds = array<i64: 512, 128>}, {pipeline_mode = #tpu.pipeline_mode<synchronous>, transform_indices = @transform_4, window_bounds = array<i64: 1, 128>}, {pipeline_mode = #tpu.pipeline_mode<synchronous>, transform_indices = @transform_5, window_bounds = array<i64: 128, 128>}, {pipeline_mode = #tpu.pipeline_mode<synchronous>, transform_indices = @transform_6, window_bounds = array<i64: 1, 128>}, {transform_indices = @transform_7, window_bounds = array<i64: 16, 128>}]} {
    %c0 = arith.constant 0 : index
    %c0_0 = arith.constant 0 : index
    %0 = vector.load %arg1[%c0, %c0_0] : memref<16x3072xbf16, #tpu.memory_space<vmem>>, vector<16x3072xbf16>
    %c0_1 = arith.constant 0 : index
    %c0_2 = arith.constant 0 : index
    %1 = vector.load %arg2[%c0_1, %c0_2] : memref<3072x512xbf16, #tpu.memory_space<vmem>>, vector<3072x512xbf16>
    %cst = arith.constant dense<0.000000e+00> : vector<16x512xf32>
    %2 = tpu.matmul %0, %1, %cst {dimension_numbers = #tpu.dot_dimension_numbers<[1], [0], [0], [1], [0, 0, 1, 1], [], []>} : vector<16x3072xbf16>, vector<3072x512xbf16>, vector<16x512xf32> -> vector<16x512xf32>
    %c0_3 = arith.constant 0 : index
    %c0_4 = arith.constant 0 : index
    %3 = vector.load %arg3[%c0_3, %c0_4] : memref<1x512xf32, #tpu.memory_space<vmem>>, vector<1x512xf32>
    %4 = vector.broadcast %3 : vector<1x512xf32> to vector<16x512xf32>
    %5 = arith.addf %2, %4 : vector<16x512xf32>
    %cst_5 = arith.constant 0.000000e+00 : f32
    %6 = vector.broadcast %cst_5 : f32 to vector<16x512xf32>
    %7 = arith.maximumf %5, %6 : vector<16x512xf32>
    %8 = arith.truncf %7 : vector<16x512xf32> to vector<16x512xbf16>
    %c0_6 = arith.constant 0 : index
    %c0_7 = arith.constant 0 : index
    %9 = vector.load %arg4[%c0_6, %c0_7] : memref<512x128xbf16, #tpu.memory_space<vmem>>, vector<512x128xbf16>
    %cst_8 = arith.constant dense<0.000000e+00> : vector<16x128xf32>
    %10 = tpu.matmul %8, %9, %cst_8 {dimension_numbers = #tpu.dot_dimension_numbers<[1], [0], [0], [1], [0, 0, 1, 1], [], []>} : vector<16x512xbf16>, vector<512x128xbf16>, vector<16x128xf32> -> vector<16x128xf32>
    %c0_9 = arith.constant 0 : index
    %c0_10 = arith.constant 0 : index
    %11 = vector.load %arg5[%c0_9, %c0_10] : memref<1x128xf32, #tpu.memory_space<vmem>>, vector<1x128xf32>
    %12 = vector.broadcast %11 : vector<1x128xf32> to vector<16x128xf32>
    %13 = arith.addf %10, %12 : vector<16x128xf32>
    %cst_11 = arith.constant 0.000000e+00 : f32
    %14 = vector.broadcast %cst_11 : f32 to vector<16x128xf32>
    %15 = arith.maximumf %13, %14 : vector<16x128xf32>
    %16 = arith.truncf %15 : vector<16x128xf32> to vector<16x128xbf16>
    %c0_12 = arith.constant 0 : index
    %c0_13 = arith.constant 0 : index
    %17 = vector.load %arg6[%c0_12, %c0_13] : memref<128x128xbf16, #tpu.memory_space<vmem>>, vector<128x128xbf16>
    %cst_14 = arith.constant dense<0.000000e+00> : vector<16x128xf32>
    %18 = tpu.matmul %16, %17, %cst_14 {dimension_numbers = #tpu.dot_dimension_numbers<[1], [0], [0], [1], [0, 0, 1, 1], [], []>} : vector<16x128xbf16>, vector<128x128xbf16>, vector<16x128xf32> -> vector<16x128xf32>
    %c0_15 = arith.constant 0 : index
    %c0_16 = arith.constant 0 : index
    %19 = vector.load %arg7[%c0_15, %c0_16] : memref<1x128xf32, #tpu.memory_space<vmem>>, vector<1x128xf32>
    %20 = vector.broadcast %19 : vector<1x128xf32> to vector<16x128xf32>
    %21 = arith.addf %18, %20 : vector<16x128xf32>
    %c0_17 = arith.constant 0 : index
    %c0_18 = arith.constant 0 : index
    %22 = vector.load %arg8[%c0_17, %c0_18] : memref<16x128xf32, #tpu.memory_space<vmem>>, vector<16x128xf32>
    tpu.vector_store %arg8[%c0_17, %c0_18], %21 {strides = array<i32>} : memref<16x128xf32, #tpu.memory_space<vmem>>, vector<16x128xf32>,
    return
  }
  func.func @transform_0(%arg0: i32) -> (i32, i32) {
    %c0_i32 = arith.constant 0 : i32
    %c0_i32_0 = arith.constant 0 : i32
    return %arg0, %c0_i32 : i32, i32
  }
  func.func @transform_1(%arg0: i32) -> (i32, i32) {
    %c0_i32 = arith.constant 0 : i32
    %c0_i32_0 = arith.constant 0 : i32
    %c0_i32_1 = arith.constant 0 : i32
    return %c0_i32, %c0_i32_0 : i32, i32
  }
  func.func @transform_2(%arg0: i32) -> (i32, i32) {
    %c0_i32 = arith.constant 0 : i32
    %c0_i32_0 = arith.constant 0 : i32
    %c0_i32_1 = arith.constant 0 : i32
    return %c0_i32, %c0_i32_0 : i32, i32
  }
  func.func @transform_3(%arg0: i32) -> (i32, i32) {
    %c0_i32 = arith.constant 0 : i32
    %c0_i32_0 = arith.constant 0 : i32
    %c0_i32_1 = arith.constant 0 : i32
    return %c0_i32, %c0_i32_0 : i32, i32
  }
  func.func @transform_4(%arg0: i32) -> (i32, i32) {
    %c0_i32 = arith.constant 0 : i32
    %c0_i32_0 = arith.constant 0 : i32
    %c0_i32_1 = arith.constant 0 : i32
    return %c0_i32, %c0_i32_0 : i32, i32
  }
  func.func @transform_5(%arg0: i32) -> (i32, i32) {
    %c0_i32 = arith.constant 0 : i32
    %c0_i32_0 = arith.constant 0 : i32
    %c0_i32_1 = arith.constant 0 : i32
    return %c0_i32, %c0_i32_0 : i32, i32
  }
  func.func @transform_6(%arg0: i32) -> (i32, i32) {
    %c0_i32 = arith.constant 0 : i32
    %c0_i32_0 = arith.constant 0 : i32
    %c0_i32_1 = arith.constant 0 : i32
    return %c0_i32, %c0_i32_0 : i32, i32
  }
  func.func @transform_7(%arg0: i32) -> (i32, i32) {
    %c0_i32 = arith.constant 0 : i32
    %c0_i32_0 = arith.constant 0 : i32
    return %arg0, %c0_i32 : i32, i32
  }
}

</mosaic_0001>

<llo_original>
// kernel: tpu_custom_call.1
$region0: #{tpu_custom_call.1}
  #allocation0 [shape = 'u32[]', space=smem, size = 0x4, offset = 0x4, fixed_abs, tag = 'smem constant byte address 0x4 - core index']
  #allocation1 [shape = 'u32[144,128]{1,0:T(1,128)}', space=vmem, size = 0x12000, scoped, tag = 'internal scratch']
  %s0 = inlined_call_operand.hbm [shape: bf16[8,3072], index: 0, kind: input, shape index: {}]
  %s1 = inlined_call_operand.hbm [shape: bf16[3072,512], index: 1, kind: input, shape index: {}]
  %s2 = inlined_call_operand.hbm [shape: f32[1,512], index: 2, kind: input, shape index: {}]
  %s3 = inlined_call_operand.hbm [shape: bf16[512,128], index: 3, kind: input, shape index: {}]
  %s4 = inlined_call_operand.hbm [shape: f32[1,128], index: 4, kind: input, shape index: {}]
  %s5 = inlined_call_operand.hbm [shape: bf16[128,128], index: 5, kind: input, shape index: {}]
  %s6 = inlined_call_operand.hbm [shape: f32[1,128], index: 6, kind: input, shape index: {}]
  %s7 = inlined_call_operand.hbm [shape: f32[8,128], index: 7, kind: output, shape index: {}]
  %s8 = sld [smem:[#allocation0]]
  $region66: #{tpu_custom_call.1} parent=0
    _
  %s10 = ssub.s32 1, %s8
  %s11 = scalar_select 0, %s10, %s8
  $region1: #{tpu_custom_call.1} parent=0
    #allocation2 [shape = 'u8[98304]{0}', space=vmem, size = 0x18000, scoped, tag = 'input window, operand 0, single buffered']
    #allocation3 [shape = 's32[1]{0}', space=sflag, size = 0x4, scoped, tag = 'scoped memory for tpu_custom_call.1']
    #allocation4 [shape = 's32[1]{0}', space=sflag, size = 0x4, scoped, tag = 'scoped memory for tpu_custom_call.1']
    #allocation5 [shape = 'u8[3145728]{0}', space=vmem, size = 0x300000, scoped, tag = 'input window, operand 1, single buffered']
    #allocation6 [shape = 's32[1]{0}', space=sflag, size = 0x4, scoped, tag = 'scoped memory for tpu_custom_call.1']
    #allocation7 [shape = 'u8[2048]{0}', space=vmem, size = 0x800, scoped, tag = 'input window, operand 2, single buffered']
    #allocation8 [shape = 'u8[131072]{0}', space=vmem, size = 0x20000, scoped, tag = 'input window, operand 3, single buffered']
    #allocation9 [shape = 's32[1]{0}', space=sflag, size = 0x4, scoped, tag = 'scoped memory for tpu_custom_call.1']
    #allocation10 [shape = 'u8[512]{0}', space=vmem, size = 0x400, scoped, tag = 'input window, operand 4, single buffered']
    #allocation11 [shape = 'u8[32768]{0}', space=vmem, size = 0x8000, scoped, tag = 'input window, operand 5, single buffered']
    #allocation12 [shape = 's32[1]{0}', space=sflag, size = 0x4, scoped, tag = 'scoped memory for tpu_custom_call.1']
    #allocation13 [shape = 'u8[512]{0}', space=vmem, size = 0x400, scoped, tag = 'input window, operand 6, single buffered']
    #allocation14 [shape = 'u8[8192]{0}', space=vmem, size = 0x2000, scoped, tag = 'output window, operand 0, single buffered']
    %12 = vsyncpa [#allocation3], 0
    %13 = vsyncpa [#allocation6], 0
    %14 = vsyncpa [#allocation9], 0
    %15 = vsyncpa [#allocation12], 0
    %16 = vsyncpa [#allocation4], 0
    // Predicated region
    $region2: #{tpu_custom_call.1} parent=1 // pred_check
      _
    $region3: #{tpu_custom_call.1} parent=1 // pred_check_branch
      %18 = sbr.rel (0) target = $region5
    $region4: #{tpu_custom_call.1} parent=1 // pred_region
      %s20 = ssub.s32 3072, 1536
      %21 = vsyncadd [#allocation3], %s20
      %s22 = sshll.u32 [#allocation2], 4
      %s23 = int_to_ptr.vmem [resolvable:$true] %s22
      %28 = dma.hbm_to_vmem [thread:$0]  %s0, 1536, %s23, [#allocation3], 1536, 1536, 96
    $region5: #{tpu_custom_call.1} parent=1 // pred_fallthru
      _
    // Predicated region
    $region6: #{tpu_custom_call.1} parent=1 // pred_check
      _
    $region7: #{tpu_custom_call.1} parent=1 // pred_check_branch
      %30 = sbr.rel (0) target = $region9
    $region8: #{tpu_custom_call.1} parent=1 // pred_region
      %s32 = ssub.s32 98304, 98304
      %33 = vsyncadd [#allocation6], %s32
      %s34 = sshll.u32 [#allocation5], 4
      %s35 = int_to_ptr.vmem [resolvable:$true] %s34
      %40 = dma.hbm_to_vmem [thread:$0]  %s1, 98304, %s35, [#allocation6], 256, 256, 16
    $region9: #{tpu_custom_call.1} parent=1 // pred_fallthru
      _
    // Predicated region
    $region10: #{tpu_custom_call.1} parent=1 // pred_check
      _
    $region11: #{tpu_custom_call.1} parent=1 // pred_check_branch
      %42 = sbr.rel (0) target = $region13
    $region12: #{tpu_custom_call.1} parent=1 // pred_region
      %s44 = ssub.s32 64, 64
      %45 = vsyncadd [#allocation6], %s44
      %s47 = sshll.u32 [#allocation7], 4
      %s48 = int_to_ptr.vmem [resolvable:$true] %s47
      %50 = dma.hbm_to_vmem [thread:$0]  %s2, 64, %s48, [#allocation6]
    $region13: #{tpu_custom_call.1} parent=1 // pred_fallthru
      _
    // Predicated region
    $region14: #{tpu_custom_call.1} parent=1 // pred_check
      _
    $region15: #{tpu_custom_call.1} parent=1 // pred_check_branch
      %52 = sbr.rel (0) target = $region17
    $region16: #{tpu_custom_call.1} parent=1 // pred_region
      %s54 = ssub.s32 4096, 4096
      %55 = vsyncadd [#allocation9], %s54
      %s56 = sshll.u32 [#allocation8], 4
      %s57 = int_to_ptr.vmem [resolvable:$true] %s56
      %62 = dma.hbm_to_vmem [thread:$0]  %s3, 4096, %s57, [#allocation9], 64, 64, 4
    $region17: #{tpu_custom_call.1} parent=1 // pred_fallthru
      _
    // Predicated region
    $region18: #{tpu_custom_call.1} parent=1 // pred_check
      _
    $region19: #{tpu_custom_call.1} parent=1 // pred_check_branch
      %64 = sbr.rel (0) target = $region21
    $region20: #{tpu_custom_call.1} parent=1 // pred_region
      %s66 = ssub.s32 16, 16
      %67 = vsyncadd [#allocation9], %s66
      %s69 = sshll.u32 [#allocation10], 4
      %s70 = int_to_ptr.vmem [resolvable:$true] %s69
      %72 = dma.hbm_to_vmem [thread:$0]  %s4, 16, %s70, [#allocation9]
    $region21: #{tpu_custom_call.1} parent=1 // pred_fallthru
      _
    // Predicated region
    $region22: #{tpu_custom_call.1} parent=1 // pred_check
      _
    $region23: #{tpu_custom_call.1} parent=1 // pred_check_branch
      %74 = sbr.rel (0) target = $region25
    $region24: #{tpu_custom_call.1} parent=1 // pred_region
      %s76 = ssub.s32 1024, 1024
      %77 = vsyncadd [#allocation12], %s76
      %s78 = sshll.u32 [#allocation11], 4
      %s79 = int_to_ptr.vmem [resolvable:$true] %s78
      %84 = dma.hbm_to_vmem [thread:$0]  %s5, 1024, %s79, [#allocation12], 64, 64, 4
    $region25: #{tpu_custom_call.1} parent=1 // pred_fallthru
      _
    // Predicated region
    $region26: #{tpu_custom_call.1} parent=1 // pred_check
      _
    $region27: #{tpu_custom_call.1} parent=1 // pred_check_branch
      %86 = sbr.rel (0) target = $region29
    $region28: #{tpu_custom_call.1} parent=1 // pred_region
      %s88 = ssub.s32 16, 16
      %89 = vsyncadd [#allocation12], %s88
      %s91 = sshll.u32 [#allocation13], 4
      %s92 = int_to_ptr.vmem [resolvable:$true] %s91
      %94 = dma.hbm_to_vmem [thread:$0]  %s6, 16, %s92, [#allocation12]
    $region29: #{tpu_custom_call.1} parent=1 // pred_fallthru
      _
    // Predicated region
    $region30: #{tpu_custom_call.1} parent=1 // pred_check
      _
    $region31: #{tpu_custom_call.1} parent=1 // pred_check_branch
      %96 = sbr.rel (0) target = $region33
    $region32: #{tpu_custom_call.1} parent=1 // pred_region
      %97 = dma.done [#allocation3], 3072
    $region33: #{tpu_custom_call.1} parent=1 // pred_fallthru
      _
    // Predicated region
    $region34: #{tpu_custom_call.1} parent=1 // pred_check
      _
    $region35: #{tpu_custom_call.1} parent=1 // pred_check_branch
      %99 = sbr.rel (0) target = $region37
    $region36: #{tpu_custom_call.1} parent=1 // pred_region
      %100 = dma.done [#allocation6], 98304
    $region37: #{tpu_custom_call.1} parent=1 // pred_fallthru
      _
    // Predicated region
    $region38: #{tpu_custom_call.1} parent=1 // pred_check
      _
    $region39: #{tpu_custom_call.1} parent=1 // pred_check_branch
      %102 = sbr.rel (0) target = $region41
    $region40: #{tpu_custom_call.1} parent=1 // pred_region
      %103 = dma.done [#allocation6], 64
    $region41: #{tpu_custom_call.1} parent=1 // pred_fallthru
      _
    // Predicated region
    $region42: #{tpu_custom_call.1} parent=1 // pred_check
      _
    $region43: #{tpu_custom_call.1} parent=1 // pred_check_branch
      %105 = sbr.rel (0) target = $region45
    $region44: #{tpu_custom_call.1} parent=1 // pred_region
      %106 = dma.done [#allocation9], 4096
    $region45: #{tpu_custom_call.1} parent=1 // pred_fallthru
      _
    // Predicated region
    $region46: #{tpu_custom_call.1} parent=1 // pred_check
      _
    $region47: #{tpu_custom_call.1} parent=1 // pred_check_branch
      %108 = sbr.rel (0) target = $region49
    $region48: #{tpu_custom_call.1} parent=1 // pred_region
      %109 = dma.done [#allocation9], 16
    $region49: #{tpu_custom_call.1} parent=1 // pred_fallthru
      _
    // Predicated region
    $region50: #{tpu_custom_call.1} parent=1 // pred_check
      _
    $region51: #{tpu_custom_call.1} parent=1 // pred_check_branch
      %111 = sbr.rel (0) target = $region53
    $region52: #{tpu_custom_call.1} parent=1 // pred_region
      %112 = dma.done [#allocation12], 1024
    $region53: #{tpu_custom_call.1} parent=1 // pred_fallthru
      _
    // Predicated region
    $region54: #{tpu_custom_call.1} parent=1 // pred_check
      _
    $region55: #{tpu_custom_call.1} parent=1 // pred_check_branch
      %114 = sbr.rel (0) target = $region57
    $region56: #{tpu_custom_call.1} parent=1 // pred_region
      %115 = dma.done [#allocation12], 16
    $region57: #{tpu_custom_call.1} parent=1 // pred_fallthru
      _
    %v117 = vld [vmem:[#allocation2] sm:$0xff]
    %v118 = vld [vmem:[#allocation2 + $0x8] sm:$0xff]
    %v119 = vld [vmem:[#allocation2 + $0x10] sm:$0xff]
    %v120 = vld [vmem:[#allocation2 + $0x18] sm:$0xff]
    %v121 = vld [vmem:[#allocation2 + $0x20] sm:$0xff]
    %v122 = vld [vmem:[#allocation2 + $0x28] sm:$0xff]
    %v123 = vld [vmem:[#allocation2 + $0x30] sm:$0xff]
    %v124 = vld [vmem:[#allocation2 + $0x38] sm:$0xff]
    %v125 = vld [vmem:[#allocation2 + $0x40] sm:$0xff]
    %v126 = vld [vmem:[#allocation2 + $0x48] sm:$0xff]
    %v127 = vld [vmem:[#allocation2 + $0x50] sm:$0xff]
    %v128 = vld [vmem:[#allocation2 + $0x58] sm:$0xff]
    %v129 = vld [vmem:[#allocation2 + $0x60] sm:$0xff]
    %v130 = vld [vmem:[#allocation2 + $0x68] sm:$0xff]
    %v131 = vld [vmem:[#allocation2 + $0x70] sm:$0xff]
    %v132 = vld [vmem:[#allocation2 + $0x78] sm:$0xff]
    %v133 = vld [vmem:[#allocation2 + $0x80] sm:$0xff]
    %v134 = vld [vmem:[#allocation2 + $0x88] sm:$0xff]
    %v135 = vld [vmem:[#allocation2 + $0x90] sm:$0xff]
    %v136 = vld [vmem:[#allocation2 + $0x98] sm:$0xff]
    %v137 = vld [vmem:[#allocation2 + $0xa0] sm:$0xff]
    %v138 = vld [vmem:[#allocation2 + $0xa8] sm:$0xff]
    %v139 = vld [vmem:[#allocation2 + $0xb0] sm:$0xff]
    %v140 = vld [vmem:[#allocation2 + $0xb8] sm:$0xff]
    %v141 = vld [vmem:[#allocation5] sm:$0xff]
    %v142 = vld [vmem:[#allocation5 + $0x8] sm:$0xff]
    %v143 = vld [vmem:[#allocation5 + $0x10] sm:$0xff]
    %v144 = vld [vmem:[#allocation5 + $0x18] sm:$0xff]
    %v145 = vld [vmem:[#allocation5 + $0x20] sm:$0xff]
    %v146 = vld [vmem:[#allocation5 + $0x28] sm:$0xff]
    %v147 = vld [vmem:[#allocation5 + $0x30] sm:$0xff]
    %v148 = vld [vmem:[#allocation5 + $0x38] sm:$0xff]
    %v149 = vld [vmem:[#allocation5 + $0x40] sm:$0xff]
    %v150 = vld [vmem:[#allocation5 + $0x48] sm:$0xff]
    %v151 = vld [vmem:[#allocation5 + $0x50] sm:$0xff]
    %v152 = vld [vmem:[#allocation5 + $0x58] sm:$0xff]
    %v153 = vld [vmem:[#allocation5 + $0x60] sm:$0xff]
    %v154 = vld [vmem:[#allocation5 + $0x68] sm:$0xff]
    %v155 = vld [vmem:[#allocation5 + $0x70] sm:$0xff]
    %v156 = vld [vmem:[#allocation5 + $0x78] sm:$0xff]
    %v157 = vld [vmem:[#allocation5 + $0x80] sm:$0xff]
    %v158 = vld [vmem:[#allocation5 + $0x88] sm:$0xff]
    %v159 = vld [vmem:[#allocation5 + $0x90] sm:$0xff]
    %v160 = vld [vmem:[#allocation5 + $0x98] sm:$0xff]
    %v161 = vld [vmem:[#allocation5 + $0xa0] sm:$0xff]
    %v162 = vld [vmem:[#allocation5 + $0xa8] sm:$0xff]
    %v163 = vld [vmem:[#allocation5 + $0xb0] sm:$0xff]
    %v164 = vld [vmem:[#allocation5 + $0xb8] sm:$0xff]
    %v165 = vld [vmem:[#allocation5 + $0xc0] sm:$0xff]
    %v166 = vld [vmem:[#allocation5 + $0xc8] sm:$0xff]
    %v167 = vld [vmem:[#allocation5 + $0xd0] sm:$0xff]
    %v168 = vld [vmem:[#allocation5 + $0xd8] sm:$0xff]
    %v169 = vld [vmem:[#allocation5 + $0xe0] sm:$0xff]
    %v170 = vld [vmem:[#allocation5 + $0xe8] sm:$0xff]
    %v171 = vld [vmem:[#allocation5 + $0xf0] sm:$0xff]
    %v172 = vld [vmem:[#allocation5 + $0xf8] sm:$0xff]
    %v173 = vld [vmem:[#allocation5 + $0x100] sm:$0xff]
    %v174 = vld [vmem:[#allocation5 + $0x108] sm:$0xff]
    %v175 = vld [vmem:[#allocation5 + $0x110] sm:$0xff]
    %v176 = vld [vmem:[#allocation5 + $0x118] sm:$0xff]
    %v177 = vld [vmem:[#allocation5 + $0x120] sm:$0xff]
    %v178 = vld [vmem:[#allocation5 + $0x128] sm:$0xff]
    %v179 = vld [vmem:[#allocation5 + $0x130] sm:$0xff]
    %v180 = vld [vmem:[#allocation5 + $0x138] sm:$0xff]
    %v181 = vld [vmem:[#allocation5 + $0x140] sm:$0xff]
    %v182 = vld [vmem:[#allocation5 + $0x148] sm:$0xff]
    %v183 = vld [vmem:[#allocation5 + $0x150] sm:$0xff]
    %v184 = vld [vmem:[#allocation5 + $0x158] sm:$0xff]
    %v185 = vld [vmem:[#allocation5 + $0x160] sm:$0xff]
    %v186 = vld [vmem:[#allocation5 + $0x168] sm:$0xff]
    %v187 = vld [vmem:[#allocation5 + $0x170] sm:$0xff]
    %v188 = vld [vmem:[#allocation5 + $0x178] sm:$0xff]
    %v189 = vld [vmem:[#allocation5 + $0x180] sm:$0xff]
    %v190 = vld [vmem:[#allocation5 + $0x188] sm:$0xff]
    %v191 = vld [vmem:[#allocation5 + $0x190] sm:$0xff]
    %v192 = vld [vmem:[#allocation5 + $0x198] sm:$0xff]
    %v193 = vld [vmem:[#allocation5 + $0x1a0] sm:$0xff]
    %v194 = vld [vmem:[#allocation5 + $0x1a8] sm:$0xff]
    %v195 = vld [vmem:[#allocation5 + $0x1b0] sm:$0xff]
    %v196 = vld [vmem:[#allocation5 + $0x1b8] sm:$0xff]
    %v197 = vld [vmem:[#allocation5 + $0x1c0] sm:$0xff]
    %v198 = vld [vmem:[#allocation5 + $0x1c8] sm:$0xff]
    %v199 = vld [vmem:[#allocation5 + $0x1d0] sm:$0xff]
    %v200 = vld [vmem:[#allocation5 + $0x1d8] sm:$0xff]
    %v201 = vld [vmem:[#allocation5 + $0x1e0] sm:$0xff]
    %v202 = vld [vmem:[#allocation5 + $0x1e8] sm:$0xff]
    %v203 = vld [vmem:[#allocation5 + $0x1f0] sm:$0xff]
    %v204 = vld [vmem:[#allocation5 + $0x1f8] sm:$0xff]
    %v205 = vld [vmem:[#allocation5 + $0x200] sm:$0xff]
    %v206 = vld [vmem:[#allocation5 + $0x208] sm:$0xff]
    %v207 = vld [vmem:[#allocation5 + $0x210] sm:$0xff]
    %v208 = vld [vmem:[#allocation5 + $0x218] sm:$0xff]
    %v209 = vld [vmem:[#allocation5 + $0x220] sm:$0xff]
    %v210 = vld [vmem:[#allocation5 + $0x228] sm:$0xff]
    %v211 = vld [vmem:[#allocation5 + $0x230] sm:$0xff]
    %v212 = vld [vmem:[#allocation5 + $0x238] sm:$0xff]
    %v213 = vld [vmem:[#allocation5 + $0x240] sm:$0xff]
    %v214 = vld [vmem:[#allocation5 + $0x248] sm:$0xff]
    %v215 = vld [vmem:[#allocation5 + $0x250] sm:$0xff]
    %v216 = vld [vmem:[#allocation5 + $0x258] sm:$0xff]
    %v217 = vld [vmem:[#allocation5 + $0x260] sm:$0xff]
    %v218 = vld [vmem:[#allocation5 + $0x268] sm:$0xff]
    %v219 = vld [vmem:[#allocation5 + $0x270] sm:$0xff]
    %v220 = vld [vmem:[#allocation5 + $0x278] sm:$0xff]
    %v221 = vld [vmem:[#allocation5 + $0x280] sm:$0xff]
    %v222 = vld [vmem:[#allocation5 + $0x288] sm:$0xff]
    %v223 = vld [vmem:[#allocation5 + $0x290] sm:$0xff]
    %v224 = vld [vmem:[#allocation5 + $0x298] sm:$0xff]
    %v225 = vld [vmem:[#allocation5 + $0x2a0] sm:$0xff]
    %v226 = vld [vmem:[#allocation5 + $0x2a8] sm:$0xff]
    %v227 = vld [vmem:[#allocation5 + $0x2b0] sm:$0xff]
    %v228 = vld [vmem:[#allocation5 + $0x2b8] sm:$0xff]
    %v229 = vld [vmem:[#allocation5 + $0x2c0] sm:$0xff]
    %v230 = vld [vmem:[#allocation5 + $0x2c8] sm:$0xff]
    %v231 = vld [vmem:[#allocation5 + $0x2d0] sm:$0xff]
    %v232 = vld [vmem:[#allocation5 + $0x2d8] sm:$0xff]
    %v233 = vld [vmem:[#allocation5 + $0x2e0] sm:$0xff]
    %v234 = vld [vmem:[#allocation5 + $0x2e8] sm:$0xff]
    %v235 = vld [vmem:[#allocation5 + $0x2f0] sm:$0xff]
    %v236 = vld [vmem:[#allocation5 + $0x2f8] sm:$0xff]
    %v237 = vld [vmem:[#allocation5 + $0x300] sm:$0xff]
    %v238 = vld [vmem:[#allocation5 + $0x308] sm:$0xff]
    %v239 = vld [vmem:[#allocation5 + $0x310] sm:$0xff]
    %v240 = vld [vmem:[#allocation5 + $0x318] sm:$0xff]
    %v241 = vld [vmem:[#allocation5 + $0x320] sm:$0xff]
    %v242 = vld [vmem:[#allocation5 + $0x328] sm:$0xff]
    %v243 = vld [vmem:[#allocation5 + $0x330] sm:$0xff]
    %v244 = vld [vmem:[#allocation5 + $0x338] sm:$0xff]
    %v245 = vld [vmem:[#allocation5 + $0x340] sm:$0xff]
    %v246 = vld [vmem:[#allocation5 + $0x348] sm:$0xff]
    %v247 = vld [vmem:[#allocation5 + $0x350] sm:$0xff]
    %v248 = vld [vmem:[#allocation5 + $0x358] sm:$0xff]
    %v249 = vld [vmem:[#allocation5 + $0x360] sm:$0xff]
    %v250 = vld [vmem:[#allocation5 + $0x368] sm:$0xff]
    %v251 = vld [vmem:[#allocation5 + $0x370] sm:$0xff]
    %v252 = vld [vmem:[#allocation5 + $0x378] sm:$0xff]
    %v253 = vld [vmem:[#allocation5 + $0x380] sm:$0xff]
    %v254 = vld [vmem:[#allocation5 + $0x388] sm:$0xff]
    %v255 = vld [vmem:[#allocation5 + $0x390] sm:$0xff]
    %v256 = vld [vmem:[#allocation5 + $0x398] sm:$0xff]
    %v257 = vld [vmem:[#allocation5 + $0x3a0] sm:$0xff]
    %v258 = vld [vmem:[#allocation5 + $0x3a8] sm:$0xff]
    %v259 = vld [vmem:[#allocation5 + $0x3b0] sm:$0xff]
    %v260 = vld [vmem:[#allocation5 + $0x3b8] sm:$0xff]
    %v261 = vld [vmem:[#allocation5 + $0x3c0] sm:$0xff]
    %v262 = vld [vmem:[#allocation5 + $0x3c8] sm:$0xff]
    %v263 = vld [vmem:[#allocation5 + $0x3d0] sm:$0xff]
    %v264 = vld [vmem:[#allocation5 + $0x3d8] sm:$0xff]
    %v265 = vld [vmem:[#allocation5 + $0x3e0] sm:$0xff]
    %v266 = vld [vmem:[#allocation5 + $0x3e8] sm:$0xff]
    %v267 = vld [vmem:[#allocation5 + $0x3f0] sm:$0xff]
    %v268 = vld [vmem:[#allocation5 + $0x3f8] sm:$0xff]
    %v269 = vld [vmem:[#allocation5 + $0x400] sm:$0xff]
    %v270 = vld [vmem:[#allocation5 + $0x408] sm:$0xff]
    %v271 = vld [vmem:[#allocation5 + $0x410] sm:$0xff]
    %v272 = vld [vmem:[#allocation5 + $0x418] sm:$0xff]
    %v273 = vld [vmem:[#allocation5 + $0x420] sm:$0xff]
    %v274 = vld [vmem:[#allocation5 + $0x428] sm:$0xff]
    %v275 = vld [vmem:[#allocation5 + $0x430] sm:$0xff]
    %v276 = vld [vmem:[#allocation5 + $0x438] sm:$0xff]
    %v277 = vld [vmem:[#allocation5 + $0x440] sm:$0xff]
    %v278 = vld [vmem:[#allocation5 + $0x448] sm:$0xff]
    %v279 = vld [vmem:[#allocation5 + $0x450] sm:$0xff]
    %v280 = vld [vmem:[#allocation5 + $0x458] sm:$0xff]
    %v281 = vld [vmem:[#allocation5 + $0x460] sm:$0xff]
    %v282 = vld [vmem:[#allocation5 + $0x468] sm:$0xff]
    %v283 = vld [vmem:[#allocation5 + $0x470] sm:$0xff]
    %v284 = vld [vmem:[#allocation5 + $0x478] sm:$0xff]
    %v285 = vld [vmem:[#allocation5 + $0x480] sm:$0xff]
    %v286 = vld [vmem:[#allocation5 + $0x488] sm:$0xff]
    %v287 = vld [vmem:[#allocation5 + $0x490] sm:$0xff]
    %v288 = vld [vmem:[#allocation5 + $0x498] sm:$0xff]
    %v289 = vld [vmem:[#allocation5 + $0x4a0] sm:$0xff]
    %v290 = vld [vmem:[#allocation5 + $0x4a8] sm:$0xff]
    %v291 = vld [vmem:[#allocation5 + $0x4b0] sm:$0xff]
    %v292 = vld [vmem:[#allocation5 + $0x4b8] sm:$0xff]
    %v293 = vld [vmem:[#allocation5 + $0x4c0] sm:$0xff]
    %v294 = vld [vmem:[#allocation5 + $0x4c8] sm:$0xff]
    %v295 = vld [vmem:[#allocation5 + $0x4d0] sm:$0xff]
    %v296 = vld [vmem:[#allocation5 + $0x4d8] sm:$0xff]
    %v297 = vld [vmem:[#allocation5 + $0x4e0] sm:$0xff]
    %v298 = vld [vmem:[#allocation5 + $0x4e8] sm:$0xff]
    %v299 = vld [vmem:[#allocation5 + $0x4f0] sm:$0xff]
    %v300 = vld [vmem:[#allocation5 + $0x4f8] sm:$0xff]
    %v301 = vld [vmem:[#allocation5 + $0x500] sm:$0xff]
    %v302 = vld [vmem:[#allocation5 + $0x508] sm:$0xff]
    %v303 = vld [vmem:[#allocation5 + $0x510] sm:$0xff]
    %v304 = vld [vmem:[#allocation5 + $0x518] sm:$0xff]
    %v305 = vld [vmem:[#allocation5 + $0x520] sm:$0xff]
    %v306 = vld [vmem:[#allocation5 + $0x528] sm:$0xff]
    %v307 = vld [vmem:[#allocation5 + $0x530] sm:$0xff]
    %v308 = vld [vmem:[#allocation5 + $0x538] sm:$0xff]
    %v309 = vld [vmem:[#allocation5 + $0x540] sm:$0xff]
    %v310 = vld [vmem:[#allocation5 + $0x548] sm:$0xff]
    %v311 = vld [vmem:[#allocation5 + $0x550] sm:$0xff]
    %v312 = vld [vmem:[#allocation5 + $0x558] sm:$0xff]
    %v313 = vld [vmem:[#allocation5 + $0x560] sm:$0xff]
    %v314 = vld [vmem:[#allocation5 + $0x568] sm:$0xff]
    %v315 = vld [vmem:[#allocation5 + $0x570] sm:$0xff]
    %v316 = vld [vmem:[#allocation5 + $0x578] sm:$0xff]
    %v317 = vld [vmem:[#allocation5 + $0x580] sm:$0xff]
    %v318 = vld [vmem:[#allocation5 + $0x588] sm:$0xff]
    %v319 = vld [vmem:[#allocation5 + $0x590] sm:$0xff]
    %v320 = vld [vmem:[#allocation5 + $0x598] sm:$0xff]
    %v321 = vld [vmem:[#allocation5 + $0x5a0] sm:$0xff]
    %v322 = vld [vmem:[#allocation5 + $0x5a8] sm:$0xff]
    %v323 = vld [vmem:[#allocation5 + $0x5b0] sm:$0xff]
    %v324 = vld [vmem:[#allocation5 + $0x5b8] sm:$0xff]
    %v325 = vld [vmem:[#allocation5 + $0x5c0] sm:$0xff]
    %v326 = vld [vmem:[#allocation5 + $0x5c8] sm:$0xff]
    %v327 = vld [vmem:[#allocation5 + $0x5d0] sm:$0xff]
    %v328 = vld [vmem:[#allocation5 + $0x5d8] sm:$0xff]
    %v329 = vld [vmem:[#allocation5 + $0x5e0] sm:$0xff]
    %v330 = vld [vmem:[#allocation5 + $0x5e8] sm:$0xff]
    %v331 = vld [vmem:[#allocation5 + $0x5f0] sm:$0xff]
    %v332 = vld [vmem:[#allocation5 + $0x5f8] sm:$0xff]
    %v333 = vld [vmem:[#allocation5 + $0x600] sm:$0xff]
    %v334 = vld [vmem:[#allocation5 + $0x608] sm:$0xff]
    %v335 = vld [vmem:[#allocation5 + $0x610] sm:$0xff]
    %v336 = vld [vmem:[#allocation5 + $0x618] sm:$0xff]
    %v337 = vld [vmem:[#allocation5 + $0x620] sm:$0xff]
    %v338 = vld [vmem:[#allocation5 + $0x628] sm:$0xff]
    %v339 = vld [vmem:[#allocation5 + $0x630] sm:$0xff]
    %v340 = vld [vmem:[#allocation5 + $0x638] sm:$0xff]
    %v341 = vld [vmem:[#allocation5 + $0x640] sm:$0xff]
    %v342 = vld [vmem:[#allocation5 + $0x648] sm:$0xff]
    %v343 = vld [vmem:[#allocation5 + $0x650] sm:$0xff]
    %v344 = vld [vmem:[#allocation5 + $0x658] sm:$0xff]
    %v345 = vld [vmem:[#allocation5 + $0x660] sm:$0xff]
    %v346 = vld [vmem:[#allocation5 + $0x668] sm:$0xff]
    %v347 = vld [vmem:[#allocation5 + $0x670] sm:$0xff]
    %v348 = vld [vmem:[#allocation5 + $0x678] sm:$0xff]
    %v349 = vld [vmem:[#allocation5 + $0x680] sm:$0xff]
    %v350 = vld [vmem:[#allocation5 + $0x688] sm:$0xff]
    %v351 = vld [vmem:[#allocation5 + $0x690] sm:$0xff]
    %v352 = vld [vmem:[#allocation5 + $0x698] sm:$0xff]
    %v353 = vld [vmem:[#allocation5 + $0x6a0] sm:$0xff]
    %v354 = vld [vmem:[#allocation5 + $0x6a8] sm:$0xff]
    %v355 = vld [vmem:[#allocation5 + $0x6b0] sm:$0xff]
    %v356 = vld [vmem:[#allocation5 + $0x6b8] sm:$0xff]
    %v357 = vld [vmem:[#allocation5 + $0x6c0] sm:$0xff]
    %v358 = vld [vmem:[#allocation5 + $0x6c8] sm:$0xff]
    %v359 = vld [vmem:[#allocation5 + $0x6d0] sm:$0xff]
    %v360 = vld [vmem:[#allocation5 + $0x6d8] sm:$0xff]
    %v361 = vld [vmem:[#allocation5 + $0x6e0] sm:$0xff]
    %v362 = vld [vmem:[#allocation5 + $0x6e8] sm:$0xff]
    %v363 = vld [vmem:[#allocation5 + $0x6f0] sm:$0xff]
    %v364 = vld [vmem:[#allocation5 + $0x6f8] sm:$0xff]
    %v365 = vld [vmem:[#allocation5 + $0x700] sm:$0xff]
    %v366 = vld [vmem:[#allocation5 + $0x708] sm:$0xff]
    %v367 = vld [vmem:[#allocation5 + $0x710] sm:$0xff]
    %v368 = vld [vmem:[#allocation5 + $0x718] sm:$0xff]
    %v369 = vld [vmem:[#allocation5 + $0x720] sm:$0xff]
    %v370 = vld [vmem:[#allocation5 + $0x728] sm:$0xff]
    %v371 = vld [vmem:[#allocation5 + $0x730] sm:$0xff]
    %v372 = vld [vmem:[#allocation5 + $0x738] sm:$0xff]
    %v373 = vld [vmem:[#allocation5 + $0x740] sm:$0xff]
    %v374 = vld [vmem:[#allocation5 + $0x748] sm:$0xff]
    %v375 = vld [vmem:[#allocation5 + $0x750] sm:$0xff]
    %v376 = vld [vmem:[#allocation5 + $0x758] sm:$0xff]
    %v377 = vld [vmem:[#allocation5 + $0x760] sm:$0xff]
    %v378 = vld [vmem:[#allocation5 + $0x768] sm:$0xff]
    %v379 = vld [vmem:[#allocation5 + $0x770] sm:$0xff]
    %v380 = vld [vmem:[#allocation5 + $0x778] sm:$0xff]
    %v381 = vld [vmem:[#allocation5 + $0x780] sm:$0xff]
    %v382 = vld [vmem:[#allocation5 + $0x788] sm:$0xff]
    %v383 = vld [vmem:[#allocation5 + $0x790] sm:$0xff]
    %v384 = vld [vmem:[#allocation5 + $0x798] sm:$0xff]
    %v385 = vld [vmem:[#allocation5 + $0x7a0] sm:$0xff]
    %v386 = vld [vmem:[#allocation5 + $0x7a8] sm:$0xff]
    %v387 = vld [vmem:[#allocation5 + $0x7b0] sm:$0xff]
    %v388 = vld [vmem:[#allocation5 + $0x7b8] sm:$0xff]
    %v389 = vld [vmem:[#allocation5 + $0x7c0] sm:$0xff]
    %v390 = vld [vmem:[#allocation5 + $0x7c8] sm:$0xff]
    %v391 = vld [vmem:[#allocation5 + $0x7d0] sm:$0xff]
    %v392 = vld [vmem:[#allocation5 + $0x7d8] sm:$0xff]
    %v393 = vld [vmem:[#allocation5 + $0x7e0] sm:$0xff]
    %v394 = vld [vmem:[#allocation5 + $0x7e8] sm:$0xff]
    %v395 = vld [vmem:[#allocation5 + $0x7f0] sm:$0xff]
    %v396 = vld [vmem:[#allocation5 + $0x7f8] sm:$0xff]
    %v397 = vld [vmem:[#allocation5 + $0x800] sm:$0xff]
    %v398 = vld [vmem:[#allocation5 + $0x808] sm:$0xff]
    %v399 = vld [vmem:[#allocation5 + $0x810] sm:$0xff]
    %v400 = vld [vmem:[#allocation5 + $0x818] sm:$0xff]
    %v401 = vld [vmem:[#allocation5 + $0x820] sm:$0xff]
    %v402 = vld [vmem:[#allocation5 + $0x828] sm:$0xff]
    %v403 = vld [vmem:[#allocation5 + $0x830] sm:$0xff]
    %v404 = vld [vmem:[#allocation5 + $0x838] sm:$0xff]
    %v405 = vld [vmem:[#allocation5 + $0x840] sm:$0xff]
    %v406 = vld [vmem:[#allocation5 + $0x848] sm:$0xff]
    %v407 = vld [vmem:[#allocation5 + $0x850] sm:$0xff]
    %v408 = vld [vmem:[#allocation5 + $0x858] sm:$0xff]
    %v409 = vld [vmem:[#allocation5 + $0x860] sm:$0xff]
    %v410 = vld [vmem:[#allocation5 + $0x868] sm:$0xff]
    %v411 = vld [vmem:[#allocation5 + $0x870] sm:$0xff]
    %v412 = vld [vmem:[#allocation5 + $0x878] sm:$0xff]
    %v413 = vld [vmem:[#allocation5 + $0x880] sm:$0xff]
    %v414 = vld [vmem:[#allocation5 + $0x888] sm:$0xff]
    %v415 = vld [vmem:[#allocation5 + $0x890] sm:$0xff]
    %v416 = vld [vmem:[#allocation5 + $0x898] sm:$0xff]
    %v417 = vld [vmem:[#allocation5 + $0x8a0] sm:$0xff]
    %v418 = vld [vmem:[#allocation5 + $0x8a8] sm:$0xff]
    %v419 = vld [vmem:[#allocation5 + $0x8b0] sm:$0xff]
    %v420 = vld [vmem:[#allocation5 + $0x8b8] sm:$0xff]
    %v421 = vld [vmem:[#allocation5 + $0x8c0] sm:$0xff]
    %v422 = vld [vmem:[#allocation5 + $0x8c8] sm:$0xff]
    %v423 = vld [vmem:[#allocation5 + $0x8d0] sm:$0xff]
    %v424 = vld [vmem:[#allocation5 + $0x8d8] sm:$0xff]
    %v425 = vld [vmem:[#allocation5 + $0x8e0] sm:$0xff]
    %v426 = vld [vmem:[#allocation5 + $0x8e8] sm:$0xff]
    %v427 = vld [vmem:[#allocation5 + $0x8f0] sm:$0xff]
    %v428 = vld [vmem:[#allocation5 + $0x8f8] sm:$0xff]
    %v429 = vld [vmem:[#allocation5 + $0x900] sm:$0xff]
    %v430 = vld [vmem:[#allocation5 + $0x908] sm:$0xff]
    %v431 = vld [vmem:[#allocation5 + $0x910] sm:$0xff]
    %v432 = vld [vmem:[#allocation5 + $0x918] sm:$0xff]
    %v433 = vld [vmem:[#allocation5 + $0x920] sm:$0xff]
    %v434 = vld [vmem:[#allocation5 + $0x928] sm:$0xff]
    %v435 = vld [vmem:[#allocation5 + $0x930] sm:$0xff]
    %v436 = vld [vmem:[#allocation5 + $0x938] sm:$0xff]
    %v437 = vld [vmem:[#allocation5 + $0x940] sm:$0xff]
    %v438 = vld [vmem:[#allocation5 + $0x948] sm:$0xff]
    %v439 = vld [vmem:[#allocation5 + $0x950] sm:$0xff]
    %v440 = vld [vmem:[#allocation5 + $0x958] sm:$0xff]
    %v441 = vld [vmem:[#allocation5 + $0x960] sm:$0xff]
    %v442 = vld [vmem:[#allocation5 + $0x968] sm:$0xff]
    %v443 = vld [vmem:[#allocation5 + $0x970] sm:$0xff]
    %v444 = vld [vmem:[#allocation5 + $0x978] sm:$0xff]
    %v445 = vld [vmem:[#allocation5 + $0x980] sm:$0xff]
    %v446 = vld [vmem:[#allocation5 + $0x988] sm:$0xff]
    %v447 = vld [vmem:[#allocation5 + $0x990] sm:$0xff]
    %v448 = vld [vmem:[#allocation5 + $0x998] sm:$0xff]
    %v449 = vld [vmem:[#allocation5 + $0x9a0] sm:$0xff]
    %v450 = vld [vmem:[#allocation5 + $0x9a8] sm:$0xff]
    %v451 = vld [vmem:[#allocation5 + $0x9b0] sm:$0xff]
    %v452 = vld [vmem:[#allocation5 + $0x9b8] sm:$0xff]
    %v453 = vld [vmem:[#allocation5 + $0x9c0] sm:$0xff]
    %v454 = vld [vmem:[#allocation5 + $0x9c8] sm:$0xff]
    %v455 = vld [vmem:[#allocation5 + $0x9d0] sm:$0xff]
    %v456 = vld [vmem:[#allocation5 + $0x9d8] sm:$0xff]
    %v457 = vld [vmem:[#allocation5 + $0x9e0] sm:$0xff]
    %v458 = vld [vmem:[#allocation5 + $0x9e8] sm:$0xff]
    %v459 = vld [vmem:[#allocation5 + $0x9f0] sm:$0xff]
    %v460 = vld [vmem:[#allocation5 + $0x9f8] sm:$0xff]
    %v461 = vld [vmem:[#allocation5 + $0xa00] sm:$0xff]
    %v462 = vld [vmem:[#allocation5 + $0xa08] sm:$0xff]
    %v463 = vld [vmem:[#allocation5 + $0xa10] sm:$0xff]
    %v464 = vld [vmem:[#allocation5 + $0xa18] sm:$0xff]
    %v465 = vld [vmem:[#allocation5 + $0xa20] sm:$0xff]
    %v466 = vld [vmem:[#allocation5 + $0xa28] sm:$0xff]
    %v467 = vld [vmem:[#allocation5 + $0xa30] sm:$0xff]
    %v468 = vld [vmem:[#allocation5 + $0xa38] sm:$0xff]
    %v469 = vld [vmem:[#allocation5 + $0xa40] sm:$0xff]
    %v470 = vld [vmem:[#allocation5 + $0xa48] sm:$0xff]
    %v471 = vld [vmem:[#allocation5 + $0xa50] sm:$0xff]
    %v472 = vld [vmem:[#allocation5 + $0xa58] sm:$0xff]
    %v473 = vld [vmem:[#allocation5 + $0xa60] sm:$0xff]
    %v474 = vld [vmem:[#allocation5 + $0xa68] sm:$0xff]
    %v475 = vld [vmem:[#allocation5 + $0xa70] sm:$0xff]
    %v476 = vld [vmem:[#allocation5 + $0xa78] sm:$0xff]
    %v477 = vld [vmem:[#allocation5 + $0xa80] sm:$0xff]
    %v478 = vld [vmem:[#allocation5 + $0xa88] sm:$0xff]
    %v479 = vld [vmem:[#allocation5 + $0xa90] sm:$0xff]
    %v480 = vld [vmem:[#allocation5 + $0xa98] sm:$0xff]
    %v481 = vld [vmem:[#allocation5 + $0xaa0] sm:$0xff]
    %v482 = vld [vmem:[#allocation5 + $0xaa8] sm:$0xff]
    %v483 = vld [vmem:[#allocation5 + $0xab0] sm:$0xff]
    %v484 = vld [vmem:[#allocation5 + $0xab8] sm:$0xff]
    %v485 = vld [vmem:[#allocation5 + $0xac0] sm:$0xff]
    %v486 = vld [vmem:[#allocation5 + $0xac8] sm:$0xff]
    %v487 = vld [vmem:[#allocation5 + $0xad0] sm:$0xff]
    %v488 = vld [vmem:[#allocation5 + $0xad8] sm:$0xff]
    %v489 = vld [vmem:[#allocation5 + $0xae0] sm:$0xff]
    %v490 = vld [vmem:[#allocation5 + $0xae8] sm:$0xff]
    %v491 = vld [vmem:[#allocation5 + $0xaf0] sm:$0xff]
    %v492 = vld [vmem:[#allocation5 + $0xaf8] sm:$0xff]
    %v493 = vld [vmem:[#allocation5 + $0xb00] sm:$0xff]
    %v494 = vld [vmem:[#allocation5 + $0xb08] sm:$0xff]
    %v495 = vld [vmem:[#allocation5 + $0xb10] sm:$0xff]
    %v496 = vld [vmem:[#allocation5 + $0xb18] sm:$0xff]
    %v497 = vld [vmem:[#allocation5 + $0xb20] sm:$0xff]
    %v498 = vld [vmem:[#allocation5 + $0xb28] sm:$0xff]
    %v499 = vld [vmem:[#allocation5 + $0xb30] sm:$0xff]
    %v500 = vld [vmem:[#allocation5 + $0xb38] sm:$0xff]
    %v501 = vld [vmem:[#allocation5 + $0xb40] sm:$0xff]
    %v502 = vld [vmem:[#allocation5 + $0xb48] sm:$0xff]
    %v503 = vld [vmem:[#allocation5 + $0xb50] sm:$0xff]
    %v504 = vld [vmem:[#allocation5 + $0xb58] sm:$0xff]
    %v505 = vld [vmem:[#allocation5 + $0xb60] sm:$0xff]
    %v506 = vld [vmem:[#allocation5 + $0xb68] sm:$0xff]
    %v507 = vld [vmem:[#allocation5 + $0xb70] sm:$0xff]
    %v508 = vld [vmem:[#allocation5 + $0xb78] sm:$0xff]
    %v509 = vld [vmem:[#allocation5 + $0xb80] sm:$0xff]
    %v510 = vld [vmem:[#allocation5 + $0xb88] sm:$0xff]
    %v511 = vld [vmem:[#allocation5 + $0xb90] sm:$0xff]
    %v512 = vld [vmem:[#allocation5 + $0xb98] sm:$0xff]
    %v513 = vld [vmem:[#allocation5 + $0xba0] sm:$0xff]
    %v514 = vld [vmem:[#allocation5 + $0xba8] sm:$0xff]
    %v515 = vld [vmem:[#allocation5 + $0xbb0] sm:$0xff]
    %v516 = vld [vmem:[#allocation5 + $0xbb8] sm:$0xff]
    %v517 = vld [vmem:[#allocation5 + $0xbc0] sm:$0xff]
    %v518 = vld [vmem:[#allocation5 + $0xbc8] sm:$0xff]
    %v519 = vld [vmem:[#allocation5 + $0xbd0] sm:$0xff]
    %v520 = vld [vmem:[#allocation5 + $0xbd8] sm:$0xff]
    %v521 = vld [vmem:[#allocation5 + $0xbe0] sm:$0xff]
    %v522 = vld [vmem:[#allocation5 + $0xbe8] sm:$0xff]
    %v523 = vld [vmem:[#allocation5 + $0xbf0] sm:$0xff]
    %v524 = vld [vmem:[#allocation5 + $0xbf8] sm:$0xff]
    %v525 = vld [vmem:[#allocation5 + $0xc00] sm:$0xff]
    %v526 = vld [vmem:[#allocation5 + $0xc08] sm:$0xff]
    %v527 = vld [vmem:[#allocation5 + $0xc10] sm:$0xff]
    %v528 = vld [vmem:[#allocation5 + $0xc18] sm:$0xff]
    %v529 = vld [vmem:[#allocation5 + $0xc20] sm:$0xff]
    %v530 = vld [vmem:[#allocation5 + $0xc28] sm:$0xff]
    %v531 = vld [vmem:[#allocation5 + $0xc30] sm:$0xff]
    %v532 = vld [vmem:[#allocation5 + $0xc38] sm:$0xff]
    %v533 = vld [vmem:[#allocation5 + $0xc40] sm:$0xff]
    %v534 = vld [vmem:[#allocation5 + $0xc48] sm:$0xff]
    %v535 = vld [vmem:[#allocation5 + $0xc50] sm:$0xff]
    %v536 = vld [vmem:[#allocation5 + $0xc58] sm:$0xff]
    %v537 = vld [vmem:[#allocation5 + $0xc60] sm:$0xff]
    %v538 = vld [vmem:[#allocation5 + $0xc68] sm:$0xff]
    %v539 = vld [vmem:[#allocation5 + $0xc70] sm:$0xff]
    %v540 = vld [vmem:[#allocation5 + $0xc78] sm:$0xff]
    %v541 = vld [vmem:[#allocation5 + $0xc80] sm:$0xff]
    %v542 = vld [vmem:[#allocation5 + $0xc88] sm:$0xff]
    %v543 = vld [vmem:[#allocation5 + $0xc90] sm:$0xff]
    %v544 = vld [vmem:[#allocation5 + $0xc98] sm:$0xff]
    %v545 = vld [vmem:[#allocation5 + $0xca0] sm:$0xff]
    %v546 = vld [vmem:[#allocation5 + $0xca8] sm:$0xff]
    %v547 = vld [vmem:[#allocation5 + $0xcb0] sm:$0xff]
    %v548 = vld [vmem:[#allocation5 + $0xcb8] sm:$0xff]
    %v549 = vld [vmem:[#allocation5 + $0xcc0] sm:$0xff]
    %v550 = vld [vmem:[#allocation5 + $0xcc8] sm:$0xff]
    %v551 = vld [vmem:[#allocation5 + $0xcd0] sm:$0xff]
    %v552 = vld [vmem:[#allocation5 + $0xcd8] sm:$0xff]
    %v553 = vld [vmem:[#allocation5 + $0xce0] sm:$0xff]
    %v554 = vld [vmem:[#allocation5 + $0xce8] sm:$0xff]
    %v555 = vld [vmem:[#allocation5 + $0xcf0] sm:$0xff]
    %v556 = vld [vmem:[#allocation5 + $0xcf8] sm:$0xff]
    %v557 = vld [vmem:[#allocation5 + $0xd00] sm:$0xff]
    %v558 = vld [vmem:[#allocation5 + $0xd08] sm:$0xff]
    %v559 = vld [vmem:[#allocation5 + $0xd10] sm:$0xff]
    %v560 = vld [vmem:[#allocation5 + $0xd18] sm:$0xff]
    %v561 = vld [vmem:[#allocation5 + $0xd20] sm:$0xff]
    %v562 = vld [vmem:[#allocation5 + $0xd28] sm:$0xff]
    %v563 = vld [vmem:[#allocation5 + $0xd30] sm:$0xff]
    %v564 = vld [vmem:[#allocation5 + $0xd38] sm:$0xff]
    %v565 = vld [vmem:[#allocation5 + $0xd40] sm:$0xff]
    %v566 = vld [vmem:[#allocation5 + $0xd48] sm:$0xff]
    %v567 = vld [vmem:[#allocation5 + $0xd50] sm:$0xff]
    %v568 = vld [vmem:[#allocation5 + $0xd58] sm:$0xff]
    %v569 = vld [vmem:[#allocation5 + $0xd60] sm:$0xff]
    %v570 = vld [vmem:[#allocation5 + $0xd68] sm:$0xff]
    %v571 = vld [vmem:[#allocation5 + $0xd70] sm:$0xff]
    %v572 = vld [vmem:[#allocation5 + $0xd78] sm:$0xff]
    %v573 = vld [vmem:[#allocation5 + $0xd80] sm:$0xff]
    %v574 = vld [vmem:[#allocation5 + $0xd88] sm:$0xff]
    %v575 = vld [vmem:[#allocation5 + $0xd90] sm:$0xff]
    %v576 = vld [vmem:[#allocation5 + $0xd98] sm:$0xff]
    %v577 = vld [vmem:[#allocation5 + $0xda0] sm:$0xff]
    %v578 = vld [vmem:[#allocation5 + $0xda8] sm:$0xff]
    %v579 = vld [vmem:[#allocation5 + $0xdb0] sm:$0xff]
    %v580 = vld [vmem:[#allocation5 + $0xdb8] sm:$0xff]
    %v581 = vld [vmem:[#allocation5 + $0xdc0] sm:$0xff]
    %v582 = vld [vmem:[#allocation5 + $0xdc8] sm:$0xff]
    %v583 = vld [vmem:[#allocation5 + $0xdd0] sm:$0xff]
    %v584 = vld [vmem:[#allocation5 + $0xdd8] sm:$0xff]
    %v585 = vld [vmem:[#allocation5 + $0xde0] sm:$0xff]
    %v586 = vld [vmem:[#allocation5 + $0xde8] sm:$0xff]
    %v587 = vld [vmem:[#allocation5 + $0xdf0] sm:$0xff]
    %v588 = vld [vmem:[#allocation5 + $0xdf8] sm:$0xff]
    %v589 = vld [vmem:[#allocation5 + $0xe00] sm:$0xff]
    %v590 = vld [vmem:[#allocation5 + $0xe08] sm:$0xff]
    %v591 = vld [vmem:[#allocation5 + $0xe10] sm:$0xff]
    %v592 = vld [vmem:[#allocation5 + $0xe18] sm:$0xff]
    %v593 = vld [vmem:[#allocation5 + $0xe20] sm:$0xff]
    %v594 = vld [vmem:[#allocation5 + $0xe28] sm:$0xff]
    %v595 = vld [vmem:[#allocation5 + $0xe30] sm:$0xff]
    %v596 = vld [vmem:[#allocation5 + $0xe38] sm:$0xff]
    %v597 = vld [vmem:[#allocation5 + $0xe40] sm:$0xff]
    %v598 = vld [vmem:[#allocation5 + $0xe48] sm:$0xff]
    %v599 = vld [vmem:[#allocation5 + $0xe50] sm:$0xff]
    %v600 = vld [vmem:[#allocation5 + $0xe58] sm:$0xff]
    %v601 = vld [vmem:[#allocation5 + $0xe60] sm:$0xff]
    %v602 = vld [vmem:[#allocation5 + $0xe68] sm:$0xff]
    %v603 = vld [vmem:[#allocation5 + $0xe70] sm:$0xff]
    %v604 = vld [vmem:[#allocation5 + $0xe78] sm:$0xff]
    %v605 = vld [vmem:[#allocation5 + $0xe80] sm:$0xff]
    %v606 = vld [vmem:[#allocation5 + $0xe88] sm:$0xff]
    %v607 = vld [vmem:[#allocation5 + $0xe90] sm:$0xff]
    %v608 = vld [vmem:[#allocation5 + $0xe98] sm:$0xff]
    %v609 = vld [vmem:[#allocation5 + $0xea0] sm:$0xff]
    %v610 = vld [vmem:[#allocation5 + $0xea8] sm:$0xff]
    %v611 = vld [vmem:[#allocation5 + $0xeb0] sm:$0xff]
    %v612 = vld [vmem:[#allocation5 + $0xeb8] sm:$0xff]
    %v613 = vld [vmem:[#allocation5 + $0xec0] sm:$0xff]
    %v614 = vld [vmem:[#allocation5 + $0xec8] sm:$0xff]
    %v615 = vld [vmem:[#allocation5 + $0xed0] sm:$0xff]
    %v616 = vld [vmem:[#allocation5 + $0xed8] sm:$0xff]
    %v617 = vld [vmem:[#allocation5 + $0xee0] sm:$0xff]
    %v618 = vld [vmem:[#allocation5 + $0xee8] sm:$0xff]
    %v619 = vld [vmem:[#allocation5 + $0xef0] sm:$0xff]
    %v620 = vld [vmem:[#allocation5 + $0xef8] sm:$0xff]
    %v621 = vld [vmem:[#allocation5 + $0xf00] sm:$0xff]
    %v622 = vld [vmem:[#allocation5 + $0xf08] sm:$0xff]
    %v623 = vld [vmem:[#allocation5 + $0xf10] sm:$0xff]
    %v624 = vld [vmem:[#allocation5 + $0xf18] sm:$0xff]
    %v625 = vld [vmem:[#allocation5 + $0xf20] sm:$0xff]
    %v626 = vld [vmem:[#allocation5 + $0xf28] sm:$0xff]
    %v627 = vld [vmem:[#allocation5 + $0xf30] sm:$0xff]
    %v628 = vld [vmem:[#allocation5 + $0xf38] sm:$0xff]
    %v629 = vld [vmem:[#allocation5 + $0xf40] sm:$0xff]
    %v630 = vld [vmem:[#allocation5 + $0xf48] sm:$0xff]
    %v631 = vld [vmem:[#allocation5 + $0xf50] sm:$0xff]
    %v632 = vld [vmem:[#allocation5 + $0xf58] sm:$0xff]
    %v633 = vld [vmem:[#allocation5 + $0xf60] sm:$0xff]
    %v634 = vld [vmem:[#allocation5 + $0xf68] sm:$0xff]
    %v635 = vld [vmem:[#allocation5 + $0xf70] sm:$0xff]
    %v636 = vld [vmem:[#allocation5 + $0xf78] sm:$0xff]
    %v637 = vld [vmem:[#allocation5 + $0xf80] sm:$0xff]
    %v638 = vld [vmem:[#allocation5 + $0xf88] sm:$0xff]
    %v639 = vld [vmem:[#allocation5 + $0xf90] sm:$0xff]
    %v640 = vld [vmem:[#allocation5 + $0xf98] sm:$0xff]
    %v641 = vld [vmem:[#allocation5 + $0xfa0] sm:$0xff]
    %v642 = vld [vmem:[#allocation5 + $0xfa8] sm:$0xff]
    %v643 = vld [vmem:[#allocation5 + $0xfb0] sm:$0xff]
    %v644 = vld [vmem:[#allocation5 + $0xfb8] sm:$0xff]
    %v645 = vld [vmem:[#allocation5 + $0xfc0] sm:$0xff]
    %v646 = vld [vmem:[#allocation5 + $0xfc8] sm:$0xff]
    %v647 = vld [vmem:[#allocation5 + $0xfd0] sm:$0xff]
    %v648 = vld [vmem:[#allocation5 + $0xfd8] sm:$0xff]
    %v649 = vld [vmem:[#allocation5 + $0xfe0] sm:$0xff]
    %v650 = vld [vmem:[#allocation5 + $0xfe8] sm:$0xff]
    %v651 = vld [vmem:[#allocation5 + $0xff0] sm:$0xff]
    %v652 = vld [vmem:[#allocation5 + $0xff8] sm:$0xff]
    %v653 = vld [vmem:[#allocation5 + $0x1000] sm:$0xff]
    %v654 = vld [vmem:[#allocation5 + $0x1008] sm:$0xff]
    %v655 = vld [vmem:[#allocation5 + $0x1010] sm:$0xff]
    %v656 = vld [vmem:[#allocation5 + $0x1018] sm:$0xff]
    %v657 = vld [vmem:[#allocation5 + $0x1020] sm:$0xff]
    %v658 = vld [vmem:[#allocation5 + $0x1028] sm:$0xff]
    %v659 = vld [vmem:[#allocation5 + $0x1030] sm:$0xff]
    %v660 = vld [vmem:[#allocation5 + $0x1038] sm:$0xff]
    %v661 = vld [vmem:[#allocation5 + $0x1040] sm:$0xff]
    %v662 = vld [vmem:[#allocation5 + $0x1048] sm:$0xff]
    %v663 = vld [vmem:[#allocation5 + $0x1050] sm:$0xff]
    %v664 = vld [vmem:[#allocation5 + $0x1058] sm:$0xff]
    %v665 = vld [vmem:[#allocation5 + $0x1060] sm:$0xff]
    %v666 = vld [vmem:[#allocation5 + $0x1068] sm:$0xff]
    %v667 = vld [vmem:[#allocation5 + $0x1070] sm:$0xff]
    %v668 = vld [vmem:[#allocation5 + $0x1078] sm:$0xff]
    %v669 = vld [vmem:[#allocation5 + $0x1080] sm:$0xff]
    %v670 = vld [vmem:[#allocation5 + $0x1088] sm:$0xff]
    %v671 = vld [vmem:[#allocation5 + $0x1090] sm:$0xff]
    %v672 = vld [vmem:[#allocation5 + $0x1098] sm:$0xff]
    %v673 = vld [vmem:[#allocation5 + $0x10a0] sm:$0xff]
    %v674 = vld [vmem:[#allocation5 + $0x10a8] sm:$0xff]
    %v675 = vld [vmem:[#allocation5 + $0x10b0] sm:$0xff]
    %v676 = vld [vmem:[#allocation5 + $0x10b8] sm:$0xff]
    %v677 = vld [vmem:[#allocation5 + $0x10c0] sm:$0xff]
    %v678 = vld [vmem:[#allocation5 + $0x10c8] sm:$0xff]
    %v679 = vld [vmem:[#allocation5 + $0x10d0] sm:$0xff]
    %v680 = vld [vmem:[#allocation5 + $0x10d8] sm:$0xff]
    %v681 = vld [vmem:[#allocation5 + $0x10e0] sm:$0xff]
    %v682 = vld [vmem:[#allocation5 + $0x10e8] sm:$0xff]
    %v683 = vld [vmem:[#allocation5 + $0x10f0] sm:$0xff]
    %v684 = vld [vmem:[#allocation5 + $0x10f8] sm:$0xff]
    %v685 = vld [vmem:[#allocation5 + $0x1100] sm:$0xff]
    %v686 = vld [vmem:[#allocation5 + $0x1108] sm:$0xff]
    %v687 = vld [vmem:[#allocation5 + $0x1110] sm:$0xff]
    %v688 = vld [vmem:[#allocation5 + $0x1118] sm:$0xff]
    %v689 = vld [vmem:[#allocation5 + $0x1120] sm:$0xff]
    %v690 = vld [vmem:[#allocation5 + $0x1128] sm:$0xff]
    %v691 = vld [vmem:[#allocation5 + $0x1130] sm:$0xff]
    %v692 = vld [vmem:[#allocation5 + $0x1138] sm:$0xff]
    %v693 = vld [vmem:[#allocation5 + $0x1140] sm:$0xff]
    %v694 = vld [vmem:[#allocation5 + $0x1148] sm:$0xff]
    %v695 = vld [vmem:[#allocation5 + $0x1150] sm:$0xff]
    %v696 = vld [vmem:[#allocation5 + $0x1158] sm:$0xff]
    %v697 = vld [vmem:[#allocation5 + $0x1160] sm:$0xff]
    %v698 = vld [vmem:[#allocation5 + $0x1168] sm:$0xff]
    %v699 = vld [vmem:[#allocation5 + $0x1170] sm:$0xff]
    %v700 = vld [vmem:[#allocation5 + $0x1178] sm:$0xff]
    %v701 = vld [vmem:[#allocation5 + $0x1180] sm:$0xff]
    %v702 = vld [vmem:[#allocation5 + $0x1188] sm:$0xff]
    %v703 = vld [vmem:[#allocation5 + $0x1190] sm:$0xff]
    %v704 = vld [vmem:[#allocation5 + $0x1198] sm:$0xff]
    %v705 = vld [vmem:[#allocation5 + $0x11a0] sm:$0xff]
    %v706 = vld [vmem:[#allocation5 + $0x11a8] sm:$0xff]
    %v707 = vld [vmem:[#allocation5 + $0x11b0] sm:$0xff]
    %v708 = vld [vmem:[#allocation5 + $0x11b8] sm:$0xff]
    %v709 = vld [vmem:[#allocation5 + $0x11c0] sm:$0xff]
    %v710 = vld [vmem:[#allocation5 + $0x11c8] sm:$0xff]
    %v711 = vld [vmem:[#allocation5 + $0x11d0] sm:$0xff]
    %v712 = vld [vmem:[#allocation5 + $0x11d8] sm:$0xff]
    %v713 = vld [vmem:[#allocation5 + $0x11e0] sm:$0xff]
    %v714 = vld [vmem:[#allocation5 + $0x11e8] sm:$0xff]
    %v715 = vld [vmem:[#allocation5 + $0x11f0] sm:$0xff]
    %v716 = vld [vmem:[#allocation5 + $0x11f8] sm:$0xff]
    %v717 = vld [vmem:[#allocation5 + $0x1200] sm:$0xff]
    %v718 = vld [vmem:[#allocation5 + $0x1208] sm:$0xff]
    %v719 = vld [vmem:[#allocation5 + $0x1210] sm:$0xff]
    %v720 = vld [vmem:[#allocation5 + $0x1218] sm:$0xff]
    %v721 = vld [vmem:[#allocation5 + $0x1220] sm:$0xff]
    %v722 = vld [vmem:[#allocation5 + $0x1228] sm:$0xff]
    %v723 = vld [vmem:[#allocation5 + $0x1230] sm:$0xff]
    %v724 = vld [vmem:[#allocation5 + $0x1238] sm:$0xff]
    %v725 = vld [vmem:[#allocation5 + $0x1240] sm:$0xff]
    %v726 = vld [vmem:[#allocation5 + $0x1248] sm:$0xff]
    %v727 = vld [vmem:[#allocation5 + $0x1250] sm:$0xff]
    %v728 = vld [vmem:[#allocation5 + $0x1258] sm:$0xff]
    %v729 = vld [vmem:[#allocation5 + $0x1260] sm:$0xff]
    %v730 = vld [vmem:[#allocation5 + $0x1268] sm:$0xff]
    %v731 = vld [vmem:[#allocation5 + $0x1270] sm:$0xff]
    %v732 = vld [vmem:[#allocation5 + $0x1278] sm:$0xff]
    %v733 = vld [vmem:[#allocation5 + $0x1280] sm:$0xff]
    %v734 = vld [vmem:[#allocation5 + $0x1288] sm:$0xff]
    %v735 = vld [vmem:[#allocation5 + $0x1290] sm:$0xff]
    %v736 = vld [vmem:[#allocation5 + $0x1298] sm:$0xff]
    %v737 = vld [vmem:[#allocation5 + $0x12a0] sm:$0xff]
    %v738 = vld [vmem:[#allocation5 + $0x12a8] sm:$0xff]
    %v739 = vld [vmem:[#allocation5 + $0x12b0] sm:$0xff]
    %v740 = vld [vmem:[#allocation5 + $0x12b8] sm:$0xff]
    %v741 = vld [vmem:[#allocation5 + $0x12c0] sm:$0xff]
    %v742 = vld [vmem:[#allocation5 + $0x12c8] sm:$0xff]
    %v743 = vld [vmem:[#allocation5 + $0x12d0] sm:$0xff]
    %v744 = vld [vmem:[#allocation5 + $0x12d8] sm:$0xff]
    %v745 = vld [vmem:[#allocation5 + $0x12e0] sm:$0xff]
    %v746 = vld [vmem:[#allocation5 + $0x12e8] sm:$0xff]
    %v747 = vld [vmem:[#allocation5 + $0x12f0] sm:$0xff]
    %v748 = vld [vmem:[#allocation5 + $0x12f8] sm:$0xff]
    %v749 = vld [vmem:[#allocation5 + $0x1300] sm:$0xff]
    %v750 = vld [vmem:[#allocation5 + $0x1308] sm:$0xff]
    %v751 = vld [vmem:[#allocation5 + $0x1310] sm:$0xff]
    %v752 = vld [vmem:[#allocation5 + $0x1318] sm:$0xff]
    %v753 = vld [vmem:[#allocation5 + $0x1320] sm:$0xff]
    %v754 = vld [vmem:[#allocation5 + $0x1328] sm:$0xff]
    %v755 = vld [vmem:[#allocation5 + $0x1330] sm:$0xff]
    %v756 = vld [vmem:[#allocation5 + $0x1338] sm:$0xff]
    %v757 = vld [vmem:[#allocation5 + $0x1340] sm:$0xff]
    %v758 = vld [vmem:[#allocation5 + $0x1348] sm:$0xff]
    %v759 = vld [vmem:[#allocation5 + $0x1350] sm:$0xff]
    %v760 = vld [vmem:[#allocation5 + $0x1358] sm:$0xff]
    %v761 = vld [vmem:[#allocation5 + $0x1360] sm:$0xff]
    %v762 = vld [vmem:[#allocation5 + $0x1368] sm:$0xff]
    %v763 = vld [vmem:[#allocation5 + $0x1370] sm:$0xff]
    %v764 = vld [vmem:[#allocation5 + $0x1378] sm:$0xff]
    %v765 = vld [vmem:[#allocation5 + $0x1380] sm:$0xff]
    %v766 = vld [vmem:[#allocation5 + $0x1388] sm:$0xff]
    %v767 = vld [vmem:[#allocation5 + $0x1390] sm:$0xff]
    %v768 = vld [vmem:[#allocation5 + $0x1398] sm:$0xff]
    %v769 = vld [vmem:[#allocation5 + $0x13a0] sm:$0xff]
    %v770 = vld [vmem:[#allocation5 + $0x13a8] sm:$0xff]
    %v771 = vld [vmem:[#allocation5 + $0x13b0] sm:$0xff]
    %v772 = vld [vmem:[#allocation5 + $0x13b8] sm:$0xff]
    %v773 = vld [vmem:[#allocation5 + $0x13c0] sm:$0xff]
    %v774 = vld [vmem:[#allocation5 + $0x13c8] sm:$0xff]
    %v775 = vld [vmem:[#allocation5 + $0x13d0] sm:$0xff]
    %v776 = vld [vmem:[#allocation5 + $0x13d8] sm:$0xff]
    %v777 = vld [vmem:[#allocation5 + $0x13e0] sm:$0xff]
    %v778 = vld [vmem:[#allocation5 + $0x13e8] sm:$0xff]
    %v779 = vld [vmem:[#allocation5 + $0x13f0] sm:$0xff]
    %v780 = vld [vmem:[#allocation5 + $0x13f8] sm:$0xff]
    %v781 = vld [vmem:[#allocation5 + $0x1400] sm:$0xff]
    %v782 = vld [vmem:[#allocation5 + $0x1408] sm:$0xff]
    %v783 = vld [vmem:[#allocation5 + $0x1410] sm:$0xff]
    %v784 = vld [vmem:[#allocation5 + $0x1418] sm:$0xff]
    %v785 = vld [vmem:[#allocation5 + $0x1420] sm:$0xff]
    %v786 = vld [vmem:[#allocation5 + $0x1428] sm:$0xff]
    %v787 = vld [vmem:[#allocation5 + $0x1430] sm:$0xff]
    %v788 = vld [vmem:[#allocation5 + $0x1438] sm:$0xff]
    %v789 = vld [vmem:[#allocation5 + $0x1440] sm:$0xff]
    %v790 = vld [vmem:[#allocation5 + $0x1448] sm:$0xff]
    %v791 = vld [vmem:[#allocation5 + $0x1450] sm:$0xff]
    %v792 = vld [vmem:[#allocation5 + $0x1458] sm:$0xff]
    %v793 = vld [vmem:[#allocation5 + $0x1460] sm:$0xff]
    %v794 = vld [vmem:[#allocation5 + $0x1468] sm:$0xff]
    %v795 = vld [vmem:[#allocation5 + $0x1470] sm:$0xff]
    %v796 = vld [vmem:[#allocation5 + $0x1478] sm:$0xff]
    %v797 = vld [vmem:[#allocation5 + $0x1480] sm:$0xff]
    %v798 = vld [vmem:[#allocation5 + $0x1488] sm:$0xff]
    %v799 = vld [vmem:[#allocation5 + $0x1490] sm:$0xff]
    %v800 = vld [vmem:[#allocation5 + $0x1498] sm:$0xff]
    %v801 = vld [vmem:[#allocation5 + $0x14a0] sm:$0xff]
    %v802 = vld [vmem:[#allocation5 + $0x14a8] sm:$0xff]
    %v803 = vld [vmem:[#allocation5 + $0x14b0] sm:$0xff]
    %v804 = vld [vmem:[#allocation5 + $0x14b8] sm:$0xff]
    %v805 = vld [vmem:[#allocation5 + $0x14c0] sm:$0xff]
    %v806 = vld [vmem:[#allocation5 + $0x14c8] sm:$0xff]
    %v807 = vld [vmem:[#allocation5 + $0x14d0] sm:$0xff]
    %v808 = vld [vmem:[#allocation5 + $0x14d8] sm:$0xff]
    %v809 = vld [vmem:[#allocation5 + $0x14e0] sm:$0xff]
    %v810 = vld [vmem:[#allocation5 + $0x14e8] sm:$0xff]
    %v811 = vld [vmem:[#allocation5 + $0x14f0] sm:$0xff]
    %v812 = vld [vmem:[#allocation5 + $0x14f8] sm:$0xff]
    %v813 = vld [vmem:[#allocation5 + $0x1500] sm:$0xff]
    %v814 = vld [vmem:[#allocation5 + $0x1508] sm:$0xff]
    %v815 = vld [vmem:[#allocation5 + $0x1510] sm:$0xff]
    %v816 = vld [vmem:[#allocation5 + $0x1518] sm:$0xff]
    %v817 = vld [vmem:[#allocation5 + $0x1520] sm:$0xff]
    %v818 = vld [vmem:[#allocation5 + $0x1528] sm:$0xff]
    %v819 = vld [vmem:[#allocation5 + $0x1530] sm:$0xff]
    %v820 = vld [vmem:[#allocation5 + $0x1538] sm:$0xff]
    %v821 = vld [vmem:[#allocation5 + $0x1540] sm:$0xff]
    %v822 = vld [vmem:[#allocation5 + $0x1548] sm:$0xff]
    %v823 = vld [vmem:[#allocation5 + $0x1550] sm:$0xff]
    %v824 = vld [vmem:[#allocation5 + $0x1558] sm:$0xff]
    %v825 = vld [vmem:[#allocation5 + $0x1560] sm:$0xff]
    %v826 = vld [vmem:[#allocation5 + $0x1568] sm:$0xff]
    %v827 = vld [vmem:[#allocation5 + $0x1570] sm:$0xff]
    %v828 = vld [vmem:[#allocation5 + $0x1578] sm:$0xff]
    %v829 = vld [vmem:[#allocation5 + $0x1580] sm:$0xff]
    %v830 = vld [vmem:[#allocation5 + $0x1588] sm:$0xff]
    %v831 = vld [vmem:[#allocation5 + $0x1590] sm:$0xff]
    %v832 = vld [vmem:[#allocation5 + $0x1598] sm:$0xff]
    %v833 = vld [vmem:[#allocation5 + $0x15a0] sm:$0xff]
    %v834 = vld [vmem:[#allocation5 + $0x15a8] sm:$0xff]
    %v835 = vld [vmem:[#allocation5 + $0x15b0] sm:$0xff]
    %v836 = vld [vmem:[#allocation5 + $0x15b8] sm:$0xff]
    %v837 = vld [vmem:[#allocation5 + $0x15c0] sm:$0xff]
    %v838 = vld [vmem:[#allocation5 + $0x15c8] sm:$0xff]
    %v839 = vld [vmem:[#allocation5 + $0x15d0] sm:$0xff]
    %v840 = vld [vmem:[#allocation5 + $0x15d8] sm:$0xff]
    %v841 = vld [vmem:[#allocation5 + $0x15e0] sm:$0xff]
    %v842 = vld [vmem:[#allocation5 + $0x15e8] sm:$0xff]
    %v843 = vld [vmem:[#allocation5 + $0x15f0] sm:$0xff]
    %v844 = vld [vmem:[#allocation5 + $0x15f8] sm:$0xff]
    %v845 = vld [vmem:[#allocation5 + $0x1600] sm:$0xff]
    %v846 = vld [vmem:[#allocation5 + $0x1608] sm:$0xff]
    %v847 = vld [vmem:[#allocation5 + $0x1610] sm:$0xff]
    %v848 = vld [vmem:[#allocation5 + $0x1618] sm:$0xff]
    %v849 = vld [vmem:[#allocation5 + $0x1620] sm:$0xff]
    %v850 = vld [vmem:[#allocation5 + $0x1628] sm:$0xff]
    %v851 = vld [vmem:[#allocation5 + $0x1630] sm:$0xff]
    %v852 = vld [vmem:[#allocation5 + $0x1638] sm:$0xff]
    %v853 = vld [vmem:[#allocation5 + $0x1640] sm:$0xff]
    %v854 = vld [vmem:[#allocation5 + $0x1648] sm:$0xff]
    %v855 = vld [vmem:[#allocation5 + $0x1650] sm:$0xff]
    %v856 = vld [vmem:[#allocation5 + $0x1658] sm:$0xff]
    %v857 = vld [vmem:[#allocation5 + $0x1660] sm:$0xff]
    %v858 = vld [vmem:[#allocation5 + $0x1668] sm:$0xff]
    %v859 = vld [vmem:[#allocation5 + $0x1670] sm:$0xff]
    %v860 = vld [vmem:[#allocation5 + $0x1678] sm:$0xff]
    %v861 = vld [vmem:[#allocation5 + $0x1680] sm:$0xff]
    %v862 = vld [vmem:[#allocation5 + $0x1688] sm:$0xff]
    %v863 = vld [vmem:[#allocation5 + $0x1690] sm:$0xff]
    %v864 = vld [vmem:[#allocation5 + $0x1698] sm:$0xff]
    %v865 = vld [vmem:[#allocation5 + $0x16a0] sm:$0xff]
    %v866 = vld [vmem:[#allocation5 + $0x16a8] sm:$0xff]
    %v867 = vld [vmem:[#allocation5 + $0x16b0] sm:$0xff]
    %v868 = vld [vmem:[#allocation5 + $0x16b8] sm:$0xff]
    %v869 = vld [vmem:[#allocation5 + $0x16c0] sm:$0xff]
    %v870 = vld [vmem:[#allocation5 + $0x16c8] sm:$0xff]
    %v871 = vld [vmem:[#allocation5 + $0x16d0] sm:$0xff]
    %v872 = vld [vmem:[#allocation5 + $0x16d8] sm:$0xff]
    %v873 = vld [vmem:[#allocation5 + $0x16e0] sm:$0xff]
    %v874 = vld [vmem:[#allocation5 + $0x16e8] sm:$0xff]
    %v875 = vld [vmem:[#allocation5 + $0x16f0] sm:$0xff]
    %v876 = vld [vmem:[#allocation5 + $0x16f8] sm:$0xff]
    %v877 = vld [vmem:[#allocation5 + $0x1700] sm:$0xff]
    %v878 = vld [vmem:[#allocation5 + $0x1708] sm:$0xff]
    %v879 = vld [vmem:[#allocation5 + $0x1710] sm:$0xff]
    %v880 = vld [vmem:[#allocation5 + $0x1718] sm:$0xff]
    %v881 = vld [vmem:[#allocation5 + $0x1720] sm:$0xff]
    %v882 = vld [vmem:[#allocation5 + $0x1728] sm:$0xff]
    %v883 = vld [vmem:[#allocation5 + $0x1730] sm:$0xff]
    %v884 = vld [vmem:[#allocation5 + $0x1738] sm:$0xff]
    %v885 = vld [vmem:[#allocation5 + $0x1740] sm:$0xff]
    %v886 = vld [vmem:[#allocation5 + $0x1748] sm:$0xff]
    %v887 = vld [vmem:[#allocation5 + $0x1750] sm:$0xff]
    %v888 = vld [vmem:[#allocation5 + $0x1758] sm:$0xff]
    %v889 = vld [vmem:[#allocation5 + $0x1760] sm:$0xff]
    %v890 = vld [vmem:[#allocation5 + $0x1768] sm:$0xff]
    %v891 = vld [vmem:[#allocation5 + $0x1770] sm:$0xff]
    %v892 = vld [vmem:[#allocation5 + $0x1778] sm:$0xff]
    %v893 = vld [vmem:[#allocation5 + $0x1780] sm:$0xff]
    %v894 = vld [vmem:[#allocation5 + $0x1788] sm:$0xff]
    %v895 = vld [vmem:[#allocation5 + $0x1790] sm:$0xff]
    %v896 = vld [vmem:[#allocation5 + $0x1798] sm:$0xff]
    %v897 = vld [vmem:[#allocation5 + $0x17a0] sm:$0xff]
    %v898 = vld [vmem:[#allocation5 + $0x17a8] sm:$0xff]
    %v899 = vld [vmem:[#allocation5 + $0x17b0] sm:$0xff]
    %v900 = vld [vmem:[#allocation5 + $0x17b8] sm:$0xff]
    %v901 = vld [vmem:[#allocation5 + $0x17c0] sm:$0xff]
    %v902 = vld [vmem:[#allocation5 + $0x17c8] sm:$0xff]
    %v903 = vld [vmem:[#allocation5 + $0x17d0] sm:$0xff]
    %v904 = vld [vmem:[#allocation5 + $0x17d8] sm:$0xff]
    %v905 = vld [vmem:[#allocation5 + $0x17e0] sm:$0xff]
    %v906 = vld [vmem:[#allocation5 + $0x17e8] sm:$0xff]
    %v907 = vld [vmem:[#allocation5 + $0x17f0] sm:$0xff]
    %v908 = vld [vmem:[#allocation5 + $0x17f8] sm:$0xff]
    %v909 = vld [vmem:[#allocation7] sm:$0xf]
    %v911 = vlaneseq
    %v912 = vshrl.u32 %v911, 7
    %v913 = vsub.s32 0, %v912
    %v914 = vrot.slane %v909, %v913
    %v915 = vlaneseq
    %v916 = vshrl.u32 %v915, 7
    %v917 = vsub.s32 1, %v916
    %v918 = vrot.slane %v909, %v917
    %v919 = vlaneseq
    %v920 = vshrl.u32 %v919, 7
    %v921 = vsub.s32 2, %v920
    %v922 = vrot.slane %v909, %v921
    %v923 = vlaneseq
    %v924 = vshrl.u32 %v923, 7
    %v925 = vsub.s32 3, %v924
    %v926 = vrot.slane %v909, %v925
    %v955 = vunpack.c.l.b16 %v117
    %v956 = vunpack.c.h.b16 %v117
    %v957 = vunpack.c.l.b16 %v118
    %v958 = vunpack.c.h.b16 %v118
    %v959 = vunpack.c.l.b16 %v119
    %v960 = vunpack.c.h.b16 %v119
    %v961 = vunpack.c.l.b16 %v120
    %v962 = vunpack.c.h.b16 %v120
    %v963 = vunpack.c.l.b16 %v121
    %v964 = vunpack.c.h.b16 %v121
    %v965 = vunpack.c.l.b16 %v122
    %v966 = vunpack.c.h.b16 %v122
    %v967 = vunpack.c.l.b16 %v123
    %v968 = vunpack.c.h.b16 %v123
    %v969 = vunpack.c.l.b16 %v124
    %v970 = vunpack.c.h.b16 %v124
    %v971 = vunpack.c.l.b16 %v125
    %v972 = vunpack.c.h.b16 %v125
    %v973 = vunpack.c.l.b16 %v126
    %v974 = vunpack.c.h.b16 %v126
    %v975 = vunpack.c.l.b16 %v127
    %v976 = vunpack.c.h.b16 %v127
    %v977 = vunpack.c.l.b16 %v128
    %v978 = vunpack.c.h.b16 %v128
    %v979 = vunpack.c.l.b16 %v129
    %v980 = vunpack.c.h.b16 %v129
    %v981 = vunpack.c.l.b16 %v130
    %v982 = vunpack.c.h.b16 %v130
    %v983 = vunpack.c.l.b16 %v131
    %v984 = vunpack.c.h.b16 %v131
    %v985 = vunpack.c.l.b16 %v132
    %v986 = vunpack.c.h.b16 %v132
    %v987 = vunpack.c.l.b16 %v133
    %v988 = vunpack.c.h.b16 %v133
    %v989 = vunpack.c.l.b16 %v134
    %v990 = vunpack.c.h.b16 %v134
    %v991 = vunpack.c.l.b16 %v135
    %v992 = vunpack.c.h.b16 %v135
    %v993 = vunpack.c.l.b16 %v136
    %v994 = vunpack.c.h.b16 %v136
    %v995 = vunpack.c.l.b16 %v137
    %v996 = vunpack.c.h.b16 %v137
    %v997 = vunpack.c.l.b16 %v138
    %v998 = vunpack.c.h.b16 %v138
    %v999 = vunpack.c.l.b16 %v139
    %v1000 = vunpack.c.h.b16 %v139
    %v1001 = vunpack.c.l.b16 %v140
    %v1002 = vunpack.c.h.b16 %v140
    %v1003 = vpack.c.b16 %v979, %v955
    %v1004 = vpack.c.b16 %v980, %v956
    %v1005 = vpack.c.b16 %v981, %v957
    %v1006 = vpack.c.b16 %v982, %v958
    %v1007 = vpack.c.b16 %v983, %v959
    %v1008 = vpack.c.b16 %v984, %v960
    %v1009 = vpack.c.b16 %v985, %v961
    %v1010 = vpack.c.b16 %v986, %v962
    %v1011 = vpack.c.b16 %v987, %v963
    %v1012 = vpack.c.b16 %v988, %v964
    %v1013 = vpack.c.b16 %v989, %v965
    %v1014 = vpack.c.b16 %v990, %v966
    %v1015 = vpack.c.b16 %v991, %v967
    %v1016 = vpack.c.b16 %v992, %v968
    %v1017 = vpack.c.b16 %v993, %v969
    %v1018 = vpack.c.b16 %v994, %v970
    %v1019 = vpack.c.b16 %v995, %v971
    %v1020 = vpack.c.b16 %v996, %v972
    %v1021 = vpack.c.b16 %v997, %v973
    %v1022 = vpack.c.b16 %v998, %v974
    %v1023 = vpack.c.b16 %v999, %v975
    %v1024 = vpack.c.b16 %v1000, %v976
    %v1025 = vpack.c.b16 %v1001, %v977
    %v1026 = vpack.c.b16 %v1002, %v978
    %v1819 = vunpack.c.l.b16 %v141
    %v1820 = vunpack.c.h.b16 %v141
    %v1821 = vunpack.c.l.b16 %v142
    %v1822 = vunpack.c.h.b16 %v142
    %v1823 = vunpack.c.l.b16 %v143
    %v1824 = vunpack.c.h.b16 %v143
    %v1825 = vunpack.c.l.b16 %v144
    %v1826 = vunpack.c.h.b16 %v144
    %v1827 = vunpack.c.l.b16 %v145
    %v1828 = vunpack.c.h.b16 %v145
    %v1829 = vunpack.c.l.b16 %v146
    %v1830 = vunpack.c.h.b16 %v146
    %v1831 = vunpack.c.l.b16 %v147
    %v1832 = vunpack.c.h.b16 %v147
    %v1833 = vunpack.c.l.b16 %v148
    %v1834 = vunpack.c.h.b16 %v148
    %v1835 = vunpack.c.l.b16 %v149
    %v1836 = vunpack.c.h.b16 %v149
    %v1837 = vunpack.c.l.b16 %v150
    %v1838 = vunpack.c.h.b16 %v150
    %v1839 = vunpack.c.l.b16 %v151
    %v1840 = vunpack.c.h.b16 %v151
    %v1841 = vunpack.c.l.b16 %v152
    %v1842 = vunpack.c.h.b16 %v152
    %v1843 = vunpack.c.l.b16 %v153
    %v1844 = vunpack.c.h.b16 %v153
    %v1845 = vunpack.c.l.b16 %v154
    %v1846 = vunpack.c.h.b16 %v154
    %v1847 = vunpack.c.l.b16 %v155
    %v1848 = vunpack.c.h.b16 %v155
    %v1849 = vunpack.c.l.b16 %v156
    %v1850 = vunpack.c.h.b16 %v156
    %v1851 = vunpack.c.l.b16 %v157
    %v1852 = vunpack.c.h.b16 %v157
    %v1853 = vunpack.c.l.b16 %v158
    %v1854 = vunpack.c.h.b16 %v158
    %v1855 = vunpack.c.l.b16 %v159
    %v1856 = vunpack.c.h.b16 %v159
    %v1857 = vunpack.c.l.b16 %v160
    %v1858 = vunpack.c.h.b16 %v160
    %v1859 = vunpack.c.l.b16 %v161
    %v1860 = vunpack.c.h.b16 %v161
    %v1861 = vunpack.c.l.b16 %v162
    %v1862 = vunpack.c.h.b16 %v162
    %v1863 = vunpack.c.l.b16 %v163
    %v1864 = vunpack.c.h.b16 %v163
    %v1865 = vunpack.c.l.b16 %v164
    %v1866 = vunpack.c.h.b16 %v164
    %v1867 = vunpack.c.l.b16 %v165
    %v1868 = vunpack.c.h.b16 %v165
    %v1869 = vunpack.c.l.b16 %v166
    %v1870 = vunpack.c.h.b16 %v166
    %v1871 = vunpack.c.l.b16 %v167
    %v1872 = vunpack.c.h.b16 %v167
    %v1873 = vunpack.c.l.b16 %v168
    %v1874 = vunpack.c.h.b16 %v168
    %v1875 = vunpack.c.l.b16 %v169
    %v1876 = vunpack.c.h.b16 %v169
    %v1877 = vunpack.c.l.b16 %v170
    %v1878 = vunpack.c.h.b16 %v170
    %v1879 = vunpack.c.l.b16 %v171
    %v1880 = vunpack.c.h.b16 %v171
    %v1881 = vunpack.c.l.b16 %v172
    %v1882 = vunpack.c.h.b16 %v172
    %v1883 = vunpack.c.l.b16 %v173
    %v1884 = vunpack.c.h.b16 %v173
    %v1885 = vunpack.c.l.b16 %v174
    %v1886 = vunpack.c.h.b16 %v174
    %v1887 = vunpack.c.l.b16 %v175
    %v1888 = vunpack.c.h.b16 %v175
    %v1889 = vunpack.c.l.b16 %v176
    %v1890 = vunpack.c.h.b16 %v176
    %v1891 = vunpack.c.l.b16 %v177
    %v1892 = vunpack.c.h.b16 %v177
    %v1893 = vunpack.c.l.b16 %v178
    %v1894 = vunpack.c.h.b16 %v178
    %v1895 = vunpack.c.l.b16 %v179
    %v1896 = vunpack.c.h.b16 %v179
    %v1897 = vunpack.c.l.b16 %v180
    %v1898 = vunpack.c.h.b16 %v180
    %v1899 = vunpack.c.l.b16 %v181
    %v1900 = vunpack.c.h.b16 %v181
    %v1901 = vunpack.c.l.b16 %v182
    %v1902 = vunpack.c.h.b16 %v182
    %v1903 = vunpack.c.l.b16 %v183
    %v1904 = vunpack.c.h.b16 %v183
    %v1905 = vunpack.c.l.b16 %v184
    %v1906 = vunpack.c.h.b16 %v184
    %v1907 = vunpack.c.l.b16 %v185
    %v1908 = vunpack.c.h.b16 %v185
    %v1909 = vunpack.c.l.b16 %v186
    %v1910 = vunpack.c.h.b16 %v186
    %v1911 = vunpack.c.l.b16 %v187
    %v1912 = vunpack.c.h.b16 %v187
    %v1913 = vunpack.c.l.b16 %v188
    %v1914 = vunpack.c.h.b16 %v188
    %v1915 = vunpack.c.l.b16 %v189
    %v1916 = vunpack.c.h.b16 %v189
    %v1917 = vunpack.c.l.b16 %v190
    %v1918 = vunpack.c.h.b16 %v190
    %v1919 = vunpack.c.l.b16 %v191
    %v1920 = vunpack.c.h.b16 %v191
    %v1921 = vunpack.c.l.b16 %v192
    %v1922 = vunpack.c.h.b16 %v192
    %v1923 = vunpack.c.l.b16 %v193
    %v1924 = vunpack.c.h.b16 %v193
    %v1925 = vunpack.c.l.b16 %v194
    %v1926 = vunpack.c.h.b16 %v194
    %v1927 = vunpack.c.l.b16 %v195
    %v1928 = vunpack.c.h.b16 %v195
    %v1929 = vunpack.c.l.b16 %v196
    %v1930 = vunpack.c.h.b16 %v196
    %v1931 = vunpack.c.l.b16 %v197
    %v1932 = vunpack.c.h.b16 %v197
    %v1933 = vunpack.c.l.b16 %v198
    %v1934 = vunpack.c.h.b16 %v198
    %v1935 = vunpack.c.l.b16 %v199
    %v1936 = vunpack.c.h.b16 %v199
    %v1937 = vunpack.c.l.b16 %v200
    %v1938 = vunpack.c.h.b16 %v200
    %v1939 = vunpack.c.l.b16 %v201
    %v1940 = vunpack.c.h.b16 %v201
    %v1941 = vunpack.c.l.b16 %v202
    %v1942 = vunpack.c.h.b16 %v202
    %v1943 = vunpack.c.l.b16 %v203
    %v1944 = vunpack.c.h.b16 %v203
    %v1945 = vunpack.c.l.b16 %v204
    %v1946 = vunpack.c.h.b16 %v204
    %v1947 = vunpack.c.l.b16 %v205
    %v1948 = vunpack.c.h.b16 %v205
    %v1949 = vunpack.c.l.b16 %v206
    %v1950 = vunpack.c.h.b16 %v206
    %v1951 = vunpack.c.l.b16 %v207
    %v1952 = vunpack.c.h.b16 %v207
    %v1953 = vunpack.c.l.b16 %v208
    %v1954 = vunpack.c.h.b16 %v208
    %v1955 = vunpack.c.l.b16 %v209
    %v1956 = vunpack.c.h.b16 %v209
    %v1957 = vunpack.c.l.b16 %v210
    %v1958 = vunpack.c.h.b16 %v210
    %v1959 = vunpack.c.l.b16 %v211
    %v1960 = vunpack.c.h.b16 %v211
    %v1961 = vunpack.c.l.b16 %v212
    %v1962 = vunpack.c.h.b16 %v212
    %v1963 = vunpack.c.l.b16 %v213
    %v1964 = vunpack.c.h.b16 %v213
    %v1965 = vunpack.c.l.b16 %v214
    %v1966 = vunpack.c.h.b16 %v214
    %v1967 = vunpack.c.l.b16 %v215
    %v1968 = vunpack.c.h.b16 %v215
    %v1969 = vunpack.c.l.b16 %v216
    %v1970 = vunpack.c.h.b16 %v216
    %v1971 = vunpack.c.l.b16 %v217
    %v1972 = vunpack.c.h.b16 %v217
    %v1973 = vunpack.c.l.b16 %v218
    %v1974 = vunpack.c.h.b16 %v218
    %v1975 = vunpack.c.l.b16 %v219
    %v1976 = vunpack.c.h.b16 %v219
    %v1977 = vunpack.c.l.b16 %v220
    %v1978 = vunpack.c.h.b16 %v220
    %v1979 = vunpack.c.l.b16 %v221
    %v1980 = vunpack.c.h.b16 %v221
    %v1981 = vunpack.c.l.b16 %v222
    %v1982 = vunpack.c.h.b16 %v222
    %v1983 = vunpack.c.l.b16 %v223
    %v1984 = vunpack.c.h.b16 %v223
    %v1985 = vunpack.c.l.b16 %v224
    %v1986 = vunpack.c.h.b16 %v224
    %v1987 = vunpack.c.l.b16 %v225
    %v1988 = vunpack.c.h.b16 %v225
    %v1989 = vunpack.c.l.b16 %v226
    %v1990 = vunpack.c.h.b16 %v226
    %v1991 = vunpack.c.l.b16 %v227
    %v1992 = vunpack.c.h.b16 %v227
    %v1993 = vunpack.c.l.b16 %v228
    %v1994 = vunpack.c.h.b16 %v228
    %v1995 = vunpack.c.l.b16 %v229
    %v1996 = vunpack.c.h.b16 %v229
    %v1997 = vunpack.c.l.b16 %v230
    %v1998 = vunpack.c.h.b16 %v230
    %v1999 = vunpack.c.l.b16 %v231
    %v2000 = vunpack.c.h.b16 %v231
    %v2001 = vunpack.c.l.b16 %v232
    %v2002 = vunpack.c.h.b16 %v232
    %v2003 = vunpack.c.l.b16 %v233
    %v2004 = vunpack.c.h.b16 %v233
    %v2005 = vunpack.c.l.b16 %v234
    %v2006 = vunpack.c.h.b16 %v234
    %v2007 = vunpack.c.l.b16 %v235
    %v2008 = vunpack.c.h.b16 %v235
    %v2009 = vunpack.c.l.b16 %v236
    %v2010 = vunpack.c.h.b16 %v236
    %v2011 = vunpack.c.l.b16 %v237
    %v2012 = vunpack.c.h.b16 %v237
    %v2013 = vunpack.c.l.b16 %v238
    %v2014 = vunpack.c.h.b16 %v238
    %v2015 = vunpack.c.l.b16 %v239
    %v2016 = vunpack.c.h.b16 %v239
    %v2017 = vunpack.c.l.b16 %v240
    %v2018 = vunpack.c.h.b16 %v240
    %v2019 = vunpack.c.l.b16 %v241
    %v2020 = vunpack.c.h.b16 %v241
    %v2021 = vunpack.c.l.b16 %v242
    %v2022 = vunpack.c.h.b16 %v242
    %v2023 = vunpack.c.l.b16 %v243
    %v2024 = vunpack.c.h.b16 %v243
    %v2025 = vunpack.c.l.b16 %v244
    %v2026 = vunpack.c.h.b16 %v244
    %v2027 = vunpack.c.l.b16 %v245
    %v2028 = vunpack.c.h.b16 %v245
    %v2029 = vunpack.c.l.b16 %v246
    %v2030 = vunpack.c.h.b16 %v246
    %v2031 = vunpack.c.l.b16 %v247
    %v2032 = vunpack.c.h.b16 %v247
    %v2033 = vunpack.c.l.b16 %v248
    %v2034 = vunpack.c.h.b16 %v248
    %v2035 = vunpack.c.l.b16 %v249
    %v2036 = vunpack.c.h.b16 %v249
    %v2037 = vunpack.c.l.b16 %v250
    %v2038 = vunpack.c.h.b16 %v250
    %v2039 = vunpack.c.l.b16 %v251
    %v2040 = vunpack.c.h.b16 %v251
    %v2041 = vunpack.c.l.b16 %v252
    %v2042 = vunpack.c.h.b16 %v252
    %v2043 = vunpack.c.l.b16 %v253
    %v2044 = vunpack.c.h.b16 %v253
    %v2045 = vunpack.c.l.b16 %v254
    %v2046 = vunpack.c.h.b16 %v254
    %v2047 = vunpack.c.l.b16 %v255
    %v2048 = vunpack.c.h.b16 %v255
    %v2049 = vunpack.c.l.b16 %v256
    %v2050 = vunpack.c.h.b16 %v256
    %v2051 = vunpack.c.l.b16 %v257
    %v2052 = vunpack.c.h.b16 %v257
    %v2053 = vunpack.c.l.b16 %v258
    %v2054 = vunpack.c.h.b16 %v258
    %v2055 = vunpack.c.l.b16 %v259
    %v2056 = vunpack.c.h.b16 %v259
    %v2057 = vunpack.c.l.b16 %v260
    %v2058 = vunpack.c.h.b16 %v260
    %v2059 = vunpack.c.l.b16 %v261
    %v2060 = vunpack.c.h.b16 %v261
    %v2061 = vunpack.c.l.b16 %v262
    %v2062 = vunpack.c.h.b16 %v262
    %v2063 = vunpack.c.l.b16 %v263
    %v2064 = vunpack.c.h.b16 %v263
    %v2065 = vunpack.c.l.b16 %v264
    %v2066 = vunpack.c.h.b16 %v264
    %v2067 = vunpack.c.l.b16 %v265
    %v2068 = vunpack.c.h.b16 %v265
    %v2069 = vunpack.c.l.b16 %v266
    %v2070 = vunpack.c.h.b16 %v266
    %v2071 = vunpack.c.l.b16 %v267
    %v2072 = vunpack.c.h.b16 %v267
    %v2073 = vunpack.c.l.b16 %v268
    %v2074 = vunpack.c.h.b16 %v268
    %v2075 = vunpack.c.l.b16 %v269
    %v2076 = vunpack.c.h.b16 %v269
    %v2077 = vunpack.c.l.b16 %v270
    %v2078 = vunpack.c.h.b16 %v270
    %v2079 = vunpack.c.l.b16 %v271
    %v2080 = vunpack.c.h.b16 %v271
    %v2081 = vunpack.c.l.b16 %v272
    %v2082 = vunpack.c.h.b16 %v272
    %v2083 = vunpack.c.l.b16 %v273
    %v2084 = vunpack.c.h.b16 %v273
    %v2085 = vunpack.c.l.b16 %v274
    %v2086 = vunpack.c.h.b16 %v274
    %v2087 = vunpack.c.l.b16 %v275
    %v2088 = vunpack.c.h.b16 %v275
    %v2089 = vunpack.c.l.b16 %v276
    %v2090 = vunpack.c.h.b16 %v276
    %v2091 = vunpack.c.l.b16 %v277
    %v2092 = vunpack.c.h.b16 %v277
    %v2093 = vunpack.c.l.b16 %v278
    %v2094 = vunpack.c.h.b16 %v278
    %v2095 = vunpack.c.l.b16 %v279
    %v2096 = vunpack.c.h.b16 %v279
    %v2097 = vunpack.c.l.b16 %v280
    %v2098 = vunpack.c.h.b16 %v280
    %v2099 = vunpack.c.l.b16 %v281
    %v2100 = vunpack.c.h.b16 %v281
    %v2101 = vunpack.c.l.b16 %v282
    %v2102 = vunpack.c.h.b16 %v282
    %v2103 = vunpack.c.l.b16 %v283
    %v2104 = vunpack.c.h.b16 %v283
    %v2105 = vunpack.c.l.b16 %v284
    %v2106 = vunpack.c.h.b16 %v284
    %v2107 = vunpack.c.l.b16 %v285
    %v2108 = vunpack.c.h.b16 %v285
    %v2109 = vunpack.c.l.b16 %v286
    %v2110 = vunpack.c.h.b16 %v286
    %v2111 = vunpack.c.l.b16 %v287
    %v2112 = vunpack.c.h.b16 %v287
    %v2113 = vunpack.c.l.b16 %v288
    %v2114 = vunpack.c.h.b16 %v288
    %v2115 = vunpack.c.l.b16 %v289
    %v2116 = vunpack.c.h.b16 %v289
    %v2117 = vunpack.c.l.b16 %v290
    %v2118 = vunpack.c.h.b16 %v290
    %v2119 = vunpack.c.l.b16 %v291
    %v2120 = vunpack.c.h.b16 %v291
    %v2121 = vunpack.c.l.b16 %v292
    %v2122 = vunpack.c.h.b16 %v292
    %v2123 = vunpack.c.l.b16 %v293
    %v2124 = vunpack.c.h.b16 %v293
    %v2125 = vunpack.c.l.b16 %v294
    %v2126 = vunpack.c.h.b16 %v294
    %v2127 = vunpack.c.l.b16 %v295
    %v2128 = vunpack.c.h.b16 %v295
    %v2129 = vunpack.c.l.b16 %v296
    %v2130 = vunpack.c.h.b16 %v296
    %v2131 = vunpack.c.l.b16 %v297
    %v2132 = vunpack.c.h.b16 %v297
    %v2133 = vunpack.c.l.b16 %v298
    %v2134 = vunpack.c.h.b16 %v298
    %v2135 = vunpack.c.l.b16 %v299
    %v2136 = vunpack.c.h.b16 %v299
    %v2137 = vunpack.c.l.b16 %v300
    %v2138 = vunpack.c.h.b16 %v300
    %v2139 = vunpack.c.l.b16 %v301
    %v2140 = vunpack.c.h.b16 %v301
    %v2141 = vunpack.c.l.b16 %v302
    %v2142 = vunpack.c.h.b16 %v302
    %v2143 = vunpack.c.l.b16 %v303
    %v2144 = vunpack.c.h.b16 %v303
    %v2145 = vunpack.c.l.b16 %v304
    %v2146 = vunpack.c.h.b16 %v304
    %v2147 = vunpack.c.l.b16 %v305
    %v2148 = vunpack.c.h.b16 %v305
    %v2149 = vunpack.c.l.b16 %v306
    %v2150 = vunpack.c.h.b16 %v306
    %v2151 = vunpack.c.l.b16 %v307
    %v2152 = vunpack.c.h.b16 %v307
    %v2153 = vunpack.c.l.b16 %v308
    %v2154 = vunpack.c.h.b16 %v308
    %v2155 = vunpack.c.l.b16 %v309
    %v2156 = vunpack.c.h.b16 %v309
    %v2157 = vunpack.c.l.b16 %v310
    %v2158 = vunpack.c.h.b16 %v310
    %v2159 = vunpack.c.l.b16 %v311
    %v2160 = vunpack.c.h.b16 %v311
    %v2161 = vunpack.c.l.b16 %v312
    %v2162 = vunpack.c.h.b16 %v312
    %v2163 = vunpack.c.l.b16 %v313
    %v2164 = vunpack.c.h.b16 %v313
    %v2165 = vunpack.c.l.b16 %v314
    %v2166 = vunpack.c.h.b16 %v314
    %v2167 = vunpack.c.l.b16 %v315
    %v2168 = vunpack.c.h.b16 %v315
    %v2169 = vunpack.c.l.b16 %v316
    %v2170 = vunpack.c.h.b16 %v316
    %v2171 = vunpack.c.l.b16 %v317
    %v2172 = vunpack.c.h.b16 %v317
    %v2173 = vunpack.c.l.b16 %v318
    %v2174 = vunpack.c.h.b16 %v318
    %v2175 = vunpack.c.l.b16 %v319
    %v2176 = vunpack.c.h.b16 %v319
    %v2177 = vunpack.c.l.b16 %v320
    %v2178 = vunpack.c.h.b16 %v320
    %v2179 = vunpack.c.l.b16 %v321
    %v2180 = vunpack.c.h.b16 %v321
    %v2181 = vunpack.c.l.b16 %v322
    %v2182 = vunpack.c.h.b16 %v322
    %v2183 = vunpack.c.l.b16 %v323
    %v2184 = vunpack.c.h.b16 %v323
    %v2185 = vunpack.c.l.b16 %v324
    %v2186 = vunpack.c.h.b16 %v324
    %v2187 = vunpack.c.l.b16 %v325
    %v2188 = vunpack.c.h.b16 %v325
    %v2189 = vunpack.c.l.b16 %v326
    %v2190 = vunpack.c.h.b16 %v326
    %v2191 = vunpack.c.l.b16 %v327
    %v2192 = vunpack.c.h.b16 %v327
    %v2193 = vunpack.c.l.b16 %v328
    %v2194 = vunpack.c.h.b16 %v328
    %v2195 = vunpack.c.l.b16 %v329
    %v2196 = vunpack.c.h.b16 %v329
    %v2197 = vunpack.c.l.b16 %v330
    %v2198 = vunpack.c.h.b16 %v330
    %v2199 = vunpack.c.l.b16 %v331
    %v2200 = vunpack.c.h.b16 %v331
    %v2201 = vunpack.c.l.b16 %v332
    %v2202 = vunpack.c.h.b16 %v332
    %v2203 = vunpack.c.l.b16 %v333
    %v2204 = vunpack.c.h.b16 %v333
    %v2205 = vunpack.c.l.b16 %v334
    %v2206 = vunpack.c.h.b16 %v334
    %v2207 = vunpack.c.l.b16 %v335
    %v2208 = vunpack.c.h.b16 %v335
    %v2209 = vunpack.c.l.b16 %v336
    %v2210 = vunpack.c.h.b16 %v336
    %v2211 = vunpack.c.l.b16 %v337
    %v2212 = vunpack.c.h.b16 %v337
    %v2213 = vunpack.c.l.b16 %v338
    %v2214 = vunpack.c.h.b16 %v338
    %v2215 = vunpack.c.l.b16 %v339
    %v2216 = vunpack.c.h.b16 %v339
    %v2217 = vunpack.c.l.b16 %v340
    %v2218 = vunpack.c.h.b16 %v340
    %v2219 = vunpack.c.l.b16 %v341
    %v2220 = vunpack.c.h.b16 %v341
    %v2221 = vunpack.c.l.b16 %v342
    %v2222 = vunpack.c.h.b16 %v342
    %v2223 = vunpack.c.l.b16 %v343
    %v2224 = vunpack.c.h.b16 %v343
    %v2225 = vunpack.c.l.b16 %v344
    %v2226 = vunpack.c.h.b16 %v344
    %v2227 = vunpack.c.l.b16 %v345
    %v2228 = vunpack.c.h.b16 %v345
    %v2229 = vunpack.c.l.b16 %v346
    %v2230 = vunpack.c.h.b16 %v346
    %v2231 = vunpack.c.l.b16 %v347
    %v2232 = vunpack.c.h.b16 %v347
    %v2233 = vunpack.c.l.b16 %v348
    %v2234 = vunpack.c.h.b16 %v348
    %v2235 = vunpack.c.l.b16 %v349
    %v2236 = vunpack.c.h.b16 %v349
    %v2237 = vunpack.c.l.b16 %v350
    %v2238 = vunpack.c.h.b16 %v350
    %v2239 = vunpack.c.l.b16 %v351
    %v2240 = vunpack.c.h.b16 %v351
    %v2241 = vunpack.c.l.b16 %v352
    %v2242 = vunpack.c.h.b16 %v352
    %v2243 = vunpack.c.l.b16 %v353
    %v2244 = vunpack.c.h.b16 %v353
    %v2245 = vunpack.c.l.b16 %v354
    %v2246 = vunpack.c.h.b16 %v354
    %v2247 = vunpack.c.l.b16 %v355
    %v2248 = vunpack.c.h.b16 %v355
    %v2249 = vunpack.c.l.b16 %v356
    %v2250 = vunpack.c.h.b16 %v356
    %v2251 = vunpack.c.l.b16 %v357
    %v2252 = vunpack.c.h.b16 %v357
    %v2253 = vunpack.c.l.b16 %v358
    %v2254 = vunpack.c.h.b16 %v358
    %v2255 = vunpack.c.l.b16 %v359
    %v2256 = vunpack.c.h.b16 %v359
    %v2257 = vunpack.c.l.b16 %v360
    %v2258 = vunpack.c.h.b16 %v360
    %v2259 = vunpack.c.l.b16 %v361
    %v2260 = vunpack.c.h.b16 %v361
    %v2261 = vunpack.c.l.b16 %v362
    %v2262 = vunpack.c.h.b16 %v362
    %v2263 = vunpack.c.l.b16 %v363
    %v2264 = vunpack.c.h.b16 %v363
    %v2265 = vunpack.c.l.b16 %v364
    %v2266 = vunpack.c.h.b16 %v364
    %v2267 = vunpack.c.l.b16 %v365
    %v2268 = vunpack.c.h.b16 %v365
    %v2269 = vunpack.c.l.b16 %v366
    %v2270 = vunpack.c.h.b16 %v366
    %v2271 = vunpack.c.l.b16 %v367
    %v2272 = vunpack.c.h.b16 %v367
    %v2273 = vunpack.c.l.b16 %v368
    %v2274 = vunpack.c.h.b16 %v368
    %v2275 = vunpack.c.l.b16 %v369
    %v2276 = vunpack.c.h.b16 %v369
    %v2277 = vunpack.c.l.b16 %v370
    %v2278 = vunpack.c.h.b16 %v370
    %v2279 = vunpack.c.l.b16 %v371
    %v2280 = vunpack.c.h.b16 %v371
    %v2281 = vunpack.c.l.b16 %v372
    %v2282 = vunpack.c.h.b16 %v372
    %v2283 = vunpack.c.l.b16 %v373
    %v2284 = vunpack.c.h.b16 %v373
    %v2285 = vunpack.c.l.b16 %v374
    %v2286 = vunpack.c.h.b16 %v374
    %v2287 = vunpack.c.l.b16 %v375
    %v2288 = vunpack.c.h.b16 %v375
    %v2289 = vunpack.c.l.b16 %v376
    %v2290 = vunpack.c.h.b16 %v376
    %v2291 = vunpack.c.l.b16 %v377
    %v2292 = vunpack.c.h.b16 %v377
    %v2293 = vunpack.c.l.b16 %v378
    %v2294 = vunpack.c.h.b16 %v378
    %v2295 = vunpack.c.l.b16 %v379
    %v2296 = vunpack.c.h.b16 %v379
    %v2297 = vunpack.c.l.b16 %v380
    %v2298 = vunpack.c.h.b16 %v380
    %v2299 = vunpack.c.l.b16 %v381
    %v2300 = vunpack.c.h.b16 %v381
    %v2301 = vunpack.c.l.b16 %v382
    %v2302 = vunpack.c.h.b16 %v382
    %v2303 = vunpack.c.l.b16 %v383
    %v2304 = vunpack.c.h.b16 %v383
    %v2305 = vunpack.c.l.b16 %v384
    %v2306 = vunpack.c.h.b16 %v384
    %v2307 = vunpack.c.l.b16 %v385
    %v2308 = vunpack.c.h.b16 %v385
    %v2309 = vunpack.c.l.b16 %v386
    %v2310 = vunpack.c.h.b16 %v386
    %v2311 = vunpack.c.l.b16 %v387
    %v2312 = vunpack.c.h.b16 %v387
    %v2313 = vunpack.c.l.b16 %v388
    %v2314 = vunpack.c.h.b16 %v388
    %v2315 = vunpack.c.l.b16 %v389
    %v2316 = vunpack.c.h.b16 %v389
    %v2317 = vunpack.c.l.b16 %v390
    %v2318 = vunpack.c.h.b16 %v390
    %v2319 = vunpack.c.l.b16 %v391
    %v2320 = vunpack.c.h.b16 %v391
    %v2321 = vunpack.c.l.b16 %v392
    %v2322 = vunpack.c.h.b16 %v392
    %v2323 = vunpack.c.l.b16 %v393
    %v2324 = vunpack.c.h.b16 %v393
    %v2325 = vunpack.c.l.b16 %v394
    %v2326 = vunpack.c.h.b16 %v394
    %v2327 = vunpack.c.l.b16 %v395
    %v2328 = vunpack.c.h.b16 %v395
    %v2329 = vunpack.c.l.b16 %v396
    %v2330 = vunpack.c.h.b16 %v396
    %v2331 = vunpack.c.l.b16 %v397
    %v2332 = vunpack.c.h.b16 %v397
    %v2333 = vunpack.c.l.b16 %v398
    %v2334 = vunpack.c.h.b16 %v398
    %v2335 = vunpack.c.l.b16 %v399
    %v2336 = vunpack.c.h.b16 %v399
    %v2337 = vunpack.c.l.b16 %v400
    %v2338 = vunpack.c.h.b16 %v400
    %v2339 = vunpack.c.l.b16 %v401
    %v2340 = vunpack.c.h.b16 %v401
    %v2341 = vunpack.c.l.b16 %v402
    %v2342 = vunpack.c.h.b16 %v402
    %v2343 = vunpack.c.l.b16 %v403
    %v2344 = vunpack.c.h.b16 %v403
    %v2345 = vunpack.c.l.b16 %v404
    %v2346 = vunpack.c.h.b16 %v404
    %v2347 = vunpack.c.l.b16 %v405
    %v2348 = vunpack.c.h.b16 %v405
    %v2349 = vunpack.c.l.b16 %v406
    %v2350 = vunpack.c.h.b16 %v406
    %v2351 = vunpack.c.l.b16 %v407
    %v2352 = vunpack.c.h.b16 %v407
    %v2353 = vunpack.c.l.b16 %v408
    %v2354 = vunpack.c.h.b16 %v408
    %v2355 = vunpack.c.l.b16 %v409
    %v2356 = vunpack.c.h.b16 %v409
    %v2357 = vunpack.c.l.b16 %v410
    %v2358 = vunpack.c.h.b16 %v410
    %v2359 = vunpack.c.l.b16 %v411
    %v2360 = vunpack.c.h.b16 %v411
    %v2361 = vunpack.c.l.b16 %v412
    %v2362 = vunpack.c.h.b16 %v412
    %v2363 = vunpack.c.l.b16 %v413
    %v2364 = vunpack.c.h.b16 %v413
    %v2365 = vunpack.c.l.b16 %v414
    %v2366 = vunpack.c.h.b16 %v414
    %v2367 = vunpack.c.l.b16 %v415
    %v2368 = vunpack.c.h.b16 %v415
    %v2369 = vunpack.c.l.b16 %v416
    %v2370 = vunpack.c.h.b16 %v416
    %v2371 = vunpack.c.l.b16 %v417
    %v2372 = vunpack.c.h.b16 %v417
    %v2373 = vunpack.c.l.b16 %v418
    %v2374 = vunpack.c.h.b16 %v418
    %v2375 = vunpack.c.l.b16 %v419
    %v2376 = vunpack.c.h.b16 %v419
    %v2377 = vunpack.c.l.b16 %v420
    %v2378 = vunpack.c.h.b16 %v420
    %v2379 = vunpack.c.l.b16 %v421
    %v2380 = vunpack.c.h.b16 %v421
    %v2381 = vunpack.c.l.b16 %v422
    %v2382 = vunpack.c.h.b16 %v422
    %v2383 = vunpack.c.l.b16 %v423
    %v2384 = vunpack.c.h.b16 %v423
    %v2385 = vunpack.c.l.b16 %v424
    %v2386 = vunpack.c.h.b16 %v424
    %v2387 = vunpack.c.l.b16 %v425
    %v2388 = vunpack.c.h.b16 %v425
    %v2389 = vunpack.c.l.b16 %v426
    %v2390 = vunpack.c.h.b16 %v426
    %v2391 = vunpack.c.l.b16 %v427
    %v2392 = vunpack.c.h.b16 %v427
    %v2393 = vunpack.c.l.b16 %v428
    %v2394 = vunpack.c.h.b16 %v428
    %v2395 = vunpack.c.l.b16 %v429
    %v2396 = vunpack.c.h.b16 %v429
    %v2397 = vunpack.c.l.b16 %v430
    %v2398 = vunpack.c.h.b16 %v430
    %v2399 = vunpack.c.l.b16 %v431
    %v2400 = vunpack.c.h.b16 %v431
    %v2401 = vunpack.c.l.b16 %v432
    %v2402 = vunpack.c.h.b16 %v432
    %v2403 = vunpack.c.l.b16 %v433
    %v2404 = vunpack.c.h.b16 %v433
    %v2405 = vunpack.c.l.b16 %v434
    %v2406 = vunpack.c.h.b16 %v434
    %v2407 = vunpack.c.l.b16 %v435
    %v2408 = vunpack.c.h.b16 %v435
    %v2409 = vunpack.c.l.b16 %v436
    %v2410 = vunpack.c.h.b16 %v436
    %v2411 = vunpack.c.l.b16 %v437
    %v2412 = vunpack.c.h.b16 %v437
    %v2413 = vunpack.c.l.b16 %v438
    %v2414 = vunpack.c.h.b16 %v438
    %v2415 = vunpack.c.l.b16 %v439
    %v2416 = vunpack.c.h.b16 %v439
    %v2417 = vunpack.c.l.b16 %v440
    %v2418 = vunpack.c.h.b16 %v440
    %v2419 = vunpack.c.l.b16 %v441
    %v2420 = vunpack.c.h.b16 %v441
    %v2421 = vunpack.c.l.b16 %v442
    %v2422 = vunpack.c.h.b16 %v442
    %v2423 = vunpack.c.l.b16 %v443
    %v2424 = vunpack.c.h.b16 %v443
    %v2425 = vunpack.c.l.b16 %v444
    %v2426 = vunpack.c.h.b16 %v444
    %v2427 = vunpack.c.l.b16 %v445
    %v2428 = vunpack.c.h.b16 %v445
    %v2429 = vunpack.c.l.b16 %v446
    %v2430 = vunpack.c.h.b16 %v446
    %v2431 = vunpack.c.l.b16 %v447
    %v2432 = vunpack.c.h.b16 %v447
    %v2433 = vunpack.c.l.b16 %v448
    %v2434 = vunpack.c.h.b16 %v448
    %v2435 = vunpack.c.l.b16 %v449
    %v2436 = vunpack.c.h.b16 %v449
    %v2437 = vunpack.c.l.b16 %v450
    %v2438 = vunpack.c.h.b16 %v450
    %v2439 = vunpack.c.l.b16 %v451
    %v2440 = vunpack.c.h.b16 %v451
    %v2441 = vunpack.c.l.b16 %v452
    %v2442 = vunpack.c.h.b16 %v452
    %v2443 = vunpack.c.l.b16 %v453
    %v2444 = vunpack.c.h.b16 %v453
    %v2445 = vunpack.c.l.b16 %v454
    %v2446 = vunpack.c.h.b16 %v454
    %v2447 = vunpack.c.l.b16 %v455
    %v2448 = vunpack.c.h.b16 %v455
    %v2449 = vunpack.c.l.b16 %v456
    %v2450 = vunpack.c.h.b16 %v456
    %v2451 = vunpack.c.l.b16 %v457
    %v2452 = vunpack.c.h.b16 %v457
    %v2453 = vunpack.c.l.b16 %v458
    %v2454 = vunpack.c.h.b16 %v458
    %v2455 = vunpack.c.l.b16 %v459
    %v2456 = vunpack.c.h.b16 %v459
    %v2457 = vunpack.c.l.b16 %v460
    %v2458 = vunpack.c.h.b16 %v460
    %v2459 = vunpack.c.l.b16 %v461
    %v2460 = vunpack.c.h.b16 %v461
    %v2461 = vunpack.c.l.b16 %v462
    %v2462 = vunpack.c.h.b16 %v462
    %v2463 = vunpack.c.l.b16 %v463
    %v2464 = vunpack.c.h.b16 %v463
    %v2465 = vunpack.c.l.b16 %v464
    %v2466 = vunpack.c.h.b16 %v464
    %v2467 = vunpack.c.l.b16 %v465
    %v2468 = vunpack.c.h.b16 %v465
    %v2469 = vunpack.c.l.b16 %v466
    %v2470 = vunpack.c.h.b16 %v466
    %v2471 = vunpack.c.l.b16 %v467
    %v2472 = vunpack.c.h.b16 %v467
    %v2473 = vunpack.c.l.b16 %v468
    %v2474 = vunpack.c.h.b16 %v468
    %v2475 = vunpack.c.l.b16 %v469
    %v2476 = vunpack.c.h.b16 %v469
    %v2477 = vunpack.c.l.b16 %v470
    %v2478 = vunpack.c.h.b16 %v470
    %v2479 = vunpack.c.l.b16 %v471
    %v2480 = vunpack.c.h.b16 %v471
    %v2481 = vunpack.c.l.b16 %v472
    %v2482 = vunpack.c.h.b16 %v472
    %v2483 = vunpack.c.l.b16 %v473
    %v2484 = vunpack.c.h.b16 %v473
    %v2485 = vunpack.c.l.b16 %v474
    %v2486 = vunpack.c.h.b16 %v474
    %v2487 = vunpack.c.l.b16 %v475
    %v2488 = vunpack.c.h.b16 %v475
    %v2489 = vunpack.c.l.b16 %v476
    %v2490 = vunpack.c.h.b16 %v476
    %v2491 = vunpack.c.l.b16 %v477
    %v2492 = vunpack.c.h.b16 %v477
    %v2493 = vunpack.c.l.b16 %v478
    %v2494 = vunpack.c.h.b16 %v478
    %v2495 = vunpack.c.l.b16 %v479
    %v2496 = vunpack.c.h.b16 %v479
    %v2497 = vunpack.c.l.b16 %v480
    %v2498 = vunpack.c.h.b16 %v480
    %v2499 = vunpack.c.l.b16 %v481
    %v2500 = vunpack.c.h.b16 %v481
    %v2501 = vunpack.c.l.b16 %v482
    %v2502 = vunpack.c.h.b16 %v482
    %v2503 = vunpack.c.l.b16 %v483
    %v2504 = vunpack.c.h.b16 %v483
    %v2505 = vunpack.c.l.b16 %v484
    %v2506 = vunpack.c.h.b16 %v484
    %v2507 = vunpack.c.l.b16 %v485
    %v2508 = vunpack.c.h.b16 %v485
    %v2509 = vunpack.c.l.b16 %v486
    %v2510 = vunpack.c.h.b16 %v486
    %v2511 = vunpack.c.l.b16 %v487
    %v2512 = vunpack.c.h.b16 %v487
    %v2513 = vunpack.c.l.b16 %v488
    %v2514 = vunpack.c.h.b16 %v488
    %v2515 = vunpack.c.l.b16 %v489
    %v2516 = vunpack.c.h.b16 %v489
    %v2517 = vunpack.c.l.b16 %v490
    %v2518 = vunpack.c.h.b16 %v490
    %v2519 = vunpack.c.l.b16 %v491
    %v2520 = vunpack.c.h.b16 %v491
    %v2521 = vunpack.c.l.b16 %v492
    %v2522 = vunpack.c.h.b16 %v492
    %v2523 = vunpack.c.l.b16 %v493
    %v2524 = vunpack.c.h.b16 %v493
    %v2525 = vunpack.c.l.b16 %v494
    %v2526 = vunpack.c.h.b16 %v494
    %v2527 = vunpack.c.l.b16 %v495
    %v2528 = vunpack.c.h.b16 %v495
    %v2529 = vunpack.c.l.b16 %v496
    %v2530 = vunpack.c.h.b16 %v496
    %v2531 = vunpack.c.l.b16 %v497
    %v2532 = vunpack.c.h.b16 %v497
    %v2533 = vunpack.c.l.b16 %v498
    %v2534 = vunpack.c.h.b16 %v498
    %v2535 = vunpack.c.l.b16 %v499
    %v2536 = vunpack.c.h.b16 %v499
    %v2537 = vunpack.c.l.b16 %v500
    %v2538 = vunpack.c.h.b16 %v500
    %v2539 = vunpack.c.l.b16 %v501
    %v2540 = vunpack.c.h.b16 %v501
    %v2541 = vunpack.c.l.b16 %v502
    %v2542 = vunpack.c.h.b16 %v502
    %v2543 = vunpack.c.l.b16 %v503
    %v2544 = vunpack.c.h.b16 %v503
    %v2545 = vunpack.c.l.b16 %v504
    %v2546 = vunpack.c.h.b16 %v504
    %v2547 = vunpack.c.l.b16 %v505
    %v2548 = vunpack.c.h.b16 %v505
    %v2549 = vunpack.c.l.b16 %v506
    %v2550 = vunpack.c.h.b16 %v506
    %v2551 = vunpack.c.l.b16 %v507
    %v2552 = vunpack.c.h.b16 %v507
    %v2553 = vunpack.c.l.b16 %v508
    %v2554 = vunpack.c.h.b16 %v508
    %v2555 = vunpack.c.l.b16 %v509
    %v2556 = vunpack.c.h.b16 %v509
    %v2557 = vunpack.c.l.b16 %v510
    %v2558 = vunpack.c.h.b16 %v510
    %v2559 = vunpack.c.l.b16 %v511
    %v2560 = vunpack.c.h.b16 %v511
    %v2561 = vunpack.c.l.b16 %v512
    %v2562 = vunpack.c.h.b16 %v512
    %v2563 = vunpack.c.l.b16 %v513
    %v2564 = vunpack.c.h.b16 %v513
    %v2565 = vunpack.c.l.b16 %v514
    %v2566 = vunpack.c.h.b16 %v514
    %v2567 = vunpack.c.l.b16 %v515
    %v2568 = vunpack.c.h.b16 %v515
    %v2569 = vunpack.c.l.b16 %v516
    %v2570 = vunpack.c.h.b16 %v516
    %v2571 = vunpack.c.l.b16 %v517
    %v2572 = vunpack.c.h.b16 %v517
    %v2573 = vunpack.c.l.b16 %v518
    %v2574 = vunpack.c.h.b16 %v518
    %v2575 = vunpack.c.l.b16 %v519
    %v2576 = vunpack.c.h.b16 %v519
    %v2577 = vunpack.c.l.b16 %v520
    %v2578 = vunpack.c.h.b16 %v520
    %v2579 = vunpack.c.l.b16 %v521
    %v2580 = vunpack.c.h.b16 %v521
    %v2581 = vunpack.c.l.b16 %v522
    %v2582 = vunpack.c.h.b16 %v522
    %v2583 = vunpack.c.l.b16 %v523
    %v2584 = vunpack.c.h.b16 %v523
    %v2585 = vunpack.c.l.b16 %v524
    %v2586 = vunpack.c.h.b16 %v524
    %v2587 = vunpack.c.l.b16 %v525
    %v2588 = vunpack.c.h.b16 %v525
    %v2589 = vunpack.c.l.b16 %v526
    %v2590 = vunpack.c.h.b16 %v526
    %v2591 = vunpack.c.l.b16 %v527
    %v2592 = vunpack.c.h.b16 %v527
    %v2593 = vunpack.c.l.b16 %v528
    %v2594 = vunpack.c.h.b16 %v528
    %v2595 = vunpack.c.l.b16 %v529
    %v2596 = vunpack.c.h.b16 %v529
    %v2597 = vunpack.c.l.b16 %v530
    %v2598 = vunpack.c.h.b16 %v530
    %v2599 = vunpack.c.l.b16 %v531
    %v2600 = vunpack.c.h.b16 %v531
    %v2601 = vunpack.c.l.b16 %v532
    %v2602 = vunpack.c.h.b16 %v532
    %v2603 = vunpack.c.l.b16 %v533
    %v2604 = vunpack.c.h.b16 %v533
    %v2605 = vunpack.c.l.b16 %v534
    %v2606 = vunpack.c.h.b16 %v534
    %v2607 = vunpack.c.l.b16 %v535
    %v2608 = vunpack.c.h.b16 %v535
    %v2609 = vunpack.c.l.b16 %v536
    %v2610 = vunpack.c.h.b16 %v536
    %v2611 = vunpack.c.l.b16 %v537
    %v2612 = vunpack.c.h.b16 %v537
    %v2613 = vunpack.c.l.b16 %v538
    %v2614 = vunpack.c.h.b16 %v538
    %v2615 = vunpack.c.l.b16 %v539
    %v2616 = vunpack.c.h.b16 %v539
    %v2617 = vunpack.c.l.b16 %v540
    %v2618 = vunpack.c.h.b16 %v540
    %v2619 = vunpack.c.l.b16 %v541
    %v2620 = vunpack.c.h.b16 %v541
    %v2621 = vunpack.c.l.b16 %v542
    %v2622 = vunpack.c.h.b16 %v542
    %v2623 = vunpack.c.l.b16 %v543
    %v2624 = vunpack.c.h.b16 %v543
    %v2625 = vunpack.c.l.b16 %v544
    %v2626 = vunpack.c.h.b16 %v544
    %v2627 = vunpack.c.l.b16 %v545
    %v2628 = vunpack.c.h.b16 %v545
    %v2629 = vunpack.c.l.b16 %v546
    %v2630 = vunpack.c.h.b16 %v546
    %v2631 = vunpack.c.l.b16 %v547
    %v2632 = vunpack.c.h.b16 %v547
    %v2633 = vunpack.c.l.b16 %v548
    %v2634 = vunpack.c.h.b16 %v548
    %v2635 = vunpack.c.l.b16 %v549
    %v2636 = vunpack.c.h.b16 %v549
    %v2637 = vunpack.c.l.b16 %v550
    %v2638 = vunpack.c.h.b16 %v550
    %v2639 = vunpack.c.l.b16 %v551
    %v2640 = vunpack.c.h.b16 %v551
    %v2641 = vunpack.c.l.b16 %v552
    %v2642 = vunpack.c.h.b16 %v552
    %v2643 = vunpack.c.l.b16 %v553
    %v2644 = vunpack.c.h.b16 %v553
    %v2645 = vunpack.c.l.b16 %v554
    %v2646 = vunpack.c.h.b16 %v554
    %v2647 = vunpack.c.l.b16 %v555
    %v2648 = vunpack.c.h.b16 %v555
    %v2649 = vunpack.c.l.b16 %v556
    %v2650 = vunpack.c.h.b16 %v556
    %v2651 = vunpack.c.l.b16 %v557
    %v2652 = vunpack.c.h.b16 %v557
    %v2653 = vunpack.c.l.b16 %v558
    %v2654 = vunpack.c.h.b16 %v558
    %v2655 = vunpack.c.l.b16 %v559
    %v2656 = vunpack.c.h.b16 %v559
    %v2657 = vunpack.c.l.b16 %v560
    %v2658 = vunpack.c.h.b16 %v560
    %v2659 = vunpack.c.l.b16 %v561
    %v2660 = vunpack.c.h.b16 %v561
    %v2661 = vunpack.c.l.b16 %v562
    %v2662 = vunpack.c.h.b16 %v562
    %v2663 = vunpack.c.l.b16 %v563
    %v2664 = vunpack.c.h.b16 %v563
    %v2665 = vunpack.c.l.b16 %v564
    %v2666 = vunpack.c.h.b16 %v564
    %v2667 = vunpack.c.l.b16 %v565
    %v2668 = vunpack.c.h.b16 %v565
    %v2669 = vunpack.c.l.b16 %v566
    %v2670 = vunpack.c.h.b16 %v566
    %v2671 = vunpack.c.l.b16 %v567
    %v2672 = vunpack.c.h.b16 %v567
    %v2673 = vunpack.c.l.b16 %v568
    %v2674 = vunpack.c.h.b16 %v568
    %v2675 = vunpack.c.l.b16 %v569
    %v2676 = vunpack.c.h.b16 %v569
    %v2677 = vunpack.c.l.b16 %v570
    %v2678 = vunpack.c.h.b16 %v570
    %v2679 = vunpack.c.l.b16 %v571
    %v2680 = vunpack.c.h.b16 %v571
    %v2681 = vunpack.c.l.b16 %v572
    %v2682 = vunpack.c.h.b16 %v572
    %v2683 = vunpack.c.l.b16 %v573
    %v2684 = vunpack.c.h.b16 %v573
    %v2685 = vunpack.c.l.b16 %v574
    %v2686 = vunpack.c.h.b16 %v574
    %v2687 = vunpack.c.l.b16 %v575
    %v2688 = vunpack.c.h.b16 %v575
    %v2689 = vunpack.c.l.b16 %v576
    %v2690 = vunpack.c.h.b16 %v576
    %v2691 = vunpack.c.l.b16 %v577
    %v2692 = vunpack.c.h.b16 %v577
    %v2693 = vunpack.c.l.b16 %v578
    %v2694 = vunpack.c.h.b16 %v578
    %v2695 = vunpack.c.l.b16 %v579
    %v2696 = vunpack.c.h.b16 %v579
    %v2697 = vunpack.c.l.b16 %v580
    %v2698 = vunpack.c.h.b16 %v580
    %v2699 = vunpack.c.l.b16 %v581
    %v2700 = vunpack.c.h.b16 %v581
    %v2701 = vunpack.c.l.b16 %v582
    %v2702 = vunpack.c.h.b16 %v582
    %v2703 = vunpack.c.l.b16 %v583
    %v2704 = vunpack.c.h.b16 %v583
    %v2705 = vunpack.c.l.b16 %v584
    %v2706 = vunpack.c.h.b16 %v584
    %v2707 = vunpack.c.l.b16 %v585
    %v2708 = vunpack.c.h.b16 %v585
    %v2709 = vunpack.c.l.b16 %v586
    %v2710 = vunpack.c.h.b16 %v586
    %v2711 = vunpack.c.l.b16 %v587
    %v2712 = vunpack.c.h.b16 %v587
    %v2713 = vunpack.c.l.b16 %v588
    %v2714 = vunpack.c.h.b16 %v588
    %v2715 = vunpack.c.l.b16 %v589
    %v2716 = vunpack.c.h.b16 %v589
    %v2717 = vunpack.c.l.b16 %v590
    %v2718 = vunpack.c.h.b16 %v590
    %v2719 = vunpack.c.l.b16 %v591
    %v2720 = vunpack.c.h.b16 %v591
    %v2721 = vunpack.c.l.b16 %v592
    %v2722 = vunpack.c.h.b16 %v592
    %v2723 = vunpack.c.l.b16 %v593
    %v2724 = vunpack.c.h.b16 %v593
    %v2725 = vunpack.c.l.b16 %v594
    %v2726 = vunpack.c.h.b16 %v594
    %v2727 = vunpack.c.l.b16 %v595
    %v2728 = vunpack.c.h.b16 %v595
    %v2729 = vunpack.c.l.b16 %v596
    %v2730 = vunpack.c.h.b16 %v596
    %v2731 = vunpack.c.l.b16 %v597
    %v2732 = vunpack.c.h.b16 %v597
    %v2733 = vunpack.c.l.b16 %v598
    %v2734 = vunpack.c.h.b16 %v598
    %v2735 = vunpack.c.l.b16 %v599
    %v2736 = vunpack.c.h.b16 %v599
    %v2737 = vunpack.c.l.b16 %v600
    %v2738 = vunpack.c.h.b16 %v600
    %v2739 = vunpack.c.l.b16 %v601
    %v2740 = vunpack.c.h.b16 %v601
    %v2741 = vunpack.c.l.b16 %v602
    %v2742 = vunpack.c.h.b16 %v602
    %v2743 = vunpack.c.l.b16 %v603
    %v2744 = vunpack.c.h.b16 %v603
    %v2745 = vunpack.c.l.b16 %v604
    %v2746 = vunpack.c.h.b16 %v604
    %v2747 = vunpack.c.l.b16 %v605
    %v2748 = vunpack.c.h.b16 %v605
    %v2749 = vunpack.c.l.b16 %v606
    %v2750 = vunpack.c.h.b16 %v606
    %v2751 = vunpack.c.l.b16 %v607
    %v2752 = vunpack.c.h.b16 %v607
    %v2753 = vunpack.c.l.b16 %v608
    %v2754 = vunpack.c.h.b16 %v608
    %v2755 = vunpack.c.l.b16 %v609
    %v2756 = vunpack.c.h.b16 %v609
    %v2757 = vunpack.c.l.b16 %v610
    %v2758 = vunpack.c.h.b16 %v610
    %v2759 = vunpack.c.l.b16 %v611
    %v2760 = vunpack.c.h.b16 %v611
    %v2761 = vunpack.c.l.b16 %v612
    %v2762 = vunpack.c.h.b16 %v612
    %v2763 = vunpack.c.l.b16 %v613
    %v2764 = vunpack.c.h.b16 %v613
    %v2765 = vunpack.c.l.b16 %v614
    %v2766 = vunpack.c.h.b16 %v614
    %v2767 = vunpack.c.l.b16 %v615
    %v2768 = vunpack.c.h.b16 %v615
    %v2769 = vunpack.c.l.b16 %v616
    %v2770 = vunpack.c.h.b16 %v616
    %v2771 = vunpack.c.l.b16 %v617
    %v2772 = vunpack.c.h.b16 %v617
    %v2773 = vunpack.c.l.b16 %v618
    %v2774 = vunpack.c.h.b16 %v618
    %v2775 = vunpack.c.l.b16 %v619
    %v2776 = vunpack.c.h.b16 %v619
    %v2777 = vunpack.c.l.b16 %v620
    %v2778 = vunpack.c.h.b16 %v620
    %v2779 = vunpack.c.l.b16 %v621
    %v2780 = vunpack.c.h.b16 %v621
    %v2781 = vunpack.c.l.b16 %v622
    %v2782 = vunpack.c.h.b16 %v622
    %v2783 = vunpack.c.l.b16 %v623
    %v2784 = vunpack.c.h.b16 %v623
    %v2785 = vunpack.c.l.b16 %v624
    %v2786 = vunpack.c.h.b16 %v624
    %v2787 = vunpack.c.l.b16 %v625
    %v2788 = vunpack.c.h.b16 %v625
    %v2789 = vunpack.c.l.b16 %v626
    %v2790 = vunpack.c.h.b16 %v626
    %v2791 = vunpack.c.l.b16 %v627
    %v2792 = vunpack.c.h.b16 %v627
    %v2793 = vunpack.c.l.b16 %v628
    %v2794 = vunpack.c.h.b16 %v628
    %v2795 = vunpack.c.l.b16 %v629
    %v2796 = vunpack.c.h.b16 %v629
    %v2797 = vunpack.c.l.b16 %v630
    %v2798 = vunpack.c.h.b16 %v630
    %v2799 = vunpack.c.l.b16 %v631
    %v2800 = vunpack.c.h.b16 %v631
    %v2801 = vunpack.c.l.b16 %v632
    %v2802 = vunpack.c.h.b16 %v632
    %v2803 = vunpack.c.l.b16 %v633
    %v2804 = vunpack.c.h.b16 %v633
    %v2805 = vunpack.c.l.b16 %v634
    %v2806 = vunpack.c.h.b16 %v634
    %v2807 = vunpack.c.l.b16 %v635
    %v2808 = vunpack.c.h.b16 %v635
    %v2809 = vunpack.c.l.b16 %v636
    %v2810 = vunpack.c.h.b16 %v636
    %v2811 = vunpack.c.l.b16 %v637
    %v2812 = vunpack.c.h.b16 %v637
    %v2813 = vunpack.c.l.b16 %v638
    %v2814 = vunpack.c.h.b16 %v638
    %v2815 = vunpack.c.l.b16 %v639
    %v2816 = vunpack.c.h.b16 %v639
    %v2817 = vunpack.c.l.b16 %v640
    %v2818 = vunpack.c.h.b16 %v640
    %v2819 = vunpack.c.l.b16 %v641
    %v2820 = vunpack.c.h.b16 %v641
    %v2821 = vunpack.c.l.b16 %v642
    %v2822 = vunpack.c.h.b16 %v642
    %v2823 = vunpack.c.l.b16 %v643
    %v2824 = vunpack.c.h.b16 %v643
    %v2825 = vunpack.c.l.b16 %v644
    %v2826 = vunpack.c.h.b16 %v644
    %v2827 = vunpack.c.l.b16 %v645
    %v2828 = vunpack.c.h.b16 %v645
    %v2829 = vunpack.c.l.b16 %v646
    %v2830 = vunpack.c.h.b16 %v646
    %v2831 = vunpack.c.l.b16 %v647
    %v2832 = vunpack.c.h.b16 %v647
    %v2833 = vunpack.c.l.b16 %v648
    %v2834 = vunpack.c.h.b16 %v648
    %v2835 = vunpack.c.l.b16 %v649
    %v2836 = vunpack.c.h.b16 %v649
    %v2837 = vunpack.c.l.b16 %v650
    %v2838 = vunpack.c.h.b16 %v650
    %v2839 = vunpack.c.l.b16 %v651
    %v2840 = vunpack.c.h.b16 %v651
    %v2841 = vunpack.c.l.b16 %v652
    %v2842 = vunpack.c.h.b16 %v652
    %v2843 = vunpack.c.l.b16 %v653
    %v2844 = vunpack.c.h.b16 %v653
    %v2845 = vunpack.c.l.b16 %v654
    %v2846 = vunpack.c.h.b16 %v654
    %v2847 = vunpack.c.l.b16 %v655
    %v2848 = vunpack.c.h.b16 %v655
    %v2849 = vunpack.c.l.b16 %v656
    %v2850 = vunpack.c.h.b16 %v656
    %v2851 = vunpack.c.l.b16 %v657
    %v2852 = vunpack.c.h.b16 %v657
    %v2853 = vunpack.c.l.b16 %v658
    %v2854 = vunpack.c.h.b16 %v658
    %v2855 = vunpack.c.l.b16 %v659
    %v2856 = vunpack.c.h.b16 %v659
    %v2857 = vunpack.c.l.b16 %v660
    %v2858 = vunpack.c.h.b16 %v660
    %v2859 = vunpack.c.l.b16 %v661
    %v2860 = vunpack.c.h.b16 %v661
    %v2861 = vunpack.c.l.b16 %v662
    %v2862 = vunpack.c.h.b16 %v662
    %v2863 = vunpack.c.l.b16 %v663
    %v2864 = vunpack.c.h.b16 %v663
    %v2865 = vunpack.c.l.b16 %v664
    %v2866 = vunpack.c.h.b16 %v664
    %v2867 = vunpack.c.l.b16 %v665
    %v2868 = vunpack.c.h.b16 %v665
    %v2869 = vunpack.c.l.b16 %v666
    %v2870 = vunpack.c.h.b16 %v666
    %v2871 = vunpack.c.l.b16 %v667
    %v2872 = vunpack.c.h.b16 %v667
    %v2873 = vunpack.c.l.b16 %v668
    %v2874 = vunpack.c.h.b16 %v668
    %v2875 = vunpack.c.l.b16 %v669
    %v2876 = vunpack.c.h.b16 %v669
    %v2877 = vunpack.c.l.b16 %v670
    %v2878 = vunpack.c.h.b16 %v670
    %v2879 = vunpack.c.l.b16 %v671
    %v2880 = vunpack.c.h.b16 %v671
    %v2881 = vunpack.c.l.b16 %v672
    %v2882 = vunpack.c.h.b16 %v672
    %v2883 = vunpack.c.l.b16 %v673
    %v2884 = vunpack.c.h.b16 %v673
    %v2885 = vunpack.c.l.b16 %v674
    %v2886 = vunpack.c.h.b16 %v674
    %v2887 = vunpack.c.l.b16 %v675
    %v2888 = vunpack.c.h.b16 %v675
    %v2889 = vunpack.c.l.b16 %v676
    %v2890 = vunpack.c.h.b16 %v676
    %v2891 = vunpack.c.l.b16 %v677
    %v2892 = vunpack.c.h.b16 %v677
    %v2893 = vunpack.c.l.b16 %v678
    %v2894 = vunpack.c.h.b16 %v678
    %v2895 = vunpack.c.l.b16 %v679
    %v2896 = vunpack.c.h.b16 %v679
    %v2897 = vunpack.c.l.b16 %v680
    %v2898 = vunpack.c.h.b16 %v680
    %v2899 = vunpack.c.l.b16 %v681
    %v2900 = vunpack.c.h.b16 %v681
    %v2901 = vunpack.c.l.b16 %v682
    %v2902 = vunpack.c.h.b16 %v682
    %v2903 = vunpack.c.l.b16 %v683
    %v2904 = vunpack.c.h.b16 %v683
    %v2905 = vunpack.c.l.b16 %v684
    %v2906 = vunpack.c.h.b16 %v684
    %v2907 = vunpack.c.l.b16 %v685
    %v2908 = vunpack.c.h.b16 %v685
    %v2909 = vunpack.c.l.b16 %v686
    %v2910 = vunpack.c.h.b16 %v686
    %v2911 = vunpack.c.l.b16 %v687
    %v2912 = vunpack.c.h.b16 %v687
    %v2913 = vunpack.c.l.b16 %v688
    %v2914 = vunpack.c.h.b16 %v688
    %v2915 = vunpack.c.l.b16 %v689
    %v2916 = vunpack.c.h.b16 %v689
    %v2917 = vunpack.c.l.b16 %v690
    %v2918 = vunpack.c.h.b16 %v690
    %v2919 = vunpack.c.l.b16 %v691
    %v2920 = vunpack.c.h.b16 %v691
    %v2921 = vunpack.c.l.b16 %v692
    %v2922 = vunpack.c.h.b16 %v692
    %v2923 = vunpack.c.l.b16 %v693
    %v2924 = vunpack.c.h.b16 %v693
    %v2925 = vunpack.c.l.b16 %v694
    %v2926 = vunpack.c.h.b16 %v694
    %v2927 = vunpack.c.l.b16 %v695
    %v2928 = vunpack.c.h.b16 %v695
    %v2929 = vunpack.c.l.b16 %v696
    %v2930 = vunpack.c.h.b16 %v696
    %v2931 = vunpack.c.l.b16 %v697
    %v2932 = vunpack.c.h.b16 %v697
    %v2933 = vunpack.c.l.b16 %v698
    %v2934 = vunpack.c.h.b16 %v698
    %v2935 = vunpack.c.l.b16 %v699
    %v2936 = vunpack.c.h.b16 %v699
    %v2937 = vunpack.c.l.b16 %v700
    %v2938 = vunpack.c.h.b16 %v700
    %v2939 = vunpack.c.l.b16 %v701
    %v2940 = vunpack.c.h.b16 %v701
    %v2941 = vunpack.c.l.b16 %v702
    %v2942 = vunpack.c.h.b16 %v702
    %v2943 = vunpack.c.l.b16 %v703
    %v2944 = vunpack.c.h.b16 %v703
    %v2945 = vunpack.c.l.b16 %v704
    %v2946 = vunpack.c.h.b16 %v704
    %v2947 = vunpack.c.l.b16 %v705
    %v2948 = vunpack.c.h.b16 %v705
    %v2949 = vunpack.c.l.b16 %v706
    %v2950 = vunpack.c.h.b16 %v706
    %v2951 = vunpack.c.l.b16 %v707
    %v2952 = vunpack.c.h.b16 %v707
    %v2953 = vunpack.c.l.b16 %v708
    %v2954 = vunpack.c.h.b16 %v708
    %v2955 = vunpack.c.l.b16 %v709
    %v2956 = vunpack.c.h.b16 %v709
    %v2957 = vunpack.c.l.b16 %v710
    %v2958 = vunpack.c.h.b16 %v710
    %v2959 = vunpack.c.l.b16 %v711
    %v2960 = vunpack.c.h.b16 %v711
    %v2961 = vunpack.c.l.b16 %v712
    %v2962 = vunpack.c.h.b16 %v712
    %v2963 = vunpack.c.l.b16 %v713
    %v2964 = vunpack.c.h.b16 %v713
    %v2965 = vunpack.c.l.b16 %v714
    %v2966 = vunpack.c.h.b16 %v714
    %v2967 = vunpack.c.l.b16 %v715
    %v2968 = vunpack.c.h.b16 %v715
    %v2969 = vunpack.c.l.b16 %v716
    %v2970 = vunpack.c.h.b16 %v716
    %v2971 = vunpack.c.l.b16 %v717
    %v2972 = vunpack.c.h.b16 %v717
    %v2973 = vunpack.c.l.b16 %v718
    %v2974 = vunpack.c.h.b16 %v718
    %v2975 = vunpack.c.l.b16 %v719
    %v2976 = vunpack.c.h.b16 %v719
    %v2977 = vunpack.c.l.b16 %v720
    %v2978 = vunpack.c.h.b16 %v720
    %v2979 = vunpack.c.l.b16 %v721
    %v2980 = vunpack.c.h.b16 %v721
    %v2981 = vunpack.c.l.b16 %v722
    %v2982 = vunpack.c.h.b16 %v722
    %v2983 = vunpack.c.l.b16 %v723
    %v2984 = vunpack.c.h.b16 %v723
    %v2985 = vunpack.c.l.b16 %v724
    %v2986 = vunpack.c.h.b16 %v724
    %v2987 = vunpack.c.l.b16 %v725
    %v2988 = vunpack.c.h.b16 %v725
    %v2989 = vunpack.c.l.b16 %v726
    %v2990 = vunpack.c.h.b16 %v726
    %v2991 = vunpack.c.l.b16 %v727
    %v2992 = vunpack.c.h.b16 %v727
    %v2993 = vunpack.c.l.b16 %v728
    %v2994 = vunpack.c.h.b16 %v728
    %v2995 = vunpack.c.l.b16 %v729
    %v2996 = vunpack.c.h.b16 %v729
    %v2997 = vunpack.c.l.b16 %v730
    %v2998 = vunpack.c.h.b16 %v730
    %v2999 = vunpack.c.l.b16 %v731
    %v3000 = vunpack.c.h.b16 %v731
    %v3001 = vunpack.c.l.b16 %v732
    %v3002 = vunpack.c.h.b16 %v732
    %v3003 = vunpack.c.l.b16 %v733
    %v3004 = vunpack.c.h.b16 %v733
    %v3005 = vunpack.c.l.b16 %v734
    %v3006 = vunpack.c.h.b16 %v734
    %v3007 = vunpack.c.l.b16 %v735
    %v3008 = vunpack.c.h.b16 %v735
    %v3009 = vunpack.c.l.b16 %v736
    %v3010 = vunpack.c.h.b16 %v736
    %v3011 = vunpack.c.l.b16 %v737
    %v3012 = vunpack.c.h.b16 %v737
    %v3013 = vunpack.c.l.b16 %v738
    %v3014 = vunpack.c.h.b16 %v738
    %v3015 = vunpack.c.l.b16 %v739
    %v3016 = vunpack.c.h.b16 %v739
    %v3017 = vunpack.c.l.b16 %v740
    %v3018 = vunpack.c.h.b16 %v740
    %v3019 = vunpack.c.l.b16 %v741
    %v3020 = vunpack.c.h.b16 %v741
    %v3021 = vunpack.c.l.b16 %v742
    %v3022 = vunpack.c.h.b16 %v742
    %v3023 = vunpack.c.l.b16 %v743
    %v3024 = vunpack.c.h.b16 %v743
    %v3025 = vunpack.c.l.b16 %v744
    %v3026 = vunpack.c.h.b16 %v744
    %v3027 = vunpack.c.l.b16 %v745
    %v3028 = vunpack.c.h.b16 %v745
    %v3029 = vunpack.c.l.b16 %v746
    %v3030 = vunpack.c.h.b16 %v746
    %v3031 = vunpack.c.l.b16 %v747
    %v3032 = vunpack.c.h.b16 %v747
    %v3033 = vunpack.c.l.b16 %v748
    %v3034 = vunpack.c.h.b16 %v748
    %v3035 = vunpack.c.l.b16 %v749
    %v3036 = vunpack.c.h.b16 %v749
    %v3037 = vunpack.c.l.b16 %v750
    %v3038 = vunpack.c.h.b16 %v750
    %v3039 = vunpack.c.l.b16 %v751
    %v3040 = vunpack.c.h.b16 %v751
    %v3041 = vunpack.c.l.b16 %v752
    %v3042 = vunpack.c.h.b16 %v752
    %v3043 = vunpack.c.l.b16 %v753
    %v3044 = vunpack.c.h.b16 %v753
    %v3045 = vunpack.c.l.b16 %v754
    %v3046 = vunpack.c.h.b16 %v754
    %v3047 = vunpack.c.l.b16 %v755
    %v3048 = vunpack.c.h.b16 %v755
    %v3049 = vunpack.c.l.b16 %v756
    %v3050 = vunpack.c.h.b16 %v756
    %v3051 = vunpack.c.l.b16 %v757
    %v3052 = vunpack.c.h.b16 %v757
    %v3053 = vunpack.c.l.b16 %v758
    %v3054 = vunpack.c.h.b16 %v758
    %v3055 = vunpack.c.l.b16 %v759
    %v3056 = vunpack.c.h.b16 %v759
    %v3057 = vunpack.c.l.b16 %v760
    %v3058 = vunpack.c.h.b16 %v760
    %v3059 = vunpack.c.l.b16 %v761
    %v3060 = vunpack.c.h.b16 %v761
    %v3061 = vunpack.c.l.b16 %v762
    %v3062 = vunpack.c.h.b16 %v762
    %v3063 = vunpack.c.l.b16 %v763
    %v3064 = vunpack.c.h.b16 %v763
    %v3065 = vunpack.c.l.b16 %v764
    %v3066 = vunpack.c.h.b16 %v764
    %v3067 = vunpack.c.l.b16 %v765
    %v3068 = vunpack.c.h.b16 %v765
    %v3069 = vunpack.c.l.b16 %v766
    %v3070 = vunpack.c.h.b16 %v766
    %v3071 = vunpack.c.l.b16 %v767
    %v3072 = vunpack.c.h.b16 %v767
    %v3073 = vunpack.c.l.b16 %v768
    %v3074 = vunpack.c.h.b16 %v768
    %v3075 = vunpack.c.l.b16 %v769
    %v3076 = vunpack.c.h.b16 %v769
    %v3077 = vunpack.c.l.b16 %v770
    %v3078 = vunpack.c.h.b16 %v770
    %v3079 = vunpack.c.l.b16 %v771
    %v3080 = vunpack.c.h.b16 %v771
    %v3081 = vunpack.c.l.b16 %v772
    %v3082 = vunpack.c.h.b16 %v772
    %v3083 = vunpack.c.l.b16 %v773
    %v3084 = vunpack.c.h.b16 %v773
    %v3085 = vunpack.c.l.b16 %v774
    %v3086 = vunpack.c.h.b16 %v774
    %v3087 = vunpack.c.l.b16 %v775
    %v3088 = vunpack.c.h.b16 %v775
    %v3089 = vunpack.c.l.b16 %v776
    %v3090 = vunpack.c.h.b16 %v776
    %v3091 = vunpack.c.l.b16 %v777
    %v3092 = vunpack.c.h.b16 %v777
    %v3093 = vunpack.c.l.b16 %v778
    %v3094 = vunpack.c.h.b16 %v778
    %v3095 = vunpack.c.l.b16 %v779
    %v3096 = vunpack.c.h.b16 %v779
    %v3097 = vunpack.c.l.b16 %v780
    %v3098 = vunpack.c.h.b16 %v780
    %v3099 = vunpack.c.l.b16 %v781
    %v3100 = vunpack.c.h.b16 %v781
    %v3101 = vunpack.c.l.b16 %v782
    %v3102 = vunpack.c.h.b16 %v782
    %v3103 = vunpack.c.l.b16 %v783
    %v3104 = vunpack.c.h.b16 %v783
    %v3105 = vunpack.c.l.b16 %v784
    %v3106 = vunpack.c.h.b16 %v784
    %v3107 = vunpack.c.l.b16 %v785
    %v3108 = vunpack.c.h.b16 %v785
    %v3109 = vunpack.c.l.b16 %v786
    %v3110 = vunpack.c.h.b16 %v786
    %v3111 = vunpack.c.l.b16 %v787
    %v3112 = vunpack.c.h.b16 %v787
    %v3113 = vunpack.c.l.b16 %v788
    %v3114 = vunpack.c.h.b16 %v788
    %v3115 = vunpack.c.l.b16 %v789
    %v3116 = vunpack.c.h.b16 %v789
    %v3117 = vunpack.c.l.b16 %v790
    %v3118 = vunpack.c.h.b16 %v790
    %v3119 = vunpack.c.l.b16 %v791
    %v3120 = vunpack.c.h.b16 %v791
    %v3121 = vunpack.c.l.b16 %v792
    %v3122 = vunpack.c.h.b16 %v792
    %v3123 = vunpack.c.l.b16 %v793
    %v3124 = vunpack.c.h.b16 %v793
    %v3125 = vunpack.c.l.b16 %v794
    %v3126 = vunpack.c.h.b16 %v794
    %v3127 = vunpack.c.l.b16 %v795
    %v3128 = vunpack.c.h.b16 %v795
    %v3129 = vunpack.c.l.b16 %v796
    %v3130 = vunpack.c.h.b16 %v796
    %v3131 = vunpack.c.l.b16 %v797
    %v3132 = vunpack.c.h.b16 %v797
    %v3133 = vunpack.c.l.b16 %v798
    %v3134 = vunpack.c.h.b16 %v798
    %v3135 = vunpack.c.l.b16 %v799
    %v3136 = vunpack.c.h.b16 %v799
    %v3137 = vunpack.c.l.b16 %v800
    %v3138 = vunpack.c.h.b16 %v800
    %v3139 = vunpack.c.l.b16 %v801
    %v3140 = vunpack.c.h.b16 %v801
    %v3141 = vunpack.c.l.b16 %v802
    %v3142 = vunpack.c.h.b16 %v802
    %v3143 = vunpack.c.l.b16 %v803
    %v3144 = vunpack.c.h.b16 %v803
    %v3145 = vunpack.c.l.b16 %v804
    %v3146 = vunpack.c.h.b16 %v804
    %v3147 = vunpack.c.l.b16 %v805
    %v3148 = vunpack.c.h.b16 %v805
    %v3149 = vunpack.c.l.b16 %v806
    %v3150 = vunpack.c.h.b16 %v806
    %v3151 = vunpack.c.l.b16 %v807
    %v3152 = vunpack.c.h.b16 %v807
    %v3153 = vunpack.c.l.b16 %v808
    %v3154 = vunpack.c.h.b16 %v808
    %v3155 = vunpack.c.l.b16 %v809
    %v3156 = vunpack.c.h.b16 %v809
    %v3157 = vunpack.c.l.b16 %v810
    %v3158 = vunpack.c.h.b16 %v810
    %v3159 = vunpack.c.l.b16 %v811
    %v3160 = vunpack.c.h.b16 %v811
    %v3161 = vunpack.c.l.b16 %v812
    %v3162 = vunpack.c.h.b16 %v812
    %v3163 = vunpack.c.l.b16 %v813
    %v3164 = vunpack.c.h.b16 %v813
    %v3165 = vunpack.c.l.b16 %v814
    %v3166 = vunpack.c.h.b16 %v814
    %v3167 = vunpack.c.l.b16 %v815
    %v3168 = vunpack.c.h.b16 %v815
    %v3169 = vunpack.c.l.b16 %v816
    %v3170 = vunpack.c.h.b16 %v816
    %v3171 = vunpack.c.l.b16 %v817
    %v3172 = vunpack.c.h.b16 %v817
    %v3173 = vunpack.c.l.b16 %v818
    %v3174 = vunpack.c.h.b16 %v818
    %v3175 = vunpack.c.l.b16 %v819
    %v3176 = vunpack.c.h.b16 %v819
    %v3177 = vunpack.c.l.b16 %v820
    %v3178 = vunpack.c.h.b16 %v820
    %v3179 = vunpack.c.l.b16 %v821
    %v3180 = vunpack.c.h.b16 %v821
    %v3181 = vunpack.c.l.b16 %v822
    %v3182 = vunpack.c.h.b16 %v822
    %v3183 = vunpack.c.l.b16 %v823
    %v3184 = vunpack.c.h.b16 %v823
    %v3185 = vunpack.c.l.b16 %v824
    %v3186 = vunpack.c.h.b16 %v824
    %v3187 = vunpack.c.l.b16 %v825
    %v3188 = vunpack.c.h.b16 %v825
    %v3189 = vunpack.c.l.b16 %v826
    %v3190 = vunpack.c.h.b16 %v826
    %v3191 = vunpack.c.l.b16 %v827
    %v3192 = vunpack.c.h.b16 %v827
    %v3193 = vunpack.c.l.b16 %v828
    %v3194 = vunpack.c.h.b16 %v828
    %v3195 = vunpack.c.l.b16 %v829
    %v3196 = vunpack.c.h.b16 %v829
    %v3197 = vunpack.c.l.b16 %v830
    %v3198 = vunpack.c.h.b16 %v830
    %v3199 = vunpack.c.l.b16 %v831
    %v3200 = vunpack.c.h.b16 %v831
    %v3201 = vunpack.c.l.b16 %v832
    %v3202 = vunpack.c.h.b16 %v832
    %v3203 = vunpack.c.l.b16 %v833
    %v3204 = vunpack.c.h.b16 %v833
    %v3205 = vunpack.c.l.b16 %v834
    %v3206 = vunpack.c.h.b16 %v834
    %v3207 = vunpack.c.l.b16 %v835
    %v3208 = vunpack.c.h.b16 %v835
    %v3209 = vunpack.c.l.b16 %v836
    %v3210 = vunpack.c.h.b16 %v836
    %v3211 = vunpack.c.l.b16 %v837
    %v3212 = vunpack.c.h.b16 %v837
    %v3213 = vunpack.c.l.b16 %v838
    %v3214 = vunpack.c.h.b16 %v838
    %v3215 = vunpack.c.l.b16 %v839
    %v3216 = vunpack.c.h.b16 %v839
    %v3217 = vunpack.c.l.b16 %v840
    %v3218 = vunpack.c.h.b16 %v840
    %v3219 = vunpack.c.l.b16 %v841
    %v3220 = vunpack.c.h.b16 %v841
    %v3221 = vunpack.c.l.b16 %v842
    %v3222 = vunpack.c.h.b16 %v842
    %v3223 = vunpack.c.l.b16 %v843
    %v3224 = vunpack.c.h.b16 %v843
    %v3225 = vunpack.c.l.b16 %v844
    %v3226 = vunpack.c.h.b16 %v844
    %v3227 = vunpack.c.l.b16 %v845
    %v3228 = vunpack.c.h.b16 %v845
    %v3229 = vunpack.c.l.b16 %v846
    %v3230 = vunpack.c.h.b16 %v846
    %v3231 = vunpack.c.l.b16 %v847
    %v3232 = vunpack.c.h.b16 %v847
    %v3233 = vunpack.c.l.b16 %v848
    %v3234 = vunpack.c.h.b16 %v848
    %v3235 = vunpack.c.l.b16 %v849
    %v3236 = vunpack.c.h.b16 %v849
    %v3237 = vunpack.c.l.b16 %v850
    %v3238 = vunpack.c.h.b16 %v850
    %v3239 = vunpack.c.l.b16 %v851
    %v3240 = vunpack.c.h.b16 %v851
    %v3241 = vunpack.c.l.b16 %v852
    %v3242 = vunpack.c.h.b16 %v852
    %v3243 = vunpack.c.l.b16 %v853
    %v3244 = vunpack.c.h.b16 %v853
    %v3245 = vunpack.c.l.b16 %v854
    %v3246 = vunpack.c.h.b16 %v854
    %v3247 = vunpack.c.l.b16 %v855
    %v3248 = vunpack.c.h.b16 %v855
    %v3249 = vunpack.c.l.b16 %v856
    %v3250 = vunpack.c.h.b16 %v856
    %v3251 = vunpack.c.l.b16 %v857
    %v3252 = vunpack.c.h.b16 %v857
    %v3253 = vunpack.c.l.b16 %v858
    %v3254 = vunpack.c.h.b16 %v858
    %v3255 = vunpack.c.l.b16 %v859
    %v3256 = vunpack.c.h.b16 %v859
    %v3257 = vunpack.c.l.b16 %v860
    %v3258 = vunpack.c.h.b16 %v860
    %v3259 = vunpack.c.l.b16 %v861
    %v3260 = vunpack.c.h.b16 %v861
    %v3261 = vunpack.c.l.b16 %v862
    %v3262 = vunpack.c.h.b16 %v862
    %v3263 = vunpack.c.l.b16 %v863
    %v3264 = vunpack.c.h.b16 %v863
    %v3265 = vunpack.c.l.b16 %v864
    %v3266 = vunpack.c.h.b16 %v864
    %v3267 = vunpack.c.l.b16 %v865
    %v3268 = vunpack.c.h.b16 %v865
    %v3269 = vunpack.c.l.b16 %v866
    %v3270 = vunpack.c.h.b16 %v866
    %v3271 = vunpack.c.l.b16 %v867
    %v3272 = vunpack.c.h.b16 %v867
    %v3273 = vunpack.c.l.b16 %v868
    %v3274 = vunpack.c.h.b16 %v868
    %v3275 = vunpack.c.l.b16 %v869
    %v3276 = vunpack.c.h.b16 %v869
    %v3277 = vunpack.c.l.b16 %v870
    %v3278 = vunpack.c.h.b16 %v870
    %v3279 = vunpack.c.l.b16 %v871
    %v3280 = vunpack.c.h.b16 %v871
    %v3281 = vunpack.c.l.b16 %v872
    %v3282 = vunpack.c.h.b16 %v872
    %v3283 = vunpack.c.l.b16 %v873
    %v3284 = vunpack.c.h.b16 %v873
    %v3285 = vunpack.c.l.b16 %v874
    %v3286 = vunpack.c.h.b16 %v874
    %v3287 = vunpack.c.l.b16 %v875
    %v3288 = vunpack.c.h.b16 %v875
    %v3289 = vunpack.c.l.b16 %v876
    %v3290 = vunpack.c.h.b16 %v876
    %v3291 = vunpack.c.l.b16 %v877
    %v3292 = vunpack.c.h.b16 %v877
    %v3293 = vunpack.c.l.b16 %v878
    %v3294 = vunpack.c.h.b16 %v878
    %v3295 = vunpack.c.l.b16 %v879
    %v3296 = vunpack.c.h.b16 %v879
    %v3297 = vunpack.c.l.b16 %v880
    %v3298 = vunpack.c.h.b16 %v880
    %v3299 = vunpack.c.l.b16 %v881
    %v3300 = vunpack.c.h.b16 %v881
    %v3301 = vunpack.c.l.b16 %v882
    %v3302 = vunpack.c.h.b16 %v882
    %v3303 = vunpack.c.l.b16 %v883
    %v3304 = vunpack.c.h.b16 %v883
    %v3305 = vunpack.c.l.b16 %v884
    %v3306 = vunpack.c.h.b16 %v884
    %v3307 = vunpack.c.l.b16 %v885
    %v3308 = vunpack.c.h.b16 %v885
    %v3309 = vunpack.c.l.b16 %v886
    %v3310 = vunpack.c.h.b16 %v886
    %v3311 = vunpack.c.l.b16 %v887
    %v3312 = vunpack.c.h.b16 %v887
    %v3313 = vunpack.c.l.b16 %v888
    %v3314 = vunpack.c.h.b16 %v888
    %v3315 = vunpack.c.l.b16 %v889
    %v3316 = vunpack.c.h.b16 %v889
    %v3317 = vunpack.c.l.b16 %v890
    %v3318 = vunpack.c.h.b16 %v890
    %v3319 = vunpack.c.l.b16 %v891
    %v3320 = vunpack.c.h.b16 %v891
    %v3321 = vunpack.c.l.b16 %v892
    %v3322 = vunpack.c.h.b16 %v892
    %v3323 = vunpack.c.l.b16 %v893
    %v3324 = vunpack.c.h.b16 %v893
    %v3325 = vunpack.c.l.b16 %v894
    %v3326 = vunpack.c.h.b16 %v894
    %v3327 = vunpack.c.l.b16 %v895
    %v3328 = vunpack.c.h.b16 %v895
    %v3329 = vunpack.c.l.b16 %v896
    %v3330 = vunpack.c.h.b16 %v896
    %v3331 = vunpack.c.l.b16 %v897
    %v3332 = vunpack.c.h.b16 %v897
    %v3333 = vunpack.c.l.b16 %v898
    %v3334 = vunpack.c.h.b16 %v898
    %v3335 = vunpack.c.l.b16 %v899
    %v3336 = vunpack.c.h.b16 %v899
    %v3337 = vunpack.c.l.b16 %v900
    %v3338 = vunpack.c.h.b16 %v900
    %v3339 = vunpack.c.l.b16 %v901
    %v3340 = vunpack.c.h.b16 %v901
    %v3341 = vunpack.c.l.b16 %v902
    %v3342 = vunpack.c.h.b16 %v902
    %v3343 = vunpack.c.l.b16 %v903
    %v3344 = vunpack.c.h.b16 %v903
    %v3345 = vunpack.c.l.b16 %v904
    %v3346 = vunpack.c.h.b16 %v904
    %v3347 = vunpack.c.l.b16 %v905
    %v3348 = vunpack.c.h.b16 %v905
    %v3349 = vunpack.c.l.b16 %v906
    %v3350 = vunpack.c.h.b16 %v906
    %v3351 = vunpack.c.l.b16 %v907
    %v3352 = vunpack.c.h.b16 %v907
    %v3353 = vunpack.c.l.b16 %v908
    %v3354 = vunpack.c.h.b16 %v908
    %v3355 = vpack.c.b16 %v1823, %v1819
    %v3356 = vpack.c.b16 %v1824, %v1820
    %v3357 = vpack.c.b16 %v1825, %v1821
    %v3358 = vpack.c.b16 %v1826, %v1822
    %v3359 = vpack.c.b16 %v1831, %v1827
    %v3360 = vpack.c.b16 %v1832, %v1828
    %v3361 = vpack.c.b16 %v1833, %v1829
    %v3362 = vpack.c.b16 %v1834, %v1830
    %v3363 = vpack.c.b16 %v1839, %v1835
    %v3364 = vpack.c.b16 %v1840, %v1836
    %v3365 = vpack.c.b16 %v1841, %v1837
    %v3366 = vpack.c.b16 %v1842, %v1838
    %v3367 = vpack.c.b16 %v1847, %v1843
    %v3368 = vpack.c.b16 %v1848, %v1844
    %v3369 = vpack.c.b16 %v1849, %v1845
    %v3370 = vpack.c.b16 %v1850, %v1846
    %v3371 = vpack.c.b16 %v1855, %v1851
    %v3372 = vpack.c.b16 %v1856, %v1852
    %v3373 = vpack.c.b16 %v1857, %v1853
    %v3374 = vpack.c.b16 %v1858, %v1854
    %v3375 = vpack.c.b16 %v1863, %v1859
    %v3376 = vpack.c.b16 %v1864, %v1860
    %v3377 = vpack.c.b16 %v1865, %v1861
    %v3378 = vpack.c.b16 %v1866, %v1862
    %v3379 = vpack.c.b16 %v1871, %v1867
    %v3380 = vpack.c.b16 %v1872, %v1868
    %v3381 = vpack.c.b16 %v1873, %v1869
    %v3382 = vpack.c.b16 %v1874, %v1870
    %v3383 = vpack.c.b16 %v1879, %v1875
    %v3384 = vpack.c.b16 %v1880, %v1876
    %v3385 = vpack.c.b16 %v1881, %v1877
    %v3386 = vpack.c.b16 %v1882, %v1878
    %v3387 = vpack.c.b16 %v1887, %v1883
    %v3388 = vpack.c.b16 %v1888, %v1884
    %v3389 = vpack.c.b16 %v1889, %v1885
    %v3390 = vpack.c.b16 %v1890, %v1886
    %v3391 = vpack.c.b16 %v1895, %v1891
    %v3392 = vpack.c.b16 %v1896, %v1892
    %v3393 = vpack.c.b16 %v1897, %v1893
    %v3394 = vpack.c.b16 %v1898, %v1894
    %v3395 = vpack.c.b16 %v1903, %v1899
    %v3396 = vpack.c.b16 %v1904, %v1900
    %v3397 = vpack.c.b16 %v1905, %v1901
    %v3398 = vpack.c.b16 %v1906, %v1902
    %v3399 = vpack.c.b16 %v1911, %v1907
    %v3400 = vpack.c.b16 %v1912, %v1908
    %v3401 = vpack.c.b16 %v1913, %v1909
    %v3402 = vpack.c.b16 %v1914, %v1910
    %v3403 = vpack.c.b16 %v1919, %v1915
    %v3404 = vpack.c.b16 %v1920, %v1916
    %v3405 = vpack.c.b16 %v1921, %v1917
    %v3406 = vpack.c.b16 %v1922, %v1918
    %v3407 = vpack.c.b16 %v1927, %v1923
    %v3408 = vpack.c.b16 %v1928, %v1924
    %v3409 = vpack.c.b16 %v1929, %v1925
    %v3410 = vpack.c.b16 %v1930, %v1926
    %v3411 = vpack.c.b16 %v1935, %v1931
    %v3412 = vpack.c.b16 %v1936, %v1932
    %v3413 = vpack.c.b16 %v1937, %v1933
    %v3414 = vpack.c.b16 %v1938, %v1934
    %v3415 = vpack.c.b16 %v1943, %v1939
    %v3416 = vpack.c.b16 %v1944, %v1940
    %v3417 = vpack.c.b16 %v1945, %v1941
    %v3418 = vpack.c.b16 %v1946, %v1942
    %v3419 = vpack.c.b16 %v1951, %v1947
    %v3420 = vpack.c.b16 %v1952, %v1948
    %v3421 = vpack.c.b16 %v1953, %v1949
    %v3422 = vpack.c.b16 %v1954, %v1950
    %v3423 = vpack.c.b16 %v1959, %v1955
    %v3424 = vpack.c.b16 %v1960, %v1956
    %v3425 = vpack.c.b16 %v1961, %v1957
    %v3426 = vpack.c.b16 %v1962, %v1958
    %v3427 = vpack.c.b16 %v1967, %v1963
    %v3428 = vpack.c.b16 %v1968, %v1964
    %v3429 = vpack.c.b16 %v1969, %v1965
    %v3430 = vpack.c.b16 %v1970, %v1966
    %v3431 = vpack.c.b16 %v1975, %v1971
    %v3432 = vpack.c.b16 %v1976, %v1972
    %v3433 = vpack.c.b16 %v1977, %v1973
    %v3434 = vpack.c.b16 %v1978, %v1974
    %v3435 = vpack.c.b16 %v1983, %v1979
    %v3436 = vpack.c.b16 %v1984, %v1980
    %v3437 = vpack.c.b16 %v1985, %v1981
    %v3438 = vpack.c.b16 %v1986, %v1982
    %v3439 = vpack.c.b16 %v1991, %v1987
    %v3440 = vpack.c.b16 %v1992, %v1988
    %v3441 = vpack.c.b16 %v1993, %v1989
    %v3442 = vpack.c.b16 %v1994, %v1990
    %v3443 = vpack.c.b16 %v1999, %v1995
    %v3444 = vpack.c.b16 %v2000, %v1996
    %v3445 = vpack.c.b16 %v2001, %v1997
    %v3446 = vpack.c.b16 %v2002, %v1998
    %v3447 = vpack.c.b16 %v2007, %v2003
    %v3448 = vpack.c.b16 %v2008, %v2004
    %v3449 = vpack.c.b16 %v2009, %v2005
    %v3450 = vpack.c.b16 %v2010, %v2006
    %v3451 = vpack.c.b16 %v2015, %v2011
    %v3452 = vpack.c.b16 %v2016, %v2012
    %v3453 = vpack.c.b16 %v2017, %v2013
    %v3454 = vpack.c.b16 %v2018, %v2014
    %v3455 = vpack.c.b16 %v2023, %v2019
    %v3456 = vpack.c.b16 %v2024, %v2020
    %v3457 = vpack.c.b16 %v2025, %v2021
    %v3458 = vpack.c.b16 %v2026, %v2022
    %v3459 = vpack.c.b16 %v2031, %v2027
    %v3460 = vpack.c.b16 %v2032, %v2028
    %v3461 = vpack.c.b16 %v2033, %v2029
    %v3462 = vpack.c.b16 %v2034, %v2030
    %v3463 = vpack.c.b16 %v2039, %v2035
    %v3464 = vpack.c.b16 %v2040, %v2036
    %v3465 = vpack.c.b16 %v2041, %v2037
    %v3466 = vpack.c.b16 %v2042, %v2038
    %v3467 = vpack.c.b16 %v2047, %v2043
    %v3468 = vpack.c.b16 %v2048, %v2044
    %v3469 = vpack.c.b16 %v2049, %v2045
    %v3470 = vpack.c.b16 %v2050, %v2046
    %v3471 = vpack.c.b16 %v2055, %v2051
    %v3472 = vpack.c.b16 %v2056, %v2052
    %v3473 = vpack.c.b16 %v2057, %v2053
    %v3474 = vpack.c.b16 %v2058, %v2054
    %v3475 = vpack.c.b16 %v2063, %v2059
    %v3476 = vpack.c.b16 %v2064, %v2060
    %v3477 = vpack.c.b16 %v2065, %v2061
    %v3478 = vpack.c.b16 %v2066, %v2062
    %v3479 = vpack.c.b16 %v2071, %v2067
    %v3480 = vpack.c.b16 %v2072, %v2068
    %v3481 = vpack.c.b16 %v2073, %v2069
    %v3482 = vpack.c.b16 %v2074, %v2070
    %v3483 = vpack.c.b16 %v2079, %v2075
    %v3484 = vpack.c.b16 %v2080, %v2076
    %v3485 = vpack.c.b16 %v2081, %v2077
    %v3486 = vpack.c.b16 %v2082, %v2078
    %v3487 = vpack.c.b16 %v2087, %v2083
    %v3488 = vpack.c.b16 %v2088, %v2084
    %v3489 = vpack.c.b16 %v2089, %v2085
    %v3490 = vpack.c.b16 %v2090, %v2086
    %v3491 = vpack.c.b16 %v2095, %v2091
    %v3492 = vpack.c.b16 %v2096, %v2092
    %v3493 = vpack.c.b16 %v2097, %v2093
    %v3494 = vpack.c.b16 %v2098, %v2094
    %v3495 = vpack.c.b16 %v2103, %v2099
    %v3496 = vpack.c.b16 %v2104, %v2100
    %v3497 = vpack.c.b16 %v2105, %v2101
    %v3498 = vpack.c.b16 %v2106, %v2102
    %v3499 = vpack.c.b16 %v2111, %v2107
    %v3500 = vpack.c.b16 %v2112, %v2108
    %v3501 = vpack.c.b16 %v2113, %v2109
    %v3502 = vpack.c.b16 %v2114, %v2110
    %v3503 = vpack.c.b16 %v2119, %v2115
    %v3504 = vpack.c.b16 %v2120, %v2116
    %v3505 = vpack.c.b16 %v2121, %v2117
    %v3506 = vpack.c.b16 %v2122, %v2118
    %v3507 = vpack.c.b16 %v2127, %v2123
    %v3508 = vpack.c.b16 %v2128, %v2124
    %v3509 = vpack.c.b16 %v2129, %v2125
    %v3510 = vpack.c.b16 %v2130, %v2126
    %v3511 = vpack.c.b16 %v2135, %v2131
    %v3512 = vpack.c.b16 %v2136, %v2132
    %v3513 = vpack.c.b16 %v2137, %v2133
    %v3514 = vpack.c.b16 %v2138, %v2134
    %v3515 = vpack.c.b16 %v2143, %v2139
    %v3516 = vpack.c.b16 %v2144, %v2140
    %v3517 = vpack.c.b16 %v2145, %v2141
    %v3518 = vpack.c.b16 %v2146, %v2142
    %v3519 = vpack.c.b16 %v2151, %v2147
    %v3520 = vpack.c.b16 %v2152, %v2148
    %v3521 = vpack.c.b16 %v2153, %v2149
    %v3522 = vpack.c.b16 %v2154, %v2150
    %v3523 = vpack.c.b16 %v2159, %v2155
    %v3524 = vpack.c.b16 %v2160, %v2156
    %v3525 = vpack.c.b16 %v2161, %v2157
    %v3526 = vpack.c.b16 %v2162, %v2158
    %v3527 = vpack.c.b16 %v2167, %v2163
    %v3528 = vpack.c.b16 %v2168, %v2164
    %v3529 = vpack.c.b16 %v2169, %v2165
    %v3530 = vpack.c.b16 %v2170, %v2166
    %v3531 = vpack.c.b16 %v2175, %v2171
    %v3532 = vpack.c.b16 %v2176, %v2172
    %v3533 = vpack.c.b16 %v2177, %v2173
    %v3534 = vpack.c.b16 %v2178, %v2174
    %v3535 = vpack.c.b16 %v2183, %v2179
    %v3536 = vpack.c.b16 %v2184, %v2180
    %v3537 = vpack.c.b16 %v2185, %v2181
    %v3538 = vpack.c.b16 %v2186, %v2182
    %v3539 = vpack.c.b16 %v2191, %v2187
    %v3540 = vpack.c.b16 %v2192, %v2188
    %v3541 = vpack.c.b16 %v2193, %v2189
    %v3542 = vpack.c.b16 %v2194, %v2190
    %v3543 = vpack.c.b16 %v2199, %v2195
    %v3544 = vpack.c.b16 %v2200, %v2196
    %v3545 = vpack.c.b16 %v2201, %v2197
    %v3546 = vpack.c.b16 %v2202, %v2198
    %v3547 = vpack.c.b16 %v2207, %v2203
    %v3548 = vpack.c.b16 %v2208, %v2204
    %v3549 = vpack.c.b16 %v2209, %v2205
    %v3550 = vpack.c.b16 %v2210, %v2206
    %v3551 = vpack.c.b16 %v2215, %v2211
    %v3552 = vpack.c.b16 %v2216, %v2212
    %v3553 = vpack.c.b16 %v2217, %v2213
    %v3554 = vpack.c.b16 %v2218, %v2214
    %v3555 = vpack.c.b16 %v2223, %v2219
    %v3556 = vpack.c.b16 %v2224, %v2220
    %v3557 = vpack.c.b16 %v2225, %v2221
    %v3558 = vpack.c.b16 %v2226, %v2222
    %v3559 = vpack.c.b16 %v2231, %v2227
    %v3560 = vpack.c.b16 %v2232, %v2228
    %v3561 = vpack.c.b16 %v2233, %v2229
    %v3562 = vpack.c.b16 %v2234, %v2230
    %v3563 = vpack.c.b16 %v2239, %v2235
    %v3564 = vpack.c.b16 %v2240, %v2236
    %v3565 = vpack.c.b16 %v2241, %v2237
    %v3566 = vpack.c.b16 %v2242, %v2238
    %v3567 = vpack.c.b16 %v2247, %v2243
    %v3568 = vpack.c.b16 %v2248, %v2244
    %v3569 = vpack.c.b16 %v2249, %v2245
    %v3570 = vpack.c.b16 %v2250, %v2246
    %v3571 = vpack.c.b16 %v2255, %v2251
    %v3572 = vpack.c.b16 %v2256, %v2252
    %v3573 = vpack.c.b16 %v2257, %v2253
    %v3574 = vpack.c.b16 %v2258, %v2254
    %v3575 = vpack.c.b16 %v2263, %v2259
    %v3576 = vpack.c.b16 %v2264, %v2260
    %v3577 = vpack.c.b16 %v2265, %v2261
    %v3578 = vpack.c.b16 %v2266, %v2262
    %v3579 = vpack.c.b16 %v2271, %v2267
    %v3580 = vpack.c.b16 %v2272, %v2268
    %v3581 = vpack.c.b16 %v2273, %v2269
    %v3582 = vpack.c.b16 %v2274, %v2270
    %v3583 = vpack.c.b16 %v2279, %v2275
    %v3584 = vpack.c.b16 %v2280, %v2276
    %v3585 = vpack.c.b16 %v2281, %v2277
    %v3586 = vpack.c.b16 %v2282, %v2278
    %v3587 = vpack.c.b16 %v2287, %v2283
    %v3588 = vpack.c.b16 %v2288, %v2284
    %v3589 = vpack.c.b16 %v2289, %v2285
    %v3590 = vpack.c.b16 %v2290, %v2286
    %v3591 = vpack.c.b16 %v2295, %v2291
    %v3592 = vpack.c.b16 %v2296, %v2292
    %v3593 = vpack.c.b16 %v2297, %v2293
    %v3594 = vpack.c.b16 %v2298, %v2294
    %v3595 = vpack.c.b16 %v2303, %v2299
    %v3596 = vpack.c.b16 %v2304, %v2300
    %v3597 = vpack.c.b16 %v2305, %v2301
    %v3598 = vpack.c.b16 %v2306, %v2302
    %v3599 = vpack.c.b16 %v2311, %v2307
    %v3600 = vpack.c.b16 %v2312, %v2308
    %v3601 = vpack.c.b16 %v2313, %v2309
    %v3602 = vpack.c.b16 %v2314, %v2310
    %v3603 = vpack.c.b16 %v2319, %v2315
    %v3604 = vpack.c.b16 %v2320, %v2316
    %v3605 = vpack.c.b16 %v2321, %v2317
    %v3606 = vpack.c.b16 %v2322, %v2318
    %v3607 = vpack.c.b16 %v2327, %v2323
    %v3608 = vpack.c.b16 %v2328, %v2324
    %v3609 = vpack.c.b16 %v2329, %v2325
    %v3610 = vpack.c.b16 %v2330, %v2326
    %v3611 = vpack.c.b16 %v2335, %v2331
    %v3612 = vpack.c.b16 %v2336, %v2332
    %v3613 = vpack.c.b16 %v2337, %v2333
    %v3614 = vpack.c.b16 %v2338, %v2334
    %v3615 = vpack.c.b16 %v2343, %v2339
    %v3616 = vpack.c.b16 %v2344, %v2340
    %v3617 = vpack.c.b16 %v2345, %v2341
    %v3618 = vpack.c.b16 %v2346, %v2342
    %v3619 = vpack.c.b16 %v2351, %v2347
    %v3620 = vpack.c.b16 %v2352, %v2348
    %v3621 = vpack.c.b16 %v2353, %v2349
    %v3622 = vpack.c.b16 %v2354, %v2350
    %v3623 = vpack.c.b16 %v2359, %v2355
    %v3624 = vpack.c.b16 %v2360, %v2356
    %v3625 = vpack.c.b16 %v2361, %v2357
    %v3626 = vpack.c.b16 %v2362, %v2358
    %v3627 = vpack.c.b16 %v2367, %v2363
    %v3628 = vpack.c.b16 %v2368, %v2364
    %v3629 = vpack.c.b16 %v2369, %v2365
    %v3630 = vpack.c.b16 %v2370, %v2366
    %v3631 = vpack.c.b16 %v2375, %v2371
    %v3632 = vpack.c.b16 %v2376, %v2372
    %v3633 = vpack.c.b16 %v2377, %v2373
    %v3634 = vpack.c.b16 %v2378, %v2374
    %v3635 = vpack.c.b16 %v2383, %v2379
    %v3636 = vpack.c.b16 %v2384, %v2380
    %v3637 = vpack.c.b16 %v2385, %v2381
    %v3638 = vpack.c.b16 %v2386, %v2382
    %v3639 = vpack.c.b16 %v2391, %v2387
    %v3640 = vpack.c.b16 %v2392, %v2388
    %v3641 = vpack.c.b16 %v2393, %v2389
    %v3642 = vpack.c.b16 %v2394, %v2390
    %v3643 = vpack.c.b16 %v2399, %v2395
    %v3644 = vpack.c.b16 %v2400, %v2396
    %v3645 = vpack.c.b16 %v2401, %v2397
    %v3646 = vpack.c.b16 %v2402, %v2398
    %v3647 = vpack.c.b16 %v2407, %v2403
    %v3648 = vpack.c.b16 %v2408, %v2404
    %v3649 = vpack.c.b16 %v2409, %v2405
    %v3650 = vpack.c.b16 %v2410, %v2406
    %v3651 = vpack.c.b16 %v2415, %v2411
    %v3652 = vpack.c.b16 %v2416, %v2412
    %v3653 = vpack.c.b16 %v2417, %v2413
    %v3654 = vpack.c.b16 %v2418, %v2414
    %v3655 = vpack.c.b16 %v2423, %v2419
    %v3656 = vpack.c.b16 %v2424, %v2420
    %v3657 = vpack.c.b16 %v2425, %v2421
    %v3658 = vpack.c.b16 %v2426, %v2422
    %v3659 = vpack.c.b16 %v2431, %v2427
    %v3660 = vpack.c.b16 %v2432, %v2428
    %v3661 = vpack.c.b16 %v2433, %v2429
    %v3662 = vpack.c.b16 %v2434, %v2430
    %v3663 = vpack.c.b16 %v2439, %v2435
    %v3664 = vpack.c.b16 %v2440, %v2436
    %v3665 = vpack.c.b16 %v2441, %v2437
    %v3666 = vpack.c.b16 %v2442, %v2438
    %v3667 = vpack.c.b16 %v2447, %v2443
    %v3668 = vpack.c.b16 %v2448, %v2444
    %v3669 = vpack.c.b16 %v2449, %v2445
    %v3670 = vpack.c.b16 %v2450, %v2446
    %v3671 = vpack.c.b16 %v2455, %v2451
    %v3672 = vpack.c.b16 %v2456, %v2452
    %v3673 = vpack.c.b16 %v2457, %v2453
    %v3674 = vpack.c.b16 %v2458, %v2454
    %v3675 = vpack.c.b16 %v2463, %v2459
    %v3676 = vpack.c.b16 %v2464, %v2460
    %v3677 = vpack.c.b16 %v2465, %v2461
    %v3678 = vpack.c.b16 %v2466, %v2462
    %v3679 = vpack.c.b16 %v2471, %v2467
    %v3680 = vpack.c.b16 %v2472, %v2468
    %v3681 = vpack.c.b16 %v2473, %v2469
    %v3682 = vpack.c.b16 %v2474, %v2470
    %v3683 = vpack.c.b16 %v2479, %v2475
    %v3684 = vpack.c.b16 %v2480, %v2476
    %v3685 = vpack.c.b16 %v2481, %v2477
    %v3686 = vpack.c.b16 %v2482, %v2478
    %v3687 = vpack.c.b16 %v2487, %v2483
    %v3688 = vpack.c.b16 %v2488, %v2484
    %v3689 = vpack.c.b16 %v2489, %v2485
    %v3690 = vpack.c.b16 %v2490, %v2486
    %v3691 = vpack.c.b16 %v2495, %v2491
    %v3692 = vpack.c.b16 %v2496, %v2492
    %v3693 = vpack.c.b16 %v2497, %v2493
    %v3694 = vpack.c.b16 %v2498, %v2494
    %v3695 = vpack.c.b16 %v2503, %v2499
    %v3696 = vpack.c.b16 %v2504, %v2500
    %v3697 = vpack.c.b16 %v2505, %v2501
    %v3698 = vpack.c.b16 %v2506, %v2502
    %v3699 = vpack.c.b16 %v2511, %v2507
    %v3700 = vpack.c.b16 %v2512, %v2508
    %v3701 = vpack.c.b16 %v2513, %v2509
    %v3702 = vpack.c.b16 %v2514, %v2510
    %v3703 = vpack.c.b16 %v2519, %v2515
    %v3704 = vpack.c.b16 %v2520, %v2516
    %v3705 = vpack.c.b16 %v2521, %v2517
    %v3706 = vpack.c.b16 %v2522, %v2518
    %v3707 = vpack.c.b16 %v2527, %v2523
    %v3708 = vpack.c.b16 %v2528, %v2524
    %v3709 = vpack.c.b16 %v2529, %v2525
    %v3710 = vpack.c.b16 %v2530, %v2526
    %v3711 = vpack.c.b16 %v2535, %v2531
    %v3712 = vpack.c.b16 %v2536, %v2532
    %v3713 = vpack.c.b16 %v2537, %v2533
    %v3714 = vpack.c.b16 %v2538, %v2534
    %v3715 = vpack.c.b16 %v2543, %v2539
    %v3716 = vpack.c.b16 %v2544, %v2540
    %v3717 = vpack.c.b16 %v2545, %v2541
    %v3718 = vpack.c.b16 %v2546, %v2542
    %v3719 = vpack.c.b16 %v2551, %v2547
    %v3720 = vpack.c.b16 %v2552, %v2548
    %v3721 = vpack.c.b16 %v2553, %v2549
    %v3722 = vpack.c.b16 %v2554, %v2550
    %v3723 = vpack.c.b16 %v2559, %v2555
    %v3724 = vpack.c.b16 %v2560, %v2556
    %v3725 = vpack.c.b16 %v2561, %v2557
    %v3726 = vpack.c.b16 %v2562, %v2558
    %v3727 = vpack.c.b16 %v2567, %v2563
    %v3728 = vpack.c.b16 %v2568, %v2564
    %v3729 = vpack.c.b16 %v2569, %v2565
    %v3730 = vpack.c.b16 %v2570, %v2566
    %v3731 = vpack.c.b16 %v2575, %v2571
    %v3732 = vpack.c.b16 %v2576, %v2572
    %v3733 = vpack.c.b16 %v2577, %v2573
    %v3734 = vpack.c.b16 %v2578, %v2574
    %v3735 = vpack.c.b16 %v2583, %v2579
    %v3736 = vpack.c.b16 %v2584, %v2580
    %v3737 = vpack.c.b16 %v2585, %v2581
    %v3738 = vpack.c.b16 %v2586, %v2582
    %v3739 = vpack.c.b16 %v2591, %v2587
    %v3740 = vpack.c.b16 %v2592, %v2588
    %v3741 = vpack.c.b16 %v2593, %v2589
    %v3742 = vpack.c.b16 %v2594, %v2590
    %v3743 = vpack.c.b16 %v2599, %v2595
    %v3744 = vpack.c.b16 %v2600, %v2596
    %v3745 = vpack.c.b16 %v2601, %v2597
    %v3746 = vpack.c.b16 %v2602, %v2598
    %v3747 = vpack.c.b16 %v2607, %v2603
    %v3748 = vpack.c.b16 %v2608, %v2604
    %v3749 = vpack.c.b16 %v2609, %v2605
    %v3750 = vpack.c.b16 %v2610, %v2606
    %v3751 = vpack.c.b16 %v2615, %v2611
    %v3752 = vpack.c.b16 %v2616, %v2612
    %v3753 = vpack.c.b16 %v2617, %v2613
    %v3754 = vpack.c.b16 %v2618, %v2614
    %v3755 = vpack.c.b16 %v2623, %v2619
    %v3756 = vpack.c.b16 %v2624, %v2620
    %v3757 = vpack.c.b16 %v2625, %v2621
    %v3758 = vpack.c.b16 %v2626, %v2622
    %v3759 = vpack.c.b16 %v2631, %v2627
    %v3760 = vpack.c.b16 %v2632, %v2628
    %v3761 = vpack.c.b16 %v2633, %v2629
    %v3762 = vpack.c.b16 %v2634, %v2630
    %v3763 = vpack.c.b16 %v2639, %v2635
    %v3764 = vpack.c.b16 %v2640, %v2636
    %v3765 = vpack.c.b16 %v2641, %v2637
    %v3766 = vpack.c.b16 %v2642, %v2638
    %v3767 = vpack.c.b16 %v2647, %v2643
    %v3768 = vpack.c.b16 %v2648, %v2644
    %v3769 = vpack.c.b16 %v2649, %v2645
    %v3770 = vpack.c.b16 %v2650, %v2646
    %v3771 = vpack.c.b16 %v2655, %v2651
    %v3772 = vpack.c.b16 %v2656, %v2652
    %v3773 = vpack.c.b16 %v2657, %v2653
    %v3774 = vpack.c.b16 %v2658, %v2654
    %v3775 = vpack.c.b16 %v2663, %v2659
    %v3776 = vpack.c.b16 %v2664, %v2660
    %v3777 = vpack.c.b16 %v2665, %v2661
    %v3778 = vpack.c.b16 %v2666, %v2662
    %v3779 = vpack.c.b16 %v2671, %v2667
    %v3780 = vpack.c.b16 %v2672, %v2668
    %v3781 = vpack.c.b16 %v2673, %v2669
    %v3782 = vpack.c.b16 %v2674, %v2670
    %v3783 = vpack.c.b16 %v2679, %v2675
    %v3784 = vpack.c.b16 %v2680, %v2676
    %v3785 = vpack.c.b16 %v2681, %v2677
    %v3786 = vpack.c.b16 %v2682, %v2678
    %v3787 = vpack.c.b16 %v2687, %v2683
    %v3788 = vpack.c.b16 %v2688, %v2684
    %v3789 = vpack.c.b16 %v2689, %v2685
    %v3790 = vpack.c.b16 %v2690, %v2686
    %v3791 = vpack.c.b16 %v2695, %v2691
    %v3792 = vpack.c.b16 %v2696, %v2692
    %v3793 = vpack.c.b16 %v2697, %v2693
    %v3794 = vpack.c.b16 %v2698, %v2694
    %v3795 = vpack.c.b16 %v2703, %v2699
    %v3796 = vpack.c.b16 %v2704, %v2700
    %v3797 = vpack.c.b16 %v2705, %v2701
    %v3798 = vpack.c.b16 %v2706, %v2702
    %v3799 = vpack.c.b16 %v2711, %v2707
    %v3800 = vpack.c.b16 %v2712, %v2708
    %v3801 = vpack.c.b16 %v2713, %v2709
    %v3802 = vpack.c.b16 %v2714, %v2710
    %v3803 = vpack.c.b16 %v2719, %v2715
    %v3804 = vpack.c.b16 %v2720, %v2716
    %v3805 = vpack.c.b16 %v2721, %v2717
    %v3806 = vpack.c.b16 %v2722, %v2718
    %v3807 = vpack.c.b16 %v2727, %v2723
    %v3808 = vpack.c.b16 %v2728, %v2724
    %v3809 = vpack.c.b16 %v2729, %v2725
    %v3810 = vpack.c.b16 %v2730, %v2726
    %v3811 = vpack.c.b16 %v2735, %v2731
    %v3812 = vpack.c.b16 %v2736, %v2732
    %v3813 = vpack.c.b16 %v2737, %v2733
    %v3814 = vpack.c.b16 %v2738, %v2734
    %v3815 = vpack.c.b16 %v2743, %v2739
    %v3816 = vpack.c.b16 %v2744, %v2740
    %v3817 = vpack.c.b16 %v2745, %v2741
    %v3818 = vpack.c.b16 %v2746, %v2742
    %v3819 = vpack.c.b16 %v2751, %v2747
    %v3820 = vpack.c.b16 %v2752, %v2748
    %v3821 = vpack.c.b16 %v2753, %v2749
    %v3822 = vpack.c.b16 %v2754, %v2750
    %v3823 = vpack.c.b16 %v2759, %v2755
    %v3824 = vpack.c.b16 %v2760, %v2756
    %v3825 = vpack.c.b16 %v2761, %v2757
    %v3826 = vpack.c.b16 %v2762, %v2758
    %v3827 = vpack.c.b16 %v2767, %v2763
    %v3828 = vpack.c.b16 %v2768, %v2764
    %v3829 = vpack.c.b16 %v2769, %v2765
    %v3830 = vpack.c.b16 %v2770, %v2766
    %v3831 = vpack.c.b16 %v2775, %v2771
    %v3832 = vpack.c.b16 %v2776, %v2772
    %v3833 = vpack.c.b16 %v2777, %v2773
    %v3834 = vpack.c.b16 %v2778, %v2774
    %v3835 = vpack.c.b16 %v2783, %v2779
    %v3836 = vpack.c.b16 %v2784, %v2780
    %v3837 = vpack.c.b16 %v2785, %v2781
    %v3838 = vpack.c.b16 %v2786, %v2782
    %v3839 = vpack.c.b16 %v2791, %v2787
    %v3840 = vpack.c.b16 %v2792, %v2788
    %v3841 = vpack.c.b16 %v2793, %v2789
    %v3842 = vpack.c.b16 %v2794, %v2790
    %v3843 = vpack.c.b16 %v2799, %v2795
    %v3844 = vpack.c.b16 %v2800, %v2796
    %v3845 = vpack.c.b16 %v2801, %v2797
    %v3846 = vpack.c.b16 %v2802, %v2798
    %v3847 = vpack.c.b16 %v2807, %v2803
    %v3848 = vpack.c.b16 %v2808, %v2804
    %v3849 = vpack.c.b16 %v2809, %v2805
    %v3850 = vpack.c.b16 %v2810, %v2806
    %v3851 = vpack.c.b16 %v2815, %v2811
    %v3852 = vpack.c.b16 %v2816, %v2812
    %v3853 = vpack.c.b16 %v2817, %v2813
    %v3854 = vpack.c.b16 %v2818, %v2814
    %v3855 = vpack.c.b16 %v2823, %v2819
    %v3856 = vpack.c.b16 %v2824, %v2820
    %v3857 = vpack.c.b16 %v2825, %v2821
    %v3858 = vpack.c.b16 %v2826, %v2822
    %v3859 = vpack.c.b16 %v2831, %v2827
    %v3860 = vpack.c.b16 %v2832, %v2828
    %v3861 = vpack.c.b16 %v2833, %v2829
    %v3862 = vpack.c.b16 %v2834, %v2830
    %v3863 = vpack.c.b16 %v2839, %v2835
    %v3864 = vpack.c.b16 %v2840, %v2836
    %v3865 = vpack.c.b16 %v2841, %v2837
    %v3866 = vpack.c.b16 %v2842, %v2838
    %v3867 = vpack.c.b16 %v2847, %v2843
    %v3868 = vpack.c.b16 %v2848, %v2844
    %v3869 = vpack.c.b16 %v2849, %v2845
    %v3870 = vpack.c.b16 %v2850, %v2846
    %v3871 = vpack.c.b16 %v2855, %v2851
    %v3872 = vpack.c.b16 %v2856, %v2852
    %v3873 = vpack.c.b16 %v2857, %v2853
    %v3874 = vpack.c.b16 %v2858, %v2854
    %v3875 = vpack.c.b16 %v2863, %v2859
    %v3876 = vpack.c.b16 %v2864, %v2860
    %v3877 = vpack.c.b16 %v2865, %v2861
    %v3878 = vpack.c.b16 %v2866, %v2862
    %v3879 = vpack.c.b16 %v2871, %v2867
    %v3880 = vpack.c.b16 %v2872, %v2868
    %v3881 = vpack.c.b16 %v2873, %v2869
    %v3882 = vpack.c.b16 %v2874, %v2870
    %v3883 = vpack.c.b16 %v2879, %v2875
    %v3884 = vpack.c.b16 %v2880, %v2876
    %v3885 = vpack.c.b16 %v2881, %v2877
    %v3886 = vpack.c.b16 %v2882, %v2878
    %v3887 = vpack.c.b16 %v2887, %v2883
    %v3888 = vpack.c.b16 %v2888, %v2884
    %v3889 = vpack.c.b16 %v2889, %v2885
    %v3890 = vpack.c.b16 %v2890, %v2886
    %v3891 = vpack.c.b16 %v2895, %v2891
    %v3892 = vpack.c.b16 %v2896, %v2892
    %v3893 = vpack.c.b16 %v2897, %v2893
    %v3894 = vpack.c.b16 %v2898, %v2894
    %v3895 = vpack.c.b16 %v2903, %v2899
    %v3896 = vpack.c.b16 %v2904, %v2900
    %v3897 = vpack.c.b16 %v2905, %v2901
    %v3898 = vpack.c.b16 %v2906, %v2902
    %v3899 = vpack.c.b16 %v2911, %v2907
    %v3900 = vpack.c.b16 %v2912, %v2908
    %v3901 = vpack.c.b16 %v2913, %v2909
    %v3902 = vpack.c.b16 %v2914, %v2910
    %v3903 = vpack.c.b16 %v2919, %v2915
    %v3904 = vpack.c.b16 %v2920, %v2916
    %v3905 = vpack.c.b16 %v2921, %v2917
    %v3906 = vpack.c.b16 %v2922, %v2918
    %v3907 = vpack.c.b16 %v2927, %v2923
    %v3908 = vpack.c.b16 %v2928, %v2924
    %v3909 = vpack.c.b16 %v2929, %v2925
    %v3910 = vpack.c.b16 %v2930, %v2926
    %v3911 = vpack.c.b16 %v2935, %v2931
    %v3912 = vpack.c.b16 %v2936, %v2932
    %v3913 = vpack.c.b16 %v2937, %v2933
    %v3914 = vpack.c.b16 %v2938, %v2934
    %v3915 = vpack.c.b16 %v2943, %v2939
    %v3916 = vpack.c.b16 %v2944, %v2940
    %v3917 = vpack.c.b16 %v2945, %v2941
    %v3918 = vpack.c.b16 %v2946, %v2942
    %v3919 = vpack.c.b16 %v2951, %v2947
    %v3920 = vpack.c.b16 %v2952, %v2948
    %v3921 = vpack.c.b16 %v2953, %v2949
    %v3922 = vpack.c.b16 %v2954, %v2950
    %v3923 = vpack.c.b16 %v2959, %v2955
    %v3924 = vpack.c.b16 %v2960, %v2956
    %v3925 = vpack.c.b16 %v2961, %v2957
    %v3926 = vpack.c.b16 %v2962, %v2958
    %v3927 = vpack.c.b16 %v2967, %v2963
    %v3928 = vpack.c.b16 %v2968, %v2964
    %v3929 = vpack.c.b16 %v2969, %v2965
    %v3930 = vpack.c.b16 %v2970, %v2966
    %v3931 = vpack.c.b16 %v2975, %v2971
    %v3932 = vpack.c.b16 %v2976, %v2972
    %v3933 = vpack.c.b16 %v2977, %v2973
    %v3934 = vpack.c.b16 %v2978, %v2974
    %v3935 = vpack.c.b16 %v2983, %v2979
    %v3936 = vpack.c.b16 %v2984, %v2980
    %v3937 = vpack.c.b16 %v2985, %v2981
    %v3938 = vpack.c.b16 %v2986, %v2982
    %v3939 = vpack.c.b16 %v2991, %v2987
    %v3940 = vpack.c.b16 %v2992, %v2988
    %v3941 = vpack.c.b16 %v2993, %v2989
    %v3942 = vpack.c.b16 %v2994, %v2990
    %v3943 = vpack.c.b16 %v2999, %v2995
    %v3944 = vpack.c.b16 %v3000, %v2996
    %v3945 = vpack.c.b16 %v3001, %v2997
    %v3946 = vpack.c.b16 %v3002, %v2998
    %v3947 = vpack.c.b16 %v3007, %v3003
    %v3948 = vpack.c.b16 %v3008, %v3004
    %v3949 = vpack.c.b16 %v3009, %v3005
    %v3950 = vpack.c.b16 %v3010, %v3006
    %v3951 = vpack.c.b16 %v3015, %v3011
    %v3952 = vpack.c.b16 %v3016, %v3012
    %v3953 = vpack.c.b16 %v3017, %v3013
    %v3954 = vpack.c.b16 %v3018, %v3014
    %v3955 = vpack.c.b16 %v3023, %v3019
    %v3956 = vpack.c.b16 %v3024, %v3020
    %v3957 = vpack.c.b16 %v3025, %v3021
    %v3958 = vpack.c.b16 %v3026, %v3022
    %v3959 = vpack.c.b16 %v3031, %v3027
    %v3960 = vpack.c.b16 %v3032, %v3028
    %v3961 = vpack.c.b16 %v3033, %v3029
    %v3962 = vpack.c.b16 %v3034, %v3030
    %v3963 = vpack.c.b16 %v3039, %v3035
    %v3964 = vpack.c.b16 %v3040, %v3036
    %v3965 = vpack.c.b16 %v3041, %v3037
    %v3966 = vpack.c.b16 %v3042, %v3038
    %v3967 = vpack.c.b16 %v3047, %v3043
    %v3968 = vpack.c.b16 %v3048, %v3044
    %v3969 = vpack.c.b16 %v3049, %v3045
    %v3970 = vpack.c.b16 %v3050, %v3046
    %v3971 = vpack.c.b16 %v3055, %v3051
    %v3972 = vpack.c.b16 %v3056, %v3052
    %v3973 = vpack.c.b16 %v3057, %v3053
    %v3974 = vpack.c.b16 %v3058, %v3054
    %v3975 = vpack.c.b16 %v3063, %v3059
    %v3976 = vpack.c.b16 %v3064, %v3060
    %v3977 = vpack.c.b16 %v3065, %v3061
    %v3978 = vpack.c.b16 %v3066, %v3062
    %v3979 = vpack.c.b16 %v3071, %v3067
    %v3980 = vpack.c.b16 %v3072, %v3068
    %v3981 = vpack.c.b16 %v3073, %v3069
    %v3982 = vpack.c.b16 %v3074, %v3070
    %v3983 = vpack.c.b16 %v3079, %v3075
    %v3984 = vpack.c.b16 %v3080, %v3076
    %v3985 = vpack.c.b16 %v3081, %v3077
    %v3986 = vpack.c.b16 %v3082, %v3078
    %v3987 = vpack.c.b16 %v3087, %v3083
    %v3988 = vpack.c.b16 %v3088, %v3084
    %v3989 = vpack.c.b16 %v3089, %v3085
    %v3990 = vpack.c.b16 %v3090, %v3086
    %v3991 = vpack.c.b16 %v3095, %v3091
    %v3992 = vpack.c.b16 %v3096, %v3092
    %v3993 = vpack.c.b16 %v3097, %v3093
    %v3994 = vpack.c.b16 %v3098, %v3094
    %v3995 = vpack.c.b16 %v3103, %v3099
    %v3996 = vpack.c.b16 %v3104, %v3100
    %v3997 = vpack.c.b16 %v3105, %v3101
    %v3998 = vpack.c.b16 %v3106, %v3102
    %v3999 = vpack.c.b16 %v3111, %v3107
    %v4000 = vpack.c.b16 %v3112, %v3108
    %v4001 = vpack.c.b16 %v3113, %v3109
    %v4002 = vpack.c.b16 %v3114, %v3110
    %v4003 = vpack.c.b16 %v3119, %v3115
    %v4004 = vpack.c.b16 %v3120, %v3116
    %v4005 = vpack.c.b16 %v3121, %v3117
    %v4006 = vpack.c.b16 %v3122, %v3118
    %v4007 = vpack.c.b16 %v3127, %v3123
    %v4008 = vpack.c.b16 %v3128, %v3124
    %v4009 = vpack.c.b16 %v3129, %v3125
    %v4010 = vpack.c.b16 %v3130, %v3126
    %v4011 = vpack.c.b16 %v3135, %v3131
    %v4012 = vpack.c.b16 %v3136, %v3132
    %v4013 = vpack.c.b16 %v3137, %v3133
    %v4014 = vpack.c.b16 %v3138, %v3134
    %v4015 = vpack.c.b16 %v3143, %v3139
    %v4016 = vpack.c.b16 %v3144, %v3140
    %v4017 = vpack.c.b16 %v3145, %v3141
    %v4018 = vpack.c.b16 %v3146, %v3142
    %v4019 = vpack.c.b16 %v3151, %v3147
    %v4020 = vpack.c.b16 %v3152, %v3148
    %v4021 = vpack.c.b16 %v3153, %v3149
    %v4022 = vpack.c.b16 %v3154, %v3150
    %v4023 = vpack.c.b16 %v3159, %v3155
    %v4024 = vpack.c.b16 %v3160, %v3156
    %v4025 = vpack.c.b16 %v3161, %v3157
    %v4026 = vpack.c.b16 %v3162, %v3158
    %v4027 = vpack.c.b16 %v3167, %v3163
    %v4028 = vpack.c.b16 %v3168, %v3164
    %v4029 = vpack.c.b16 %v3169, %v3165
    %v4030 = vpack.c.b16 %v3170, %v3166
    %v4031 = vpack.c.b16 %v3175, %v3171
    %v4032 = vpack.c.b16 %v3176, %v3172
    %v4033 = vpack.c.b16 %v3177, %v3173
    %v4034 = vpack.c.b16 %v3178, %v3174
    %v4035 = vpack.c.b16 %v3183, %v3179
    %v4036 = vpack.c.b16 %v3184, %v3180
    %v4037 = vpack.c.b16 %v3185, %v3181
    %v4038 = vpack.c.b16 %v3186, %v3182
    %v4039 = vpack.c.b16 %v3191, %v3187
    %v4040 = vpack.c.b16 %v3192, %v3188
    %v4041 = vpack.c.b16 %v3193, %v3189
    %v4042 = vpack.c.b16 %v3194, %v3190
    %v4043 = vpack.c.b16 %v3199, %v3195
    %v4044 = vpack.c.b16 %v3200, %v3196
    %v4045 = vpack.c.b16 %v3201, %v3197
    %v4046 = vpack.c.b16 %v3202, %v3198
    %v4047 = vpack.c.b16 %v3207, %v3203
    %v4048 = vpack.c.b16 %v3208, %v3204
    %v4049 = vpack.c.b16 %v3209, %v3205
    %v4050 = vpack.c.b16 %v3210, %v3206
    %v4051 = vpack.c.b16 %v3215, %v3211
    %v4052 = vpack.c.b16 %v3216, %v3212
    %v4053 = vpack.c.b16 %v3217, %v3213
    %v4054 = vpack.c.b16 %v3218, %v3214
    %v4055 = vpack.c.b16 %v3223, %v3219
    %v4056 = vpack.c.b16 %v3224, %v3220
    %v4057 = vpack.c.b16 %v3225, %v3221
    %v4058 = vpack.c.b16 %v3226, %v3222
    %v4059 = vpack.c.b16 %v3231, %v3227
    %v4060 = vpack.c.b16 %v3232, %v3228
    %v4061 = vpack.c.b16 %v3233, %v3229
    %v4062 = vpack.c.b16 %v3234, %v3230
    %v4063 = vpack.c.b16 %v3239, %v3235
    %v4064 = vpack.c.b16 %v3240, %v3236
    %v4065 = vpack.c.b16 %v3241, %v3237
    %v4066 = vpack.c.b16 %v3242, %v3238
    %v4067 = vpack.c.b16 %v3247, %v3243
    %v4068 = vpack.c.b16 %v3248, %v3244
    %v4069 = vpack.c.b16 %v3249, %v3245
    %v4070 = vpack.c.b16 %v3250, %v3246
    %v4071 = vpack.c.b16 %v3255, %v3251
    %v4072 = vpack.c.b16 %v3256, %v3252
    %v4073 = vpack.c.b16 %v3257, %v3253
    %v4074 = vpack.c.b16 %v3258, %v3254
    %v4075 = vpack.c.b16 %v3263, %v3259
    %v4076 = vpack.c.b16 %v3264, %v3260
    %v4077 = vpack.c.b16 %v3265, %v3261
    %v4078 = vpack.c.b16 %v3266, %v3262
    %v4079 = vpack.c.b16 %v3271, %v3267
    %v4080 = vpack.c.b16 %v3272, %v3268
    %v4081 = vpack.c.b16 %v3273, %v3269
    %v4082 = vpack.c.b16 %v3274, %v3270
    %v4083 = vpack.c.b16 %v3279, %v3275
    %v4084 = vpack.c.b16 %v3280, %v3276
    %v4085 = vpack.c.b16 %v3281, %v3277
    %v4086 = vpack.c.b16 %v3282, %v3278
    %v4087 = vpack.c.b16 %v3287, %v3283
    %v4088 = vpack.c.b16 %v3288, %v3284
    %v4089 = vpack.c.b16 %v3289, %v3285
    %v4090 = vpack.c.b16 %v3290, %v3286
    %v4091 = vpack.c.b16 %v3295, %v3291
    %v4092 = vpack.c.b16 %v3296, %v3292
    %v4093 = vpack.c.b16 %v3297, %v3293
    %v4094 = vpack.c.b16 %v3298, %v3294
    %v4095 = vpack.c.b16 %v3303, %v3299
    %v4096 = vpack.c.b16 %v3304, %v3300
    %v4097 = vpack.c.b16 %v3305, %v3301
    %v4098 = vpack.c.b16 %v3306, %v3302
    %v4099 = vpack.c.b16 %v3311, %v3307
    %v4100 = vpack.c.b16 %v3312, %v3308
    %v4101 = vpack.c.b16 %v3313, %v3309
    %v4102 = vpack.c.b16 %v3314, %v3310
    %v4103 = vpack.c.b16 %v3319, %v3315
    %v4104 = vpack.c.b16 %v3320, %v3316
    %v4105 = vpack.c.b16 %v3321, %v3317
    %v4106 = vpack.c.b16 %v3322, %v3318
    %v4107 = vpack.c.b16 %v3327, %v3323
    %v4108 = vpack.c.b16 %v3328, %v3324
    %v4109 = vpack.c.b16 %v3329, %v3325
    %v4110 = vpack.c.b16 %v3330, %v3326
    %v4111 = vpack.c.b16 %v3335, %v3331
    %v4112 = vpack.c.b16 %v3336, %v3332
    %v4113 = vpack.c.b16 %v3337, %v3333
    %v4114 = vpack.c.b16 %v3338, %v3334
    %v4115 = vpack.c.b16 %v3343, %v3339
    %v4116 = vpack.c.b16 %v3344, %v3340
    %v4117 = vpack.c.b16 %v3345, %v3341
    %v4118 = vpack.c.b16 %v3346, %v3342
    %v4119 = vpack.c.b16 %v3351, %v3347
    %v4120 = vpack.c.b16 %v3352, %v3348
    %v4121 = vpack.c.b16 %v3353, %v3349
    %v4122 = vpack.c.b16 %v3354, %v3350
    %4891 = vmatprep.subr.bf16.mxu0 %v3356
    %4892 = vmatpush1.bf16.msra.mxu0 %v3355
    %4893 = vmatprep.subr.bf16.mxu0 %v3360
    %4894 = vmatpush1.bf16.msra.mxu0 %v3359
    %4895 = vmatprep.subr.bf16.mxu0 %v3364
    %4896 = vmatpush1.bf16.msra.mxu0 %v3363
    %4897 = vmatprep.subr.bf16.mxu0 %v3368
    %4898 = vmatpush1.bf16.msra.mxu0 %v3367
    %4899 = vmatprep.subr.bf16.mxu0 %v3372
    %4900 = vmatpush1.bf16.msra.mxu0 %v3371
    %4901 = vmatprep.subr.bf16.mxu0 %v3376
    %4902 = vmatpush1.bf16.msra.mxu0 %v3375
    %4903 = vmatprep.subr.bf16.mxu0 %v3380
    %4904 = vmatpush1.bf16.msra.mxu0 %v3379
    %4905 = vmatprep.subr.bf16.mxu0 %v3384
    %4906 = vmatpush1.bf16.msra.mxu0 %v3383
    %4907 = vmatprep.subr.bf16.mxu0 %v3388
    %4908 = vmatpush1.bf16.msra.mxu0 %v3387
    %4909 = vmatprep.subr.bf16.mxu0 %v3392
    %4910 = vmatpush1.bf16.msra.mxu0 %v3391
    %4911 = vmatprep.subr.bf16.mxu0 %v3396
    %4912 = vmatpush1.bf16.msra.mxu0 %v3395
    %4913 = vmatprep.subr.bf16.mxu0 %v3400
    %4914 = vmatpush1.bf16.msra.mxu0 %v3399
    %4915 = vmatprep.subr.bf16.mxu0 %v3404
    %4916 = vmatpush1.bf16.msra.mxu0 %v3403
    %4917 = vmatprep.subr.bf16.mxu0 %v3408
    %4918 = vmatpush1.bf16.msra.mxu0 %v3407
    %4919 = vmatprep.subr.bf16.mxu0 %v3412
    %4920 = vmatpush1.bf16.msra.mxu0 %v3411
    %4921 = vmatprep.subr.bf16.mxu0 %v3416
    %4922 = vmatpush1.bf16.msra.mxu0 %v3415
    %4923 = vmatprep.mubr.bf16.mxu0 %v1004
    %4924 = vmatmul.mubr.bf16.gmra.mrb[0].mxu0 %v1003
    %v4925 = vpop.f32.mrb[0].mxu0
    %v4926 = vadd.f32 %v914, %v4925
    %v4927 = vpop.f32.mrb[0].mxu0
    %v4928 = vadd.f32 %v918, %v4927
    %v4929 = vpop.f32.mrb[0].mxu0
    %v4930 = vadd.f32 %v914, %v4929
    %v4931 = vpop.f32.mrb[0].mxu0
    %v4932 = vadd.f32 %v918, %v4931
    %4933 = vdwg.mxu0
    %4934 = vmatprep.subr.bf16.mxu0 %v3420
    %4935 = vmatpush1.bf16.msra.mxu0 %v3419
    %4936 = vmatprep.subr.bf16.mxu0 %v3424
    %4937 = vmatpush1.bf16.msra.mxu0 %v3423
    %4938 = vmatprep.subr.bf16.mxu0 %v3428
    %4939 = vmatpush1.bf16.msra.mxu0 %v3427
    %4940 = vmatprep.subr.bf16.mxu0 %v3432
    %4941 = vmatpush1.bf16.msra.mxu0 %v3431
    %4942 = vmatprep.subr.bf16.mxu0 %v3436
    %4943 = vmatpush1.bf16.msra.mxu0 %v3435
    %4944 = vmatprep.subr.bf16.mxu0 %v3440
    %4945 = vmatpush1.bf16.msra.mxu0 %v3439
    %4946 = vmatprep.subr.bf16.mxu0 %v3444
    %4947 = vmatpush1.bf16.msra.mxu0 %v3443
    %4948 = vmatprep.subr.bf16.mxu0 %v3448
    %4949 = vmatpush1.bf16.msra.mxu0 %v3447
    %4950 = vmatprep.subr.bf16.mxu0 %v3452
    %4951 = vmatpush1.bf16.msra.mxu0 %v3451
    %4952 = vmatprep.subr.bf16.mxu0 %v3456
    %4953 = vmatpush1.bf16.msra.mxu0 %v3455
    %4954 = vmatprep.subr.bf16.mxu0 %v3460
    %4955 = vmatpush1.bf16.msra.mxu0 %v3459
    %4956 = vmatprep.subr.bf16.mxu0 %v3464
    %4957 = vmatpush1.bf16.msra.mxu0 %v3463
    %4958 = vmatprep.subr.bf16.mxu0 %v3468
    %4959 = vmatpush1.bf16.msra.mxu0 %v3467
    %4960 = vmatprep.subr.bf16.mxu0 %v3472
    %4961 = vmatpush1.bf16.msra.mxu0 %v3471
    %4962 = vmatprep.subr.bf16.mxu0 %v3476
    %4963 = vmatpush1.bf16.msra.mxu0 %v3475
    %4964 = vmatprep.subr.bf16.mxu0 %v3480
    %4965 = vmatpush1.bf16.msra.mxu0 %v3479
    %4966 = vmatprep.mubr.bf16.mxu0 %v1006
    %4967 = vmatmul.mubr.bf16.gmra.mrb[0].mxu0 %v1005
    %v4968 = vpop.f32.mrb[0].mxu0
    %v4969 = vadd.f32 %v4926, %v4968
    %v4970 = vpop.f32.mrb[0].mxu0
    %v4971 = vadd.f32 %v4928, %v4970
    %v4972 = vpop.f32.mrb[0].mxu0
    %v4973 = vadd.f32 %v4930, %v4972
    %v4974 = vpop.f32.mrb[0].mxu0
    %v4975 = vadd.f32 %v4932, %v4974
    %4976 = vdwg.mxu0
    %4977 = vmatprep.subr.bf16.mxu0 %v3484
    %4978 = vmatpush1.bf16.msra.mxu0 %v3483
    %4979 = vmatprep.subr.bf16.mxu0 %v3488
    %4980 = vmatpush1.bf16.msra.mxu0 %v3487
    %4981 = vmatprep.subr.bf16.mxu0 %v3492
    %4982 = vmatpush1.bf16.msra.mxu0 %v3491
    %4983 = vmatprep.subr.bf16.mxu0 %v3496
    %4984 = vmatpush1.bf16.msra.mxu0 %v3495
    %4985 = vmatprep.subr.bf16.mxu0 %v3500
    %4986 = vmatpush1.bf16.msra.mxu0 %v3499
    %4987 = vmatprep.subr.bf16.mxu0 %v3504
    %4988 = vmatpush1.bf16.msra.mxu0 %v3503
    %4989 = vmatprep.subr.bf16.mxu0 %v3508
    %4990 = vmatpush1.bf16.msra.mxu0 %v3507
    %4991 = vmatprep.subr.bf16.mxu0 %v3512
    %4992 = vmatpush1.bf16.msra.mxu0 %v3511
    %4993 = vmatprep.subr.bf16.mxu0 %v3516
    %4994 = vmatpush1.bf16.msra.mxu0 %v3515
    %4995 = vmatprep.subr.bf16.mxu0 %v3520
    %4996 = vmatpush1.bf16.msra.mxu0 %v3519
    %4997 = vmatprep.subr.bf16.mxu0 %v3524
    %4998 = vmatpush1.bf16.msra.mxu0 %v3523
    %4999 = vmatprep.subr.bf16.mxu0 %v3528
    %5000 = vmatpush1.bf16.msra.mxu0 %v3527
    %5001 = vmatprep.subr.bf16.mxu0 %v3532
    %5002 = vmatpush1.bf16.msra.mxu0 %v3531
    %5003 = vmatprep.subr.bf16.mxu0 %v3536
    %5004 = vmatpush1.bf16.msra.mxu0 %v3535
    %5005 = vmatprep.subr.bf16.mxu0 %v3540
    %5006 = vmatpush1.bf16.msra.mxu0 %v3539
    %5007 = vmatprep.subr.bf16.mxu0 %v3544
    %5008 = vmatpush1.bf16.msra.mxu0 %v3543
    %5009 = vmatprep.mubr.bf16.mxu0 %v1008
    %5010 = vmatmul.mubr.bf16.gmra.mrb[0].mxu0 %v1007
    %v5011 = vpop.f32.mrb[0].mxu0
    %v5012 = vadd.f32 %v4969, %v5011
    %v5013 = vpop.f32.mrb[0].mxu0
    %v5014 = vadd.f32 %v4971, %v5013
    %v5015 = vpop.f32.mrb[0].mxu0
    %v5016 = vadd.f32 %v4973, %v5015
    %v5017 = vpop.f32.mrb[0].mxu0
    %v5018 = vadd.f32 %v4975, %v5017
    %5019 = vdwg.mxu0
    %5020 = vmatprep.subr.bf16.mxu0 %v3548
    %5021 = vmatpush1.bf16.msra.mxu0 %v3547
    %5022 = vmatprep.subr.bf16.mxu0 %v3552
    %5023 = vmatpush1.bf16.msra.mxu0 %v3551
    %5024 = vmatprep.subr.bf16.mxu0 %v3556
    %5025 = vmatpush1.bf16.msra.mxu0 %v3555
    %5026 = vmatprep.subr.bf16.mxu0 %v3560
    %5027 = vmatpush1.bf16.msra.mxu0 %v3559
    %5028 = vmatprep.subr.bf16.mxu0 %v3564
    %5029 = vmatpush1.bf16.msra.mxu0 %v3563
    %5030 = vmatprep.subr.bf16.mxu0 %v3568
    %5031 = vmatpush1.bf16.msra.mxu0 %v3567
    %5032 = vmatprep.subr.bf16.mxu0 %v3572
    %5033 = vmatpush1.bf16.msra.mxu0 %v3571
    %5034 = vmatprep.subr.bf16.mxu0 %v3576
    %5035 = vmatpush1.bf16.msra.mxu0 %v3575
    %5036 = vmatprep.subr.bf16.mxu0 %v3580
    %5037 = vmatpush1.bf16.msra.mxu0 %v3579
    %5038 = vmatprep.subr.bf16.mxu0 %v3584
    %5039 = vmatpush1.bf16.msra.mxu0 %v3583
    %5040 = vmatprep.subr.bf16.mxu0 %v3588
    %5041 = vmatpush1.bf16.msra.mxu0 %v3587
    %5042 = vmatprep.subr.bf16.mxu0 %v3592
    %5043 = vmatpush1.bf16.msra.mxu0 %v3591
    %5044 = vmatprep.subr.bf16.mxu0 %v3596
    %5045 = vmatpush1.bf16.msra.mxu0 %v3595
    %5046 = vmatprep.subr.bf16.mxu0 %v3600
    %5047 = vmatpush1.bf16.msra.mxu0 %v3599
    %5048 = vmatprep.subr.bf16.mxu0 %v3604
    %5049 = vmatpush1.bf16.msra.mxu0 %v3603
    %5050 = vmatprep.subr.bf16.mxu0 %v3608
    %5051 = vmatpush1.bf16.msra.mxu0 %v3607
    %5052 = vmatprep.mubr.bf16.mxu0 %v1010
    %5053 = vmatmul.mubr.bf16.gmra.mrb[0].mxu0 %v1009
    %v5054 = vpop.f32.mrb[0].mxu0
    %v5055 = vadd.f32 %v5012, %v5054
    %v5056 = vpop.f32.mrb[0].mxu0
    %v5057 = vadd.f32 %v5014, %v5056
    %v5058 = vpop.f32.mrb[0].mxu0
    %v5059 = vadd.f32 %v5016, %v5058
    %v5060 = vpop.f32.mrb[0].mxu0
    %v5061 = vadd.f32 %v5018, %v5060
    %5062 = vdwg.mxu0
    %5063 = vmatprep.subr.bf16.mxu0 %v3612
    %5064 = vmatpush1.bf16.msra.mxu0 %v3611
    %5065 = vmatprep.subr.bf16.mxu0 %v3616
    %5066 = vmatpush1.bf16.msra.mxu0 %v3615
    %5067 = vmatprep.subr.bf16.mxu0 %v3620
    %5068 = vmatpush1.bf16.msra.mxu0 %v3619
    %5069 = vmatprep.subr.bf16.mxu0 %v3624
    %5070 = vmatpush1.bf16.msra.mxu0 %v3623
    %5071 = vmatprep.subr.bf16.mxu0 %v3628
    %5072 = vmatpush1.bf16.msra.mxu0 %v3627
    %5073 = vmatprep.subr.bf16.mxu0 %v3632
    %5074 = vmatpush1.bf16.msra.mxu0 %v3631
    %5075 = vmatprep.subr.bf16.mxu0 %v3636
    %5076 = vmatpush1.bf16.msra.mxu0 %v3635
    %5077 = vmatprep.subr.bf16.mxu0 %v3640
    %5078 = vmatpush1.bf16.msra.mxu0 %v3639
    %5079 = vmatprep.subr.bf16.mxu0 %v3644
    %5080 = vmatpush1.bf16.msra.mxu0 %v3643
    %5081 = vmatprep.subr.bf16.mxu0 %v3648
    %5082 = vmatpush1.bf16.msra.mxu0 %v3647
    %5083 = vmatprep.subr.bf16.mxu0 %v3652
    %5084 = vmatpush1.bf16.msra.mxu0 %v3651
    %5085 = vmatprep.subr.bf16.mxu0 %v3656
    %5086 = vmatpush1.bf16.msra.mxu0 %v3655
    %5087 = vmatprep.subr.bf16.mxu0 %v3660
    %5088 = vmatpush1.bf16.msra.mxu0 %v3659
    %5089 = vmatprep.subr.bf16.mxu0 %v3664
    %5090 = vmatpush1.bf16.msra.mxu0 %v3663
    %5091 = vmatprep.subr.bf16.mxu0 %v3668
    %5092 = vmatpush1.bf16.msra.mxu0 %v3667
    %5093 = vmatprep.subr.bf16.mxu0 %v3672
    %5094 = vmatpush1.bf16.msra.mxu0 %v3671
    %5095 = vmatprep.mubr.bf16.mxu0 %v1012
    %5096 = vmatmul.mubr.bf16.gmra.mrb[0].mxu0 %v1011
    %v5097 = vpop.f32.mrb[0].mxu0
    %v5098 = vadd.f32 %v5055, %v5097
    %v5099 = vpop.f32.mrb[0].mxu0
    %v5100 = vadd.f32 %v5057, %v5099
    %v5101 = vpop.f32.mrb[0].mxu0
    %v5102 = vadd.f32 %v5059, %v5101
    %v5103 = vpop.f32.mrb[0].mxu0
    %v5104 = vadd.f32 %v5061, %v5103
    %5105 = vdwg.mxu0
    %5106 = vmatprep.subr.bf16.mxu0 %v3676
    %5107 = vmatpush1.bf16.msra.mxu0 %v3675
    %5108 = vmatprep.subr.bf16.mxu0 %v3680
    %5109 = vmatpush1.bf16.msra.mxu0 %v3679
    %5110 = vmatprep.subr.bf16.mxu0 %v3684
    %5111 = vmatpush1.bf16.msra.mxu0 %v3683
    %5112 = vmatprep.subr.bf16.mxu0 %v3688
    %5113 = vmatpush1.bf16.msra.mxu0 %v3687
    %5114 = vmatprep.subr.bf16.mxu0 %v3692
    %5115 = vmatpush1.bf16.msra.mxu0 %v3691
    %5116 = vmatprep.subr.bf16.mxu0 %v3696
    %5117 = vmatpush1.bf16.msra.mxu0 %v3695
    %5118 = vmatprep.subr.bf16.mxu0 %v3700
    %5119 = vmatpush1.bf16.msra.mxu0 %v3699
    %5120 = vmatprep.subr.bf16.mxu0 %v3704
    %5121 = vmatpush1.bf16.msra.mxu0 %v3703
    %5122 = vmatprep.subr.bf16.mxu0 %v3708
    %5123 = vmatpush1.bf16.msra.mxu0 %v3707
    %5124 = vmatprep.subr.bf16.mxu0 %v3712
    %5125 = vmatpush1.bf16.msra.mxu0 %v3711
    %5126 = vmatprep.subr.bf16.mxu0 %v3716
    %5127 = vmatpush1.bf16.msra.mxu0 %v3715
    %5128 = vmatprep.subr.bf16.mxu0 %v3720
    %5129 = vmatpush1.bf16.msra.mxu0 %v3719
    %5130 = vmatprep.subr.bf16.mxu0 %v3724
    %5131 = vmatpush1.bf16.msra.mxu0 %v3723
    %5132 = vmatprep.subr.bf16.mxu0 %v3728
    %5133 = vmatpush1.bf16.msra.mxu0 %v3727
    %5134 = vmatprep.subr.bf16.mxu0 %v3732
    %5135 = vmatpush1.bf16.msra.mxu0 %v3731
    %5136 = vmatprep.subr.bf16.mxu0 %v3736
    %5137 = vmatpush1.bf16.msra.mxu0 %v3735
    %5138 = vmatprep.mubr.bf16.mxu0 %v1014
    %5139 = vmatmul.mubr.bf16.gmra.mrb[0].mxu0 %v1013
    %v5140 = vpop.f32.mrb[0].mxu0
    %v5141 = vadd.f32 %v5098, %v5140
    %v5142 = vpop.f32.mrb[0].mxu0
    %v5143 = vadd.f32 %v5100, %v5142
    %v5144 = vpop.f32.mrb[0].mxu0
    %v5145 = vadd.f32 %v5102, %v5144
    %v5146 = vpop.f32.mrb[0].mxu0
    %v5147 = vadd.f32 %v5104, %v5146
    %5148 = vdwg.mxu0
    %5149 = vmatprep.subr.bf16.mxu0 %v3740
    %5150 = vmatpush1.bf16.msra.mxu0 %v3739
    %5151 = vmatprep.subr.bf16.mxu0 %v3744
    %5152 = vmatpush1.bf16.msra.mxu0 %v3743
    %5153 = vmatprep.subr.bf16.mxu0 %v3748
    %5154 = vmatpush1.bf16.msra.mxu0 %v3747
    %5155 = vmatprep.subr.bf16.mxu0 %v3752
    %5156 = vmatpush1.bf16.msra.mxu0 %v3751
    %5157 = vmatprep.subr.bf16.mxu0 %v3756
    %5158 = vmatpush1.bf16.msra.mxu0 %v3755
    %5159 = vmatprep.subr.bf16.mxu0 %v3760
    %5160 = vmatpush1.bf16.msra.mxu0 %v3759
    %5161 = vmatprep.subr.bf16.mxu0 %v3764
    %5162 = vmatpush1.bf16.msra.mxu0 %v3763
    %5163 = vmatprep.subr.bf16.mxu0 %v3768
    %5164 = vmatpush1.bf16.msra.mxu0 %v3767
    %5165 = vmatprep.subr.bf16.mxu0 %v3772
    %5166 = vmatpush1.bf16.msra.mxu0 %v3771
    %5167 = vmatprep.subr.bf16.mxu0 %v3776
    %5168 = vmatpush1.bf16.msra.mxu0 %v3775
    %5169 = vmatprep.subr.bf16.mxu0 %v3780
    %5170 = vmatpush1.bf16.msra.mxu0 %v3779
    %5171 = vmatprep.subr.bf16.mxu0 %v3784
    %5172 = vmatpush1.bf16.msra.mxu0 %v3783
    %5173 = vmatprep.subr.bf16.mxu0 %v3788
    %5174 = vmatpush1.bf16.msra.mxu0 %v3787
    %5175 = vmatprep.subr.bf16.mxu0 %v3792
    %5176 = vmatpush1.bf16.msra.mxu0 %v3791
    %5177 = vmatprep.subr.bf16.mxu0 %v3796
    %5178 = vmatpush1.bf16.msra.mxu0 %v3795
    %5179 = vmatprep.subr.bf16.mxu0 %v3800
    %5180 = vmatpush1.bf16.msra.mxu0 %v3799
    %5181 = vmatprep.mubr.bf16.mxu0 %v1016
    %5182 = vmatmul.mubr.bf16.gmra.mrb[0].mxu0 %v1015
    %v5183 = vpop.f32.mrb[0].mxu0
    %v5184 = vadd.f32 %v5141, %v5183
    %v5185 = vpop.f32.mrb[0].mxu0
    %v5186 = vadd.f32 %v5143, %v5185
    %v5187 = vpop.f32.mrb[0].mxu0
    %v5188 = vadd.f32 %v5145, %v5187
    %v5189 = vpop.f32.mrb[0].mxu0
    %v5190 = vadd.f32 %v5147, %v5189
    %5191 = vdwg.mxu0
    %5192 = vmatprep.subr.bf16.mxu0 %v3804
    %5193 = vmatpush1.bf16.msra.mxu0 %v3803
    %5194 = vmatprep.subr.bf16.mxu0 %v3808
    %5195 = vmatpush1.bf16.msra.mxu0 %v3807
    %5196 = vmatprep.subr.bf16.mxu0 %v3812
    %5197 = vmatpush1.bf16.msra.mxu0 %v3811
    %5198 = vmatprep.subr.bf16.mxu0 %v3816
    %5199 = vmatpush1.bf16.msra.mxu0 %v3815
    %5200 = vmatprep.subr.bf16.mxu0 %v3820
    %5201 = vmatpush1.bf16.msra.mxu0 %v3819
    %5202 = vmatprep.subr.bf16.mxu0 %v3824
    %5203 = vmatpush1.bf16.msra.mxu0 %v3823
    %5204 = vmatprep.subr.bf16.mxu0 %v3828
    %5205 = vmatpush1.bf16.msra.mxu0 %v3827
    %5206 = vmatprep.subr.bf16.mxu0 %v3832
    %5207 = vmatpush1.bf16.msra.mxu0 %v3831
    %5208 = vmatprep.subr.bf16.mxu0 %v3836
    %5209 = vmatpush1.bf16.msra.mxu0 %v3835
    %5210 = vmatprep.subr.bf16.mxu0 %v3840
    %5211 = vmatpush1.bf16.msra.mxu0 %v3839
    %5212 = vmatprep.subr.bf16.mxu0 %v3844
    %5213 = vmatpush1.bf16.msra.mxu0 %v3843
    %5214 = vmatprep.subr.bf16.mxu0 %v3848
    %5215 = vmatpush1.bf16.msra.mxu0 %v3847
    %5216 = vmatprep.subr.bf16.mxu0 %v3852
    %5217 = vmatpush1.bf16.msra.mxu0 %v3851
    %5218 = vmatprep.subr.bf16.mxu0 %v3856
    %5219 = vmatpush1.bf16.msra.mxu0 %v3855
    %5220 = vmatprep.subr.bf16.mxu0 %v3860
    %5221 = vmatpush1.bf16.msra.mxu0 %v3859
    %5222 = vmatprep.subr.bf16.mxu0 %v3864
    %5223 = vmatpush1.bf16.msra.mxu0 %v3863
    %5224 = vmatprep.mubr.bf16.mxu0 %v1018
    %5225 = vmatmul.mubr.bf16.gmra.mrb[0].mxu0 %v1017
    %v5226 = vpop.f32.mrb[0].mxu0
    %v5227 = vadd.f32 %v5184, %v5226
    %v5228 = vpop.f32.mrb[0].mxu0
    %v5229 = vadd.f32 %v5186, %v5228
    %v5230 = vpop.f32.mrb[0].mxu0
    %v5231 = vadd.f32 %v5188, %v5230
    %v5232 = vpop.f32.mrb[0].mxu0
    %v5233 = vadd.f32 %v5190, %v5232
    %5234 = vdwg.mxu0
    %5235 = vmatprep.subr.bf16.mxu0 %v3868
    %5236 = vmatpush1.bf16.msra.mxu0 %v3867
    %5237 = vmatprep.subr.bf16.mxu0 %v3872
    %5238 = vmatpush1.bf16.msra.mxu0 %v3871
    %5239 = vmatprep.subr.bf16.mxu0 %v3876
    %5240 = vmatpush1.bf16.msra.mxu0 %v3875
    %5241 = vmatprep.subr.bf16.mxu0 %v3880
    %5242 = vmatpush1.bf16.msra.mxu0 %v3879
    %5243 = vmatprep.subr.bf16.mxu0 %v3884
    %5244 = vmatpush1.bf16.msra.mxu0 %v3883
    %5245 = vmatprep.subr.bf16.mxu0 %v3888
    %5246 = vmatpush1.bf16.msra.mxu0 %v3887
    %5247 = vmatprep.subr.bf16.mxu0 %v3892
    %5248 = vmatpush1.bf16.msra.mxu0 %v3891
    %5249 = vmatprep.subr.bf16.mxu0 %v3896
    %5250 = vmatpush1.bf16.msra.mxu0 %v3895
    %5251 = vmatprep.subr.bf16.mxu0 %v3900
    %5252 = vmatpush1.bf16.msra.mxu0 %v3899
    %5253 = vmatprep.subr.bf16.mxu0 %v3904
    %5254 = vmatpush1.bf16.msra.mxu0 %v3903
    %5255 = vmatprep.subr.bf16.mxu0 %v3908
    %5256 = vmatpush1.bf16.msra.mxu0 %v3907
    %5257 = vmatprep.subr.bf16.mxu0 %v3912
    %5258 = vmatpush1.bf16.msra.mxu0 %v3911
    %5259 = vmatprep.subr.bf16.mxu0 %v3916
    %5260 = vmatpush1.bf16.msra.mxu0 %v3915
    %5261 = vmatprep.subr.bf16.mxu0 %v3920
    %5262 = vmatpush1.bf16.msra.mxu0 %v3919
    %5263 = vmatprep.subr.bf16.mxu0 %v3924
    %5264 = vmatpush1.bf16.msra.mxu0 %v3923
    %5265 = vmatprep.subr.bf16.mxu0 %v3928
    %5266 = vmatpush1.bf16.msra.mxu0 %v3927
    %5267 = vmatprep.mubr.bf16.mxu0 %v1020
    %5268 = vmatmul.mubr.bf16.gmra.mrb[0].mxu0 %v1019
    %v5269 = vpop.f32.mrb[0].mxu0
    %v5270 = vadd.f32 %v5227, %v5269
    %v5271 = vpop.f32.mrb[0].mxu0
    %v5272 = vadd.f32 %v5229, %v5271
    %v5273 = vpop.f32.mrb[0].mxu0
    %v5274 = vadd.f32 %v5231, %v5273
    %v5275 = vpop.f32.mrb[0].mxu0
    %v5276 = vadd.f32 %v5233, %v5275
    %5277 = vdwg.mxu0
    %5278 = vmatprep.subr.bf16.mxu0 %v3932
    %5279 = vmatpush1.bf16.msra.mxu0 %v3931
    %5280 = vmatprep.subr.bf16.mxu0 %v3936
    %5281 = vmatpush1.bf16.msra.mxu0 %v3935
    %5282 = vmatprep.subr.bf16.mxu0 %v3940
    %5283 = vmatpush1.bf16.msra.mxu0 %v3939
    %5284 = vmatprep.subr.bf16.mxu0 %v3944
    %5285 = vmatpush1.bf16.msra.mxu0 %v3943
    %5286 = vmatprep.subr.bf16.mxu0 %v3948
    %5287 = vmatpush1.bf16.msra.mxu0 %v3947
    %5288 = vmatprep.subr.bf16.mxu0 %v3952
    %5289 = vmatpush1.bf16.msra.mxu0 %v3951
    %5290 = vmatprep.subr.bf16.mxu0 %v3956
    %5291 = vmatpush1.bf16.msra.mxu0 %v3955
    %5292 = vmatprep.subr.bf16.mxu0 %v3960
    %5293 = vmatpush1.bf16.msra.mxu0 %v3959
    %5294 = vmatprep.subr.bf16.mxu0 %v3964
    %5295 = vmatpush1.bf16.msra.mxu0 %v3963
    %5296 = vmatprep.subr.bf16.mxu0 %v3968
    %5297 = vmatpush1.bf16.msra.mxu0 %v3967
    %5298 = vmatprep.subr.bf16.mxu0 %v3972
    %5299 = vmatpush1.bf16.msra.mxu0 %v3971
    %5300 = vmatprep.subr.bf16.mxu0 %v3976
    %5301 = vmatpush1.bf16.msra.mxu0 %v3975
    %5302 = vmatprep.subr.bf16.mxu0 %v3980
    %5303 = vmatpush1.bf16.msra.mxu0 %v3979
    %5304 = vmatprep.subr.bf16.mxu0 %v3984
    %5305 = vmatpush1.bf16.msra.mxu0 %v3983
    %5306 = vmatprep.subr.bf16.mxu0 %v3988
    %5307 = vmatpush1.bf16.msra.mxu0 %v3987
    %5308 = vmatprep.subr.bf16.mxu0 %v3992
    %5309 = vmatpush1.bf16.msra.mxu0 %v3991
    %5310 = vmatprep.mubr.bf16.mxu0 %v1022
    %5311 = vmatmul.mubr.bf16.gmra.mrb[0].mxu0 %v1021
    %v5312 = vpop.f32.mrb[0].mxu0
    %v5313 = vadd.f32 %v5270, %v5312
    %v5314 = vpop.f32.mrb[0].mxu0
    %v5315 = vadd.f32 %v5272, %v5314
    %v5316 = vpop.f32.mrb[0].mxu0
    %v5317 = vadd.f32 %v5274, %v5316
    %v5318 = vpop.f32.mrb[0].mxu0
    %v5319 = vadd.f32 %v5276, %v5318
    %5320 = vdwg.mxu0
    %5321 = vmatprep.subr.bf16.mxu0 %v3996
    %5322 = vmatpush1.bf16.msra.mxu0 %v3995
    %5323 = vmatprep.subr.bf16.mxu0 %v4000
    %5324 = vmatpush1.bf16.msra.mxu0 %v3999
    %5325 = vmatprep.subr.bf16.mxu0 %v4004
    %5326 = vmatpush1.bf16.msra.mxu0 %v4003
    %5327 = vmatprep.subr.bf16.mxu0 %v4008
    %5328 = vmatpush1.bf16.msra.mxu0 %v4007
    %5329 = vmatprep.subr.bf16.mxu0 %v4012
    %5330 = vmatpush1.bf16.msra.mxu0 %v4011
    %5331 = vmatprep.subr.bf16.mxu0 %v4016
    %5332 = vmatpush1.bf16.msra.mxu0 %v4015
    %5333 = vmatprep.subr.bf16.mxu0 %v4020
    %5334 = vmatpush1.bf16.msra.mxu0 %v4019
    %5335 = vmatprep.subr.bf16.mxu0 %v4024
    %5336 = vmatpush1.bf16.msra.mxu0 %v4023
    %5337 = vmatprep.subr.bf16.mxu0 %v4028
    %5338 = vmatpush1.bf16.msra.mxu0 %v4027
    %5339 = vmatprep.subr.bf16.mxu0 %v4032
    %5340 = vmatpush1.bf16.msra.mxu0 %v4031
    %5341 = vmatprep.subr.bf16.mxu0 %v4036
    %5342 = vmatpush1.bf16.msra.mxu0 %v4035
    %5343 = vmatprep.subr.bf16.mxu0 %v4040
    %5344 = vmatpush1.bf16.msra.mxu0 %v4039
    %5345 = vmatprep.subr.bf16.mxu0 %v4044
    %5346 = vmatpush1.bf16.msra.mxu0 %v4043
    %5347 = vmatprep.subr.bf16.mxu0 %v4048
    %5348 = vmatpush1.bf16.msra.mxu0 %v4047
    %5349 = vmatprep.subr.bf16.mxu0 %v4052
    %5350 = vmatpush1.bf16.msra.mxu0 %v4051
    %5351 = vmatprep.subr.bf16.mxu0 %v4056
    %5352 = vmatpush1.bf16.msra.mxu0 %v4055
    %5353 = vmatprep.mubr.bf16.mxu0 %v1024
    %5354 = vmatmul.mubr.bf16.gmra.mrb[0].mxu0 %v1023
    %v5355 = vpop.f32.mrb[0].mxu0
    %v5356 = vadd.f32 %v5313, %v5355
    %v5357 = vpop.f32.mrb[0].mxu0
    %v5358 = vadd.f32 %v5315, %v5357
    %v5359 = vpop.f32.mrb[0].mxu0
    %v5360 = vadd.f32 %v5317, %v5359
    %v5361 = vpop.f32.mrb[0].mxu0
    %v5362 = vadd.f32 %v5319, %v5361
    %5363 = vdwg.mxu0
    %5364 = vmatprep.subr.bf16.mxu0 %v4060
    %5365 = vmatpush1.bf16.msra.mxu0 %v4059
    %5366 = vmatprep.subr.bf16.mxu0 %v4064
    %5367 = vmatpush1.bf16.msra.mxu0 %v4063
    %5368 = vmatprep.subr.bf16.mxu0 %v4068
    %5369 = vmatpush1.bf16.msra.mxu0 %v4067
    %5370 = vmatprep.subr.bf16.mxu0 %v4072
    %5371 = vmatpush1.bf16.msra.mxu0 %v4071
    %5372 = vmatprep.subr.bf16.mxu0 %v4076
    %5373 = vmatpush1.bf16.msra.mxu0 %v4075
    %5374 = vmatprep.subr.bf16.mxu0 %v4080
    %5375 = vmatpush1.bf16.msra.mxu0 %v4079
    %5376 = vmatprep.subr.bf16.mxu0 %v4084
    %5377 = vmatpush1.bf16.msra.mxu0 %v4083
    %5378 = vmatprep.subr.bf16.mxu0 %v4088
    %5379 = vmatpush1.bf16.msra.mxu0 %v4087
    %5380 = vmatprep.subr.bf16.mxu0 %v4092
    %5381 = vmatpush1.bf16.msra.mxu0 %v4091
    %5382 = vmatprep.subr.bf16.mxu0 %v4096
    %5383 = vmatpush1.bf16.msra.mxu0 %v4095
    %5384 = vmatprep.subr.bf16.mxu0 %v4100
    %5385 = vmatpush1.bf16.msra.mxu0 %v4099
    %5386 = vmatprep.subr.bf16.mxu0 %v4104
    %5387 = vmatpush1.bf16.msra.mxu0 %v4103
    %5388 = vmatprep.subr.bf16.mxu0 %v4108
    %5389 = vmatpush1.bf16.msra.mxu0 %v4107
    %5390 = vmatprep.subr.bf16.mxu0 %v4112
    %5391 = vmatpush1.bf16.msra.mxu0 %v4111
    %5392 = vmatprep.subr.bf16.mxu0 %v4116
    %5393 = vmatpush1.bf16.msra.mxu0 %v4115
    %5394 = vmatprep.subr.bf16.mxu0 %v4120
    %5395 = vmatpush1.bf16.msra.mxu0 %v4119
    %5396 = vmatprep.mubr.bf16.mxu0 %v1026
    %5397 = vmatmul.mubr.bf16.gmra.mrb[0].mxu0 %v1025
    %v5398 = vpop.f32.mrb[0].mxu0
    %v5399 = vadd.f32 %v5356, %v5398
    %v5400 = vpop.f32.mrb[0].mxu0
    %v5401 = vadd.f32 %v5358, %v5400
    %v5402 = vpop.f32.mrb[0].mxu0
    %v5403 = vadd.f32 %v5360, %v5402
    %v5404 = vpop.f32.mrb[0].mxu0
    %v5405 = vadd.f32 %v5362, %v5404
    %5406 = vdwg.mxu0
    %5407 = vmatprep.subr.bf16.mxu0 %v3358
    %5408 = vmatpush1.bf16.msra.mxu0 %v3357
    %5409 = vmatprep.subr.bf16.mxu0 %v3362
    %5410 = vmatpush1.bf16.msra.mxu0 %v3361
    %5411 = vmatprep.subr.bf16.mxu0 %v3366
    %5412 = vmatpush1.bf16.msra.mxu0 %v3365
    %5413 = vmatprep.subr.bf16.mxu0 %v3370
    %5414 = vmatpush1.bf16.msra.mxu0 %v3369
    %5415 = vmatprep.subr.bf16.mxu0 %v3374
    %5416 = vmatpush1.bf16.msra.mxu0 %v3373
    %5417 = vmatprep.subr.bf16.mxu0 %v3378
    %5418 = vmatpush1.bf16.msra.mxu0 %v3377
    %5419 = vmatprep.subr.bf16.mxu0 %v3382
    %5420 = vmatpush1.bf16.msra.mxu0 %v3381
    %5421 = vmatprep.subr.bf16.mxu0 %v3386
    %5422 = vmatpush1.bf16.msra.mxu0 %v3385
    %5423 = vmatprep.subr.bf16.mxu0 %v3390
    %5424 = vmatpush1.bf16.msra.mxu0 %v3389
    %5425 = vmatprep.subr.bf16.mxu0 %v3394
    %5426 = vmatpush1.bf16.msra.mxu0 %v3393
    %5427 = vmatprep.subr.bf16.mxu0 %v3398
    %5428 = vmatpush1.bf16.msra.mxu0 %v3397
    %5429 = vmatprep.subr.bf16.mxu0 %v3402
    %5430 = vmatpush1.bf16.msra.mxu0 %v3401
    %5431 = vmatprep.subr.bf16.mxu0 %v3406
    %5432 = vmatpush1.bf16.msra.mxu0 %v3405
    %5433 = vmatprep.subr.bf16.mxu0 %v3410
    %5434 = vmatpush1.bf16.msra.mxu0 %v3409
    %5435 = vmatprep.subr.bf16.mxu0 %v3414
    %5436 = vmatpush1.bf16.msra.mxu0 %v3413
    %5437 = vmatprep.subr.bf16.mxu0 %v3418
    %5438 = vmatpush1.bf16.msra.mxu0 %v3417
    %5439 = vmatprep.mubr.bf16.mxu0 %v1004
    %5440 = vmatmul.mubr.bf16.gmra.mrb[0].mxu0 %v1003
    %v5441 = vpop.f32.mrb[0].mxu0
    %v5442 = vadd.f32 %v922, %v5441
    %v5443 = vpop.f32.mrb[0].mxu0
    %v5444 = vadd.f32 %v926, %v5443
    %v5445 = vpop.f32.mrb[0].mxu0
    %v5446 = vadd.f32 %v922, %v5445
    %v5447 = vpop.f32.mrb[0].mxu0
    %v5448 = vadd.f32 %v926, %v5447
    %5449 = vdwg.mxu0
    %5450 = vmatprep.subr.bf16.mxu0 %v3422
    %5451 = vmatpush1.bf16.msra.mxu0 %v3421
    %5452 = vmatprep.subr.bf16.mxu0 %v3426
    %5453 = vmatpush1.bf16.msra.mxu0 %v3425
    %5454 = vmatprep.subr.bf16.mxu0 %v3430
    %5455 = vmatpush1.bf16.msra.mxu0 %v3429
    %5456 = vmatprep.subr.bf16.mxu0 %v3434
    %5457 = vmatpush1.bf16.msra.mxu0 %v3433
    %5458 = vmatprep.subr.bf16.mxu0 %v3438
    %5459 = vmatpush1.bf16.msra.mxu0 %v3437
    %5460 = vmatprep.subr.bf16.mxu0 %v3442
    %5461 = vmatpush1.bf16.msra.mxu0 %v3441
    %5462 = vmatprep.subr.bf16.mxu0 %v3446
    %5463 = vmatpush1.bf16.msra.mxu0 %v3445
    %5464 = vmatprep.subr.bf16.mxu0 %v3450
    %5465 = vmatpush1.bf16.msra.mxu0 %v3449
    %5466 = vmatprep.subr.bf16.mxu0 %v3454
    %5467 = vmatpush1.bf16.msra.mxu0 %v3453
    %5468 = vmatprep.subr.bf16.mxu0 %v3458
    %5469 = vmatpush1.bf16.msra.mxu0 %v3457
    %5470 = vmatprep.subr.bf16.mxu0 %v3462
    %5471 = vmatpush1.bf16.msra.mxu0 %v3461
    %5472 = vmatprep.subr.bf16.mxu0 %v3466
    %5473 = vmatpush1.bf16.msra.mxu0 %v3465
    %5474 = vmatprep.subr.bf16.mxu0 %v3470
    %5475 = vmatpush1.bf16.msra.mxu0 %v3469
    %5476 = vmatprep.subr.bf16.mxu0 %v3474
    %5477 = vmatpush1.bf16.msra.mxu0 %v3473
    %5478 = vmatprep.subr.bf16.mxu0 %v3478
    %5479 = vmatpush1.bf16.msra.mxu0 %v3477
    %5480 = vmatprep.subr.bf16.mxu0 %v3482
    %5481 = vmatpush1.bf16.msra.mxu0 %v3481
    %5482 = vmatprep.mubr.bf16.mxu0 %v1006
    %5483 = vmatmul.mubr.bf16.gmra.mrb[0].mxu0 %v1005
    %v5484 = vpop.f32.mrb[0].mxu0
    %v5485 = vadd.f32 %v5442, %v5484
    %v5486 = vpop.f32.mrb[0].mxu0
    %v5487 = vadd.f32 %v5444, %v5486
    %v5488 = vpop.f32.mrb[0].mxu0
    %v5489 = vadd.f32 %v5446, %v5488
    %v5490 = vpop.f32.mrb[0].mxu0
    %v5491 = vadd.f32 %v5448, %v5490
    %5492 = vdwg.mxu0
    %5493 = vmatprep.subr.bf16.mxu0 %v3486
    %5494 = vmatpush1.bf16.msra.mxu0 %v3485
    %5495 = vmatprep.subr.bf16.mxu0 %v3490
    %5496 = vmatpush1.bf16.msra.mxu0 %v3489
    %5497 = vmatprep.subr.bf16.mxu0 %v3494
    %5498 = vmatpush1.bf16.msra.mxu0 %v3493
    %5499 = vmatprep.subr.bf16.mxu0 %v3498
    %5500 = vmatpush1.bf16.msra.mxu0 %v3497
    %5501 = vmatprep.subr.bf16.mxu0 %v3502
    %5502 = vmatpush1.bf16.msra.mxu0 %v3501
    %5503 = vmatprep.subr.bf16.mxu0 %v3506
    %5504 = vmatpush1.bf16.msra.mxu0 %v3505
    %5505 = vmatprep.subr.bf16.mxu0 %v3510
    %5506 = vmatpush1.bf16.msra.mxu0 %v3509
    %5507 = vmatprep.subr.bf16.mxu0 %v3514
    %5508 = vmatpush1.bf16.msra.mxu0 %v3513
    %5509 = vmatprep.subr.bf16.mxu0 %v3518
    %5510 = vmatpush1.bf16.msra.mxu0 %v3517
    %5511 = vmatprep.subr.bf16.mxu0 %v3522
    %5512 = vmatpush1.bf16.msra.mxu0 %v3521
    %5513 = vmatprep.subr.bf16.mxu0 %v3526
    %5514 = vmatpush1.bf16.msra.mxu0 %v3525
    %5515 = vmatprep.subr.bf16.mxu0 %v3530
    %5516 = vmatpush1.bf16.msra.mxu0 %v3529
    %5517 = vmatprep.subr.bf16.mxu0 %v3534
    %5518 = vmatpush1.bf16.msra.mxu0 %v3533
    %5519 = vmatprep.subr.bf16.mxu0 %v3538
    %5520 = vmatpush1.bf16.msra.mxu0 %v3537
    %5521 = vmatprep.subr.bf16.mxu0 %v3542
    %5522 = vmatpush1.bf16.msra.mxu0 %v3541
    %5523 = vmatprep.subr.bf16.mxu0 %v3546
    %5524 = vmatpush1.bf16.msra.mxu0 %v3545
    %5525 = vmatprep.mubr.bf16.mxu0 %v1008
    %5526 = vmatmul.mubr.bf16.gmra.mrb[0].mxu0 %v1007
    %v5527 = vpop.f32.mrb[0].mxu0
    %v5528 = vadd.f32 %v5485, %v5527
    %v5529 = vpop.f32.mrb[0].mxu0
    %v5530 = vadd.f32 %v5487, %v5529
    %v5531 = vpop.f32.mrb[0].mxu0
    %v5532 = vadd.f32 %v5489, %v5531
    %v5533 = vpop.f32.mrb[0].mxu0
    %v5534 = vadd.f32 %v5491, %v5533
    %5535 = vdwg.mxu0
    %5536 = vmatprep.subr.bf16.mxu0 %v3550
    %5537 = vmatpush1.bf16.msra.mxu0 %v3549
    %5538 = vmatprep.subr.bf16.mxu0 %v3554
    %5539 = vmatpush1.bf16.msra.mxu0 %v3553
    %5540 = vmatprep.subr.bf16.mxu0 %v3558
    %5541 = vmatpush1.bf16.msra.mxu0 %v3557
    %5542 = vmatprep.subr.bf16.mxu0 %v3562
    %5543 = vmatpush1.bf16.msra.mxu0 %v3561
    %5544 = vmatprep.subr.bf16.mxu0 %v3566
    %5545 = vmatpush1.bf16.msra.mxu0 %v3565
    %5546 = vmatprep.subr.bf16.mxu0 %v3570
    %5547 = vmatpush1.bf16.msra.mxu0 %v3569
    %5548 = vmatprep.subr.bf16.mxu0 %v3574
    %5549 = vmatpush1.bf16.msra.mxu0 %v3573
    %5550 = vmatprep.subr.bf16.mxu0 %v3578
    %5551 = vmatpush1.bf16.msra.mxu0 %v3577
    %5552 = vmatprep.subr.bf16.mxu0 %v3582
    %5553 = vmatpush1.bf16.msra.mxu0 %v3581
    %5554 = vmatprep.subr.bf16.mxu0 %v3586
    %5555 = vmatpush1.bf16.msra.mxu0 %v3585
    %5556 = vmatprep.subr.bf16.mxu0 %v3590
    %5557 = vmatpush1.bf16.msra.mxu0 %v3589
    %5558 = vmatprep.subr.bf16.mxu0 %v3594
    %5559 = vmatpush1.bf16.msra.mxu0 %v3593
    %5560 = vmatprep.subr.bf16.mxu0 %v3598
    %5561 = vmatpush1.bf16.msra.mxu0 %v3597
    %5562 = vmatprep.subr.bf16.mxu0 %v3602
    %5563 = vmatpush1.bf16.msra.mxu0 %v3601
    %5564 = vmatprep.subr.bf16.mxu0 %v3606
    %5565 = vmatpush1.bf16.msra.mxu0 %v3605
    %5566 = vmatprep.subr.bf16.mxu0 %v3610
    %5567 = vmatpush1.bf16.msra.mxu0 %v3609
    %5568 = vmatprep.mubr.bf16.mxu0 %v1010
    %5569 = vmatmul.mubr.bf16.gmra.mrb[0].mxu0 %v1009
    %v5570 = vpop.f32.mrb[0].mxu0
    %v5571 = vadd.f32 %v5528, %v5570
    %v5572 = vpop.f32.mrb[0].mxu0
    %v5573 = vadd.f32 %v5530, %v5572
    %v5574 = vpop.f32.mrb[0].mxu0
    %v5575 = vadd.f32 %v5532, %v5574
    %v5576 = vpop.f32.mrb[0].mxu0
    %v5577 = vadd.f32 %v5534, %v5576
    %5578 = vdwg.mxu0
    %5579 = vmatprep.subr.bf16.mxu0 %v3614
    %5580 = vmatpush1.bf16.msra.mxu0 %v3613
    %5581 = vmatprep.subr.bf16.mxu0 %v3618
    %5582 = vmatpush1.bf16.msra.mxu0 %v3617
    %5583 = vmatprep.subr.bf16.mxu0 %v3622
    %5584 = vmatpush1.bf16.msra.mxu0 %v3621
    %5585 = vmatprep.subr.bf16.mxu0 %v3626
    %5586 = vmatpush1.bf16.msra.mxu0 %v3625
    %5587 = vmatprep.subr.bf16.mxu0 %v3630
    %5588 = vmatpush1.bf16.msra.mxu0 %v3629
    %5589 = vmatprep.subr.bf16.mxu0 %v3634
    %5590 = vmatpush1.bf16.msra.mxu0 %v3633
    %5591 = vmatprep.subr.bf16.mxu0 %v3638
    %5592 = vmatpush1.bf16.msra.mxu0 %v3637
    %5593 = vmatprep.subr.bf16.mxu0 %v3642
    %5594 = vmatpush1.bf16.msra.mxu0 %v3641
    %5595 = vmatprep.subr.bf16.mxu0 %v3646
    %5596 = vmatpush1.bf16.msra.mxu0 %v3645
    %5597 = vmatprep.subr.bf16.mxu0 %v3650
    %5598 = vmatpush1.bf16.msra.mxu0 %v3649
    %5599 = vmatprep.subr.bf16.mxu0 %v3654
    %5600 = vmatpush1.bf16.msra.mxu0 %v3653
    %5601 = vmatprep.subr.bf16.mxu0 %v3658
    %5602 = vmatpush1.bf16.msra.mxu0 %v3657
    %5603 = vmatprep.subr.bf16.mxu0 %v3662
    %5604 = vmatpush1.bf16.msra.mxu0 %v3661
    %5605 = vmatprep.subr.bf16.mxu0 %v3666
    %5606 = vmatpush1.bf16.msra.mxu0 %v3665
    %5607 = vmatprep.subr.bf16.mxu0 %v3670
    %5608 = vmatpush1.bf16.msra.mxu0 %v3669
    %5609 = vmatprep.subr.bf16.mxu0 %v3674
    %5610 = vmatpush1.bf16.msra.mxu0 %v3673
    %5611 = vmatprep.mubr.bf16.mxu0 %v1012
    %5612 = vmatmul.mubr.bf16.gmra.mrb[0].mxu0 %v1011
    %v5613 = vpop.f32.mrb[0].mxu0
    %v5614 = vadd.f32 %v5571, %v5613
    %v5615 = vpop.f32.mrb[0].mxu0
    %v5616 = vadd.f32 %v5573, %v5615
    %v5617 = vpop.f32.mrb[0].mxu0
    %v5618 = vadd.f32 %v5575, %v5617
    %v5619 = vpop.f32.mrb[0].mxu0
    %v5620 = vadd.f32 %v5577, %v5619
    %5621 = vdwg.mxu0
    %5622 = vmatprep.subr.bf16.mxu0 %v3678
    %5623 = vmatpush1.bf16.msra.mxu0 %v3677
    %5624 = vmatprep.subr.bf16.mxu0 %v3682
    %5625 = vmatpush1.bf16.msra.mxu0 %v3681
    %5626 = vmatprep.subr.bf16.mxu0 %v3686
    %5627 = vmatpush1.bf16.msra.mxu0 %v3685
    %5628 = vmatprep.subr.bf16.mxu0 %v3690
    %5629 = vmatpush1.bf16.msra.mxu0 %v3689
    %5630 = vmatprep.subr.bf16.mxu0 %v3694
    %5631 = vmatpush1.bf16.msra.mxu0 %v3693
    %5632 = vmatprep.subr.bf16.mxu0 %v3698
    %5633 = vmatpush1.bf16.msra.mxu0 %v3697
    %5634 = vmatprep.subr.bf16.mxu0 %v3702
    %5635 = vmatpush1.bf16.msra.mxu0 %v3701
    %5636 = vmatprep.subr.bf16.mxu0 %v3706
    %5637 = vmatpush1.bf16.msra.mxu0 %v3705
    %5638 = vmatprep.subr.bf16.mxu0 %v3710
    %5639 = vmatpush1.bf16.msra.mxu0 %v3709
    %5640 = vmatprep.subr.bf16.mxu0 %v3714
    %5641 = vmatpush1.bf16.msra.mxu0 %v3713
    %5642 = vmatprep.subr.bf16.mxu0 %v3718
    %5643 = vmatpush1.bf16.msra.mxu0 %v3717
    %5644 = vmatprep.subr.bf16.mxu0 %v3722
    %5645 = vmatpush1.bf16.msra.mxu0 %v3721
    %5646 = vmatprep.subr.bf16.mxu0 %v3726
    %5647 = vmatpush1.bf16.msra.mxu0 %v3725
    %5648 = vmatprep.subr.bf16.mxu0 %v3730
    %5649 = vmatpush1.bf16.msra.mxu0 %v3729
    %5650 = vmatprep.subr.bf16.mxu0 %v3734
    %5651 = vmatpush1.bf16.msra.mxu0 %v3733
    %5652 = vmatprep.subr.bf16.mxu0 %v3738
    %5653 = vmatpush1.bf16.msra.mxu0 %v3737
    %5654 = vmatprep.mubr.bf16.mxu0 %v1014
    %5655 = vmatmul.mubr.bf16.gmra.mrb[0].mxu0 %v1013
    %v5656 = vpop.f32.mrb[0].mxu0
    %v5657 = vadd.f32 %v5614, %v5656
    %v5658 = vpop.f32.mrb[0].mxu0
    %v5659 = vadd.f32 %v5616, %v5658
    %v5660 = vpop.f32.mrb[0].mxu0
    %v5661 = vadd.f32 %v5618, %v5660
    %v5662 = vpop.f32.mrb[0].mxu0
    %v5663 = vadd.f32 %v5620, %v5662
    %5664 = vdwg.mxu0
    %5665 = vmatprep.subr.bf16.mxu0 %v3742
    %5666 = vmatpush1.bf16.msra.mxu0 %v3741
    %5667 = vmatprep.subr.bf16.mxu0 %v3746
    %5668 = vmatpush1.bf16.msra.mxu0 %v3745
    %5669 = vmatprep.subr.bf16.mxu0 %v3750
    %5670 = vmatpush1.bf16.msra.mxu0 %v3749
    %5671 = vmatprep.subr.bf16.mxu0 %v3754
    %5672 = vmatpush1.bf16.msra.mxu0 %v3753
    %5673 = vmatprep.subr.bf16.mxu0 %v3758
    %5674 = vmatpush1.bf16.msra.mxu0 %v3757
    %5675 = vmatprep.subr.bf16.mxu0 %v3762
    %5676 = vmatpush1.bf16.msra.mxu0 %v3761
    %5677 = vmatprep.subr.bf16.mxu0 %v3766
    %5678 = vmatpush1.bf16.msra.mxu0 %v3765
    %5679 = vmatprep.subr.bf16.mxu0 %v3770
    %5680 = vmatpush1.bf16.msra.mxu0 %v3769
    %5681 = vmatprep.subr.bf16.mxu0 %v3774
    %5682 = vmatpush1.bf16.msra.mxu0 %v3773
    %5683 = vmatprep.subr.bf16.mxu0 %v3778
    %5684 = vmatpush1.bf16.msra.mxu0 %v3777
    %5685 = vmatprep.subr.bf16.mxu0 %v3782
    %5686 = vmatpush1.bf16.msra.mxu0 %v3781
    %5687 = vmatprep.subr.bf16.mxu0 %v3786
    %5688 = vmatpush1.bf16.msra.mxu0 %v3785
    %5689 = vmatprep.subr.bf16.mxu0 %v3790
    %5690 = vmatpush1.bf16.msra.mxu0 %v3789
    %5691 = vmatprep.subr.bf16.mxu0 %v3794
    %5692 = vmatpush1.bf16.msra.mxu0 %v3793
    %5693 = vmatprep.subr.bf16.mxu0 %v3798
    %5694 = vmatpush1.bf16.msra.mxu0 %v3797
    %5695 = vmatprep.subr.bf16.mxu0 %v3802
    %5696 = vmatpush1.bf16.msra.mxu0 %v3801
    %5697 = vmatprep.mubr.bf16.mxu0 %v1016
    %5698 = vmatmul.mubr.bf16.gmra.mrb[0].mxu0 %v1015
    %v5699 = vpop.f32.mrb[0].mxu0
    %v5700 = vadd.f32 %v5657, %v5699
    %v5701 = vpop.f32.mrb[0].mxu0
    %v5702 = vadd.f32 %v5659, %v5701
    %v5703 = vpop.f32.mrb[0].mxu0
    %v5704 = vadd.f32 %v5661, %v5703
    %v5705 = vpop.f32.mrb[0].mxu0
    %v5706 = vadd.f32 %v5663, %v5705
    %5707 = vdwg.mxu0
    %5708 = vmatprep.subr.bf16.mxu0 %v3806
    %5709 = vmatpush1.bf16.msra.mxu0 %v3805
    %5710 = vmatprep.subr.bf16.mxu0 %v3810
    %5711 = vmatpush1.bf16.msra.mxu0 %v3809
    %5712 = vmatprep.subr.bf16.mxu0 %v3814
    %5713 = vmatpush1.bf16.msra.mxu0 %v3813
    %5714 = vmatprep.subr.bf16.mxu0 %v3818
    %5715 = vmatpush1.bf16.msra.mxu0 %v3817
    %5716 = vmatprep.subr.bf16.mxu0 %v3822
    %5717 = vmatpush1.bf16.msra.mxu0 %v3821
    %5718 = vmatprep.subr.bf16.mxu0 %v3826
    %5719 = vmatpush1.bf16.msra.mxu0 %v3825
    %5720 = vmatprep.subr.bf16.mxu0 %v3830
    %5721 = vmatpush1.bf16.msra.mxu0 %v3829
    %5722 = vmatprep.subr.bf16.mxu0 %v3834
    %5723 = vmatpush1.bf16.msra.mxu0 %v3833
    %5724 = vmatprep.subr.bf16.mxu0 %v3838
    %5725 = vmatpush1.bf16.msra.mxu0 %v3837
    %5726 = vmatprep.subr.bf16.mxu0 %v3842
    %5727 = vmatpush1.bf16.msra.mxu0 %v3841
    %5728 = vmatprep.subr.bf16.mxu0 %v3846
    %5729 = vmatpush1.bf16.msra.mxu0 %v3845
    %5730 = vmatprep.subr.bf16.mxu0 %v3850
    %5731 = vmatpush1.bf16.msra.mxu0 %v3849
    %5732 = vmatprep.subr.bf16.mxu0 %v3854
    %5733 = vmatpush1.bf16.msra.mxu0 %v3853
    %5734 = vmatprep.subr.bf16.mxu0 %v3858
    %5735 = vmatpush1.bf16.msra.mxu0 %v3857
    %5736 = vmatprep.subr.bf16.mxu0 %v3862
    %5737 = vmatpush1.bf16.msra.mxu0 %v3861
    %5738 = vmatprep.subr.bf16.mxu0 %v3866
    %5739 = vmatpush1.bf16.msra.mxu0 %v3865
    %5740 = vmatprep.mubr.bf16.mxu0 %v1018
    %5741 = vmatmul.mubr.bf16.gmra.mrb[0].mxu0 %v1017
    %v5742 = vpop.f32.mrb[0].mxu0
    %v5743 = vadd.f32 %v5700, %v5742
    %v5744 = vpop.f32.mrb[0].mxu0
    %v5745 = vadd.f32 %v5702, %v5744
    %v5746 = vpop.f32.mrb[0].mxu0
    %v5747 = vadd.f32 %v5704, %v5746
    %v5748 = vpop.f32.mrb[0].mxu0
    %v5749 = vadd.f32 %v5706, %v5748
    %5750 = vdwg.mxu0
    %5751 = vmatprep.subr.bf16.mxu0 %v3870
    %5752 = vmatpush1.bf16.msra.mxu0 %v3869
    %5753 = vmatprep.subr.bf16.mxu0 %v3874
    %5754 = vmatpush1.bf16.msra.mxu0 %v3873
    %5755 = vmatprep.subr.bf16.mxu0 %v3878
    %5756 = vmatpush1.bf16.msra.mxu0 %v3877
    %5757 = vmatprep.subr.bf16.mxu0 %v3882
    %5758 = vmatpush1.bf16.msra.mxu0 %v3881
    %5759 = vmatprep.subr.bf16.mxu0 %v3886
    %5760 = vmatpush1.bf16.msra.mxu0 %v3885
    %5761 = vmatprep.subr.bf16.mxu0 %v3890
    %5762 = vmatpush1.bf16.msra.mxu0 %v3889
    %5763 = vmatprep.subr.bf16.mxu0 %v3894
    %5764 = vmatpush1.bf16.msra.mxu0 %v3893
    %5765 = vmatprep.subr.bf16.mxu0 %v3898
    %5766 = vmatpush1.bf16.msra.mxu0 %v3897
    %5767 = vmatprep.subr.bf16.mxu0 %v3902
    %5768 = vmatpush1.bf16.msra.mxu0 %v3901
    %5769 = vmatprep.subr.bf16.mxu0 %v3906
    %5770 = vmatpush1.bf16.msra.mxu0 %v3905
    %5771 = vmatprep.subr.bf16.mxu0 %v3910
    %5772 = vmatpush1.bf16.msra.mxu0 %v3909
    %5773 = vmatprep.subr.bf16.mxu0 %v3914
    %5774 = vmatpush1.bf16.msra.mxu0 %v3913
    %5775 = vmatprep.subr.bf16.mxu0 %v3918
    %5776 = vmatpush1.bf16.msra.mxu0 %v3917
    %5777 = vmatprep.subr.bf16.mxu0 %v3922
    %5778 = vmatpush1.bf16.msra.mxu0 %v3921
    %5779 = vmatprep.subr.bf16.mxu0 %v3926
    %5780 = vmatpush1.bf16.msra.mxu0 %v3925
    %5781 = vmatprep.subr.bf16.mxu0 %v3930
    %5782 = vmatpush1.bf16.msra.mxu0 %v3929
    %5783 = vmatprep.mubr.bf16.mxu0 %v1020
    %5784 = vmatmul.mubr.bf16.gmra.mrb[0].mxu0 %v1019
    %v5785 = vpop.f32.mrb[0].mxu0
    %v5786 = vadd.f32 %v5743, %v5785
    %v5787 = vpop.f32.mrb[0].mxu0
    %v5788 = vadd.f32 %v5745, %v5787
    %v5789 = vpop.f32.mrb[0].mxu0
    %v5790 = vadd.f32 %v5747, %v5789
    %v5791 = vpop.f32.mrb[0].mxu0
    %v5792 = vadd.f32 %v5749, %v5791
    %5793 = vdwg.mxu0
    %5794 = vmatprep.subr.bf16.mxu0 %v3934
    %5795 = vmatpush1.bf16.msra.mxu0 %v3933
    %5796 = vmatprep.subr.bf16.mxu0 %v3938
    %5797 = vmatpush1.bf16.msra.mxu0 %v3937
    %5798 = vmatprep.subr.bf16.mxu0 %v3942
    %5799 = vmatpush1.bf16.msra.mxu0 %v3941
    %5800 = vmatprep.subr.bf16.mxu0 %v3946
    %5801 = vmatpush1.bf16.msra.mxu0 %v3945
    %5802 = vmatprep.subr.bf16.mxu0 %v3950
    %5803 = vmatpush1.bf16.msra.mxu0 %v3949
    %5804 = vmatprep.subr.bf16.mxu0 %v3954
    %5805 = vmatpush1.bf16.msra.mxu0 %v3953
    %5806 = vmatprep.subr.bf16.mxu0 %v3958
    %5807 = vmatpush1.bf16.msra.mxu0 %v3957
    %5808 = vmatprep.subr.bf16.mxu0 %v3962
    %5809 = vmatpush1.bf16.msra.mxu0 %v3961
    %5810 = vmatprep.subr.bf16.mxu0 %v3966
    %5811 = vmatpush1.bf16.msra.mxu0 %v3965
    %5812 = vmatprep.subr.bf16.mxu0 %v3970
    %5813 = vmatpush1.bf16.msra.mxu0 %v3969
    %5814 = vmatprep.subr.bf16.mxu0 %v3974
    %5815 = vmatpush1.bf16.msra.mxu0 %v3973
    %5816 = vmatprep.subr.bf16.mxu0 %v3978
    %5817 = vmatpush1.bf16.msra.mxu0 %v3977
    %5818 = vmatprep.subr.bf16.mxu0 %v3982
    %5819 = vmatpush1.bf16.msra.mxu0 %v3981
    %5820 = vmatprep.subr.bf16.mxu0 %v3986
    %5821 = vmatpush1.bf16.msra.mxu0 %v3985
    %5822 = vmatprep.subr.bf16.mxu0 %v3990
    %5823 = vmatpush1.bf16.msra.mxu0 %v3989
    %5824 = vmatprep.subr.bf16.mxu0 %v3994
    %5825 = vmatpush1.bf16.msra.mxu0 %v3993
    %5826 = vmatprep.mubr.bf16.mxu0 %v1022
    %5827 = vmatmul.mubr.bf16.gmra.mrb[0].mxu0 %v1021
    %v5828 = vpop.f32.mrb[0].mxu0
    %v5829 = vadd.f32 %v5786, %v5828
    %v5830 = vpop.f32.mrb[0].mxu0
    %v5831 = vadd.f32 %v5788, %v5830
    %v5832 = vpop.f32.mrb[0].mxu0
    %v5833 = vadd.f32 %v5790, %v5832
    %v5834 = vpop.f32.mrb[0].mxu0
    %v5835 = vadd.f32 %v5792, %v5834
    %5836 = vdwg.mxu0
    %5837 = vmatprep.subr.bf16.mxu0 %v3998
    %5838 = vmatpush1.bf16.msra.mxu0 %v3997
    %5839 = vmatprep.subr.bf16.mxu0 %v4002
    %5840 = vmatpush1.bf16.msra.mxu0 %v4001
    %5841 = vmatprep.subr.bf16.mxu0 %v4006
    %5842 = vmatpush1.bf16.msra.mxu0 %v4005
    %5843 = vmatprep.subr.bf16.mxu0 %v4010
    %5844 = vmatpush1.bf16.msra.mxu0 %v4009
    %5845 = vmatprep.subr.bf16.mxu0 %v4014
    %5846 = vmatpush1.bf16.msra.mxu0 %v4013
    %5847 = vmatprep.subr.bf16.mxu0 %v4018
    %5848 = vmatpush1.bf16.msra.mxu0 %v4017
    %5849 = vmatprep.subr.bf16.mxu0 %v4022
    %5850 = vmatpush1.bf16.msra.mxu0 %v4021
    %5851 = vmatprep.subr.bf16.mxu0 %v4026
    %5852 = vmatpush1.bf16.msra.mxu0 %v4025
    %5853 = vmatprep.subr.bf16.mxu0 %v4030
    %5854 = vmatpush1.bf16.msra.mxu0 %v4029
    %5855 = vmatprep.subr.bf16.mxu0 %v4034
    %5856 = vmatpush1.bf16.msra.mxu0 %v4033
    %5857 = vmatprep.subr.bf16.mxu0 %v4038
    %5858 = vmatpush1.bf16.msra.mxu0 %v4037
    %5859 = vmatprep.subr.bf16.mxu0 %v4042
    %5860 = vmatpush1.bf16.msra.mxu0 %v4041
    %5861 = vmatprep.subr.bf16.mxu0 %v4046
    %5862 = vmatpush1.bf16.msra.mxu0 %v4045
    %5863 = vmatprep.subr.bf16.mxu0 %v4050
    %5864 = vmatpush1.bf16.msra.mxu0 %v4049
    %5865 = vmatprep.subr.bf16.mxu0 %v4054
    %5866 = vmatpush1.bf16.msra.mxu0 %v4053
    %5867 = vmatprep.subr.bf16.mxu0 %v4058
    %5868 = vmatpush1.bf16.msra.mxu0 %v4057
    %5869 = vmatprep.mubr.bf16.mxu0 %v1024
    %5870 = vmatmul.mubr.bf16.gmra.mrb[0].mxu0 %v1023
    %v5871 = vpop.f32.mrb[0].mxu0
    %v5872 = vadd.f32 %v5829, %v5871
    %v5873 = vpop.f32.mrb[0].mxu0
    %v5874 = vadd.f32 %v5831, %v5873
    %v5875 = vpop.f32.mrb[0].mxu0
    %v5876 = vadd.f32 %v5833, %v5875
    %v5877 = vpop.f32.mrb[0].mxu0
    %v5878 = vadd.f32 %v5835, %v5877
    %5879 = vdwg.mxu0
    %5880 = vmatprep.subr.bf16.mxu0 %v4062
    %5881 = vmatpush1.bf16.msra.mxu0 %v4061
    %5882 = vmatprep.subr.bf16.mxu0 %v4066
    %5883 = vmatpush1.bf16.msra.mxu0 %v4065
    %5884 = vmatprep.subr.bf16.mxu0 %v4070
    %5885 = vmatpush1.bf16.msra.mxu0 %v4069
    %5886 = vmatprep.subr.bf16.mxu0 %v4074
    %5887 = vmatpush1.bf16.msra.mxu0 %v4073
    %5888 = vmatprep.subr.bf16.mxu0 %v4078
    %5889 = vmatpush1.bf16.msra.mxu0 %v4077
    %5890 = vmatprep.subr.bf16.mxu0 %v4082
    %5891 = vmatpush1.bf16.msra.mxu0 %v4081
    %5892 = vmatprep.subr.bf16.mxu0 %v4086
    %5893 = vmatpush1.bf16.msra.mxu0 %v4085
    %5894 = vmatprep.subr.bf16.mxu0 %v4090
    %5895 = vmatpush1.bf16.msra.mxu0 %v4089
    %5896 = vmatprep.subr.bf16.mxu0 %v4094
    %5897 = vmatpush1.bf16.msra.mxu0 %v4093
    %5898 = vmatprep.subr.bf16.mxu0 %v4098
    %5899 = vmatpush1.bf16.msra.mxu0 %v4097
    %5900 = vmatprep.subr.bf16.mxu0 %v4102
    %5901 = vmatpush1.bf16.msra.mxu0 %v4101
    %5902 = vmatprep.subr.bf16.mxu0 %v4106
    %5903 = vmatpush1.bf16.msra.mxu0 %v4105
    %5904 = vmatprep.subr.bf16.mxu0 %v4110
    %5905 = vmatpush1.bf16.msra.mxu0 %v4109
    %5906 = vmatprep.subr.bf16.mxu0 %v4114
    %5907 = vmatpush1.bf16.msra.mxu0 %v4113
    %5908 = vmatprep.subr.bf16.mxu0 %v4118
    %5909 = vmatpush1.bf16.msra.mxu0 %v4117
    %5910 = vmatprep.subr.bf16.mxu0 %v4122
    %5911 = vmatpush1.bf16.msra.mxu0 %v4121
    %5912 = vmatprep.mubr.bf16.mxu0 %v1026
    %5913 = vmatmul.mubr.bf16.gmra.mrb[0].mxu0 %v1025
    %v5914 = vpop.f32.mrb[0].mxu0
    %v5915 = vadd.f32 %v5872, %v5914
    %v5916 = vpop.f32.mrb[0].mxu0
    %v5917 = vadd.f32 %v5874, %v5916
    %v5918 = vpop.f32.mrb[0].mxu0
    %v5919 = vadd.f32 %v5876, %v5918
    %v5920 = vpop.f32.mrb[0].mxu0
    %v5921 = vadd.f32 %v5878, %v5920
    %5922 = vdwg.mxu0
    %v5923 = vmax.f32 %v5399, 0.0
    %v5924 = vmax.f32 %v5401, 0.0
    %v5925 = vmax.f32 %v5915, 0.0
    %v5926 = vmax.f32 %v5917, 0.0
    %v5927 = vmax.f32 %v5403, 0.0
    %v5928 = vmax.f32 %v5405, 0.0
    %v5929 = vmax.f32 %v5919, 0.0
    %v5930 = vmax.f32 %v5921, 0.0
    %v5931 = vpack.c.bf16 %v5927, %v5923
    %v5932 = vpack.c.bf16 %v5928, %v5924
    %v5933 = vpack.c.bf16 %v5929, %v5925
    %v5934 = vpack.c.bf16 %v5930, %v5926
    %v5935 = vld [vmem:[#allocation8] sm:$0xf]
    %v5936 = vld [vmem:[#allocation8 + $0x4] sm:$0xf]
    %v5937 = vld [vmem:[#allocation8 + $0x8] sm:$0xf]
    %v5938 = vld [vmem:[#allocation8 + $0xc] sm:$0xf]
    %v5939 = vld [vmem:[#allocation8 + $0x10] sm:$0xf]
    %v5940 = vld [vmem:[#allocation8 + $0x14] sm:$0xf]
    %v5941 = vld [vmem:[#allocation8 + $0x18] sm:$0xf]
    %v5942 = vld [vmem:[#allocation8 + $0x1c] sm:$0xf]
    %v5943 = vld [vmem:[#allocation8 + $0x20] sm:$0xf]
    %v5944 = vld [vmem:[#allocation8 + $0x24] sm:$0xf]
    %v5945 = vld [vmem:[#allocation8 + $0x28] sm:$0xf]
    %v5946 = vld [vmem:[#allocation8 + $0x2c] sm:$0xf]
    %v5947 = vld [vmem:[#allocation8 + $0x30] sm:$0xf]
    %v5948 = vld [vmem:[#allocation8 + $0x34] sm:$0xf]
    %v5949 = vld [vmem:[#allocation8 + $0x38] sm:$0xf]
    %v5950 = vld [vmem:[#allocation8 + $0x3c] sm:$0xf]
    %v5951 = vld [vmem:[#allocation8 + $0x40] sm:$0xf]
    %v5952 = vld [vmem:[#allocation8 + $0x44] sm:$0xf]
    %v5953 = vld [vmem:[#allocation8 + $0x48] sm:$0xf]
    %v5954 = vld [vmem:[#allocation8 + $0x4c] sm:$0xf]
    %v5955 = vld [vmem:[#allocation8 + $0x50] sm:$0xf]
    %v5956 = vld [vmem:[#allocation8 + $0x54] sm:$0xf]
    %v5957 = vld [vmem:[#allocation8 + $0x58] sm:$0xf]
    %v5958 = vld [vmem:[#allocation8 + $0x5c] sm:$0xf]
    %v5959 = vld [vmem:[#allocation8 + $0x60] sm:$0xf]
    %v5960 = vld [vmem:[#allocation8 + $0x64] sm:$0xf]
    %v5961 = vld [vmem:[#allocation8 + $0x68] sm:$0xf]
    %v5962 = vld [vmem:[#allocation8 + $0x6c] sm:$0xf]
    %v5963 = vld [vmem:[#allocation8 + $0x70] sm:$0xf]
    %v5964 = vld [vmem:[#allocation8 + $0x74] sm:$0xf]
    %v5965 = vld [vmem:[#allocation8 + $0x78] sm:$0xf]
    %v5966 = vld [vmem:[#allocation8 + $0x7c] sm:$0xf]
    %v5967 = vld [vmem:[#allocation8 + $0x80] sm:$0xf]
    %v5968 = vld [vmem:[#allocation8 + $0x84] sm:$0xf]
    %v5969 = vld [vmem:[#allocation8 + $0x88] sm:$0xf]
    %v5970 = vld [vmem:[#allocation8 + $0x8c] sm:$0xf]
    %v5971 = vld [vmem:[#allocation8 + $0x90] sm:$0xf]
    %v5972 = vld [vmem:[#allocation8 + $0x94] sm:$0xf]
    %v5973 = vld [vmem:[#allocation8 + $0x98] sm:$0xf]
    %v5974 = vld [vmem:[#allocation8 + $0x9c] sm:$0xf]
    %v5975 = vld [vmem:[#allocation8 + $0xa0] sm:$0xf]
    %v5976 = vld [vmem:[#allocation8 + $0xa4] sm:$0xf]
    %v5977 = vld [vmem:[#allocation8 + $0xa8] sm:$0xf]
    %v5978 = vld [vmem:[#allocation8 + $0xac] sm:$0xf]
    %v5979 = vld [vmem:[#allocation8 + $0xb0] sm:$0xf]
    %v5980 = vld [vmem:[#allocation8 + $0xb4] sm:$0xf]
    %v5981 = vld [vmem:[#allocation8 + $0xb8] sm:$0xf]
    %v5982 = vld [vmem:[#allocation8 + $0xbc] sm:$0xf]
    %v5983 = vld [vmem:[#allocation8 + $0xc0] sm:$0xf]
    %v5984 = vld [vmem:[#allocation8 + $0xc4] sm:$0xf]
    %v5985 = vld [vmem:[#allocation8 + $0xc8] sm:$0xf]
    %v5986 = vld [vmem:[#allocation8 + $0xcc] sm:$0xf]
    %v5987 = vld [vmem:[#allocation8 + $0xd0] sm:$0xf]
    %v5988 = vld [vmem:[#allocation8 + $0xd4] sm:$0xf]
    %v5989 = vld [vmem:[#allocation8 + $0xd8] sm:$0xf]
    %v5990 = vld [vmem:[#allocation8 + $0xdc] sm:$0xf]
    %v5991 = vld [vmem:[#allocation8 + $0xe0] sm:$0xf]
    %v5992 = vld [vmem:[#allocation8 + $0xe4] sm:$0xf]
    %v5993 = vld [vmem:[#allocation8 + $0xe8] sm:$0xf]
    %v5994 = vld [vmem:[#allocation8 + $0xec] sm:$0xf]
    %v5995 = vld [vmem:[#allocation8 + $0xf0] sm:$0xf]
    %v5996 = vld [vmem:[#allocation8 + $0xf4] sm:$0xf]
    %v5997 = vld [vmem:[#allocation8 + $0xf8] sm:$0xf]
    %v5998 = vld [vmem:[#allocation8 + $0xfc] sm:$0xf]
    %v5999 = vld [vmem:[#allocation10] sm:$0x1]
    %v6001 = vlaneseq
    %v6002 = vshrl.u32 %v6001, 7
    %v6003 = vsub.s32 0, %v6002
    %v6004 = vrot.slane %v5999, %v6003
    %v6070 = vunpack.c.l.b16 %v5935
    %v6071 = vunpack.c.l.b16 %v5936
    %v6072 = vunpack.c.l.b16 %v5937
    %v6073 = vunpack.c.l.b16 %v5938
    %v6074 = vunpack.c.l.b16 %v5939
    %v6075 = vunpack.c.l.b16 %v5940
    %v6076 = vunpack.c.l.b16 %v5941
    %v6077 = vunpack.c.l.b16 %v5942
    %v6078 = vunpack.c.l.b16 %v5943
    %v6079 = vunpack.c.l.b16 %v5944
    %v6080 = vunpack.c.l.b16 %v5945
    %v6081 = vunpack.c.l.b16 %v5946
    %v6082 = vunpack.c.l.b16 %v5947
    %v6083 = vunpack.c.l.b16 %v5948
    %v6084 = vunpack.c.l.b16 %v5949
    %v6085 = vunpack.c.l.b16 %v5950
    %v6086 = vunpack.c.l.b16 %v5951
    %v6087 = vunpack.c.l.b16 %v5952
    %v6088 = vunpack.c.l.b16 %v5953
    %v6089 = vunpack.c.l.b16 %v5954
    %v6090 = vunpack.c.l.b16 %v5955
    %v6091 = vunpack.c.l.b16 %v5956
    %v6092 = vunpack.c.l.b16 %v5957
    %v6093 = vunpack.c.l.b16 %v5958
    %v6094 = vunpack.c.l.b16 %v5959
    %v6095 = vunpack.c.l.b16 %v5960
    %v6096 = vunpack.c.l.b16 %v5961
    %v6097 = vunpack.c.l.b16 %v5962
    %v6098 = vunpack.c.l.b16 %v5963
    %v6099 = vunpack.c.l.b16 %v5964
    %v6100 = vunpack.c.l.b16 %v5965
    %v6101 = vunpack.c.l.b16 %v5966
    %v6102 = vunpack.c.l.b16 %v5967
    %v6103 = vunpack.c.l.b16 %v5968
    %v6104 = vunpack.c.l.b16 %v5969
    %v6105 = vunpack.c.l.b16 %v5970
    %v6106 = vunpack.c.l.b16 %v5971
    %v6107 = vunpack.c.l.b16 %v5972
    %v6108 = vunpack.c.l.b16 %v5973
    %v6109 = vunpack.c.l.b16 %v5974
    %v6110 = vunpack.c.l.b16 %v5975
    %v6111 = vunpack.c.l.b16 %v5976
    %v6112 = vunpack.c.l.b16 %v5977
    %v6113 = vunpack.c.l.b16 %v5978
    %v6114 = vunpack.c.l.b16 %v5979
    %v6115 = vunpack.c.l.b16 %v5980
    %v6116 = vunpack.c.l.b16 %v5981
    %v6117 = vunpack.c.l.b16 %v5982
    %v6118 = vunpack.c.l.b16 %v5983
    %v6119 = vunpack.c.l.b16 %v5984
    %v6120 = vunpack.c.l.b16 %v5985
    %v6121 = vunpack.c.l.b16 %v5986
    %v6122 = vunpack.c.l.b16 %v5987
    %v6123 = vunpack.c.l.b16 %v5988
    %v6124 = vunpack.c.l.b16 %v5989
    %v6125 = vunpack.c.l.b16 %v5990
    %v6126 = vunpack.c.l.b16 %v5991
    %v6127 = vunpack.c.l.b16 %v5992
    %v6128 = vunpack.c.l.b16 %v5993
    %v6129 = vunpack.c.l.b16 %v5994
    %v6130 = vunpack.c.l.b16 %v5995
    %v6131 = vunpack.c.l.b16 %v5996
    %v6132 = vunpack.c.l.b16 %v5997
    %v6133 = vunpack.c.l.b16 %v5998
    %v6134 = vpack.c.b16 %v6071, %v6070
    %v6135 = vpack.c.b16 %v6073, %v6072
    %v6136 = vpack.c.b16 %v6075, %v6074
    %v6137 = vpack.c.b16 %v6077, %v6076
    %v6138 = vpack.c.b16 %v6079, %v6078
    %v6139 = vpack.c.b16 %v6081, %v6080
    %v6140 = vpack.c.b16 %v6083, %v6082
    %v6141 = vpack.c.b16 %v6085, %v6084
    %v6142 = vpack.c.b16 %v6087, %v6086
    %v6143 = vpack.c.b16 %v6089, %v6088
    %v6144 = vpack.c.b16 %v6091, %v6090
    %v6145 = vpack.c.b16 %v6093, %v6092
    %v6146 = vpack.c.b16 %v6095, %v6094
    %v6147 = vpack.c.b16 %v6097, %v6096
    %v6148 = vpack.c.b16 %v6099, %v6098
    %v6149 = vpack.c.b16 %v6101, %v6100
    %v6150 = vpack.c.b16 %v6103, %v6102
    %v6151 = vpack.c.b16 %v6105, %v6104
    %v6152 = vpack.c.b16 %v6107, %v6106
    %v6153 = vpack.c.b16 %v6109, %v6108
    %v6154 = vpack.c.b16 %v6111, %v6110
    %v6155 = vpack.c.b16 %v6113, %v6112
    %v6156 = vpack.c.b16 %v6115, %v6114
    %v6157 = vpack.c.b16 %v6117, %v6116
    %v6158 = vpack.c.b16 %v6119, %v6118
    %v6159 = vpack.c.b16 %v6121, %v6120
    %v6160 = vpack.c.b16 %v6123, %v6122
    %v6161 = vpack.c.b16 %v6125, %v6124
    %v6162 = vpack.c.b16 %v6127, %v6126
    %v6163 = vpack.c.b16 %v6129, %v6128
    %v6164 = vpack.c.b16 %v6131, %v6130
    %v6165 = vpack.c.b16 %v6133, %v6132
    %6198 = vmatprep.subr.bf16.mxu0 0
    %6199 = vmatpush1.bf16.msra.mxu0 %v6134
    %6200 = vmatprep.subr.bf16.mxu0 0
    %6201 = vmatpush1.bf16.msra.mxu0 %v6135
    %6202 = vmatprep.subr.bf16.mxu0 0
    %6203 = vmatpush1.bf16.msra.mxu0 %v6136
    %6204 = vmatprep.subr.bf16.mxu0 0
    %6205 = vmatpush1.bf16.msra.mxu0 %v6137
    %6206 = vmatprep.subr.bf16.mxu0 0
    %6207 = vmatpush1.bf16.msra.mxu0 %v6138
    %6208 = vmatprep.subr.bf16.mxu0 0
    %6209 = vmatpush1.bf16.msra.mxu0 %v6139
    %6210 = vmatprep.subr.bf16.mxu0 0
    %6211 = vmatpush1.bf16.msra.mxu0 %v6140
    %6212 = vmatprep.subr.bf16.mxu0 0
    %6213 = vmatpush1.bf16.msra.mxu0 %v6141
    %6214 = vmatprep.subr.bf16.mxu0 0
    %6215 = vmatpush1.bf16.msra.mxu0 %v6142
    %6216 = vmatprep.subr.bf16.mxu0 0
    %6217 = vmatpush1.bf16.msra.mxu0 %v6143
    %6218 = vmatprep.subr.bf16.mxu0 0
    %6219 = vmatpush1.bf16.msra.mxu0 %v6144
    %6220 = vmatprep.subr.bf16.mxu0 0
    %6221 = vmatpush1.bf16.msra.mxu0 %v6145
    %6222 = vmatprep.subr.bf16.mxu0 0
    %6223 = vmatpush1.bf16.msra.mxu0 %v6146
    %6224 = vmatprep.subr.bf16.mxu0 0
    %6225 = vmatpush1.bf16.msra.mxu0 %v6147
    %6226 = vmatprep.subr.bf16.mxu0 0
    %6227 = vmatpush1.bf16.msra.mxu0 %v6148
    %6228 = vmatprep.subr.bf16.mxu0 0
    %6229 = vmatpush1.bf16.msra.mxu0 %v6149
    %6230 = vmatprep.mubr.bf16.mxu0 %v5932
    %6231 = vmatmul.mubr.bf16.gmra.mrb[0].mxu0 %v5931
    %v6232 = vpop.f32.mrb[0].mxu0
    %v6233 = vadd.f32 %v6004, %v6232
    %v6234 = vpop.f32.mrb[0].mxu0
    %v6235 = vpop.f32.mrb[0].mxu0
    %v6236 = vadd.f32 %v6004, %v6235
    %v6237 = vpop.f32.mrb[0].mxu0
    %6238 = vdwg.mxu0
    %6239 = vmatprep.subr.bf16.mxu0 0
    %6240 = vmatpush1.bf16.msra.mxu0 %v6150
    %6241 = vmatprep.subr.bf16.mxu0 0
    %6242 = vmatpush1.bf16.msra.mxu0 %v6151
    %6243 = vmatprep.subr.bf16.mxu0 0
    %6244 = vmatpush1.bf16.msra.mxu0 %v6152
    %6245 = vmatprep.subr.bf16.mxu0 0
    %6246 = vmatpush1.bf16.msra.mxu0 %v6153
    %6247 = vmatprep.subr.bf16.mxu0 0
    %6248 = vmatpush1.bf16.msra.mxu0 %v6154
    %6249 = vmatprep.subr.bf16.mxu0 0
    %6250 = vmatpush1.bf16.msra.mxu0 %v6155
    %6251 = vmatprep.subr.bf16.mxu0 0
    %6252 = vmatpush1.bf16.msra.mxu0 %v6156
    %6253 = vmatprep.subr.bf16.mxu0 0
    %6254 = vmatpush1.bf16.msra.mxu0 %v6157
    %6255 = vmatprep.subr.bf16.mxu0 0
    %6256 = vmatpush1.bf16.msra.mxu0 %v6158
    %6257 = vmatprep.subr.bf16.mxu0 0
    %6258 = vmatpush1.bf16.msra.mxu0 %v6159
    %6259 = vmatprep.subr.bf16.mxu0 0
    %6260 = vmatpush1.bf16.msra.mxu0 %v6160
    %6261 = vmatprep.subr.bf16.mxu0 0
    %6262 = vmatpush1.bf16.msra.mxu0 %v6161
    %6263 = vmatprep.subr.bf16.mxu0 0
    %6264 = vmatpush1.bf16.msra.mxu0 %v6162
    %6265 = vmatprep.subr.bf16.mxu0 0
    %6266 = vmatpush1.bf16.msra.mxu0 %v6163
    %6267 = vmatprep.subr.bf16.mxu0 0
    %6268 = vmatpush1.bf16.msra.mxu0 %v6164
    %6269 = vmatprep.subr.bf16.mxu0 0
    %6270 = vmatpush1.bf16.msra.mxu0 %v6165
    %6271 = vmatprep.mubr.bf16.mxu0 %v5934
    %6272 = vmatmul.mubr.bf16.gmra.mrb[0].mxu0 %v5933
    %v6273 = vpop.f32.mrb[0].mxu0
    %v6274 = vadd.f32 %v6233, %v6273
    %v6275 = vpop.f32.mrb[0].mxu0
    %v6276 = vpop.f32.mrb[0].mxu0
    %v6277 = vadd.f32 %v6236, %v6276
    %v6278 = vpop.f32.mrb[0].mxu0
    %6279 = vdwg.mxu0
    %v6280 = vmax.f32 %v6274, 0.0
    %v6281 = vmax.f32 %v6277, 0.0
    %v6282 = vpack.c.bf16 %v6281, %v6280
    %v6283 = vld [vmem:[#allocation11] sm:$0xf]
    %v6284 = vld [vmem:[#allocation11 + $0x4] sm:$0xf]
    %v6285 = vld [vmem:[#allocation11 + $0x8] sm:$0xf]
    %v6286 = vld [vmem:[#allocation11 + $0xc] sm:$0xf]
    %v6287 = vld [vmem:[#allocation11 + $0x10] sm:$0xf]
    %v6288 = vld [vmem:[#allocation11 + $0x14] sm:$0xf]
    %v6289 = vld [vmem:[#allocation11 + $0x18] sm:$0xf]
    %v6290 = vld [vmem:[#allocation11 + $0x1c] sm:$0xf]
    %v6291 = vld [vmem:[#allocation11 + $0x20] sm:$0xf]
    %v6292 = vld [vmem:[#allocation11 + $0x24] sm:$0xf]
    %v6293 = vld [vmem:[#allocation11 + $0x28] sm:$0xf]
    %v6294 = vld [vmem:[#allocation11 + $0x2c] sm:$0xf]
    %v6295 = vld [vmem:[#allocation11 + $0x30] sm:$0xf]
    %v6296 = vld [vmem:[#allocation11 + $0x34] sm:$0xf]
    %v6297 = vld [vmem:[#allocation11 + $0x38] sm:$0xf]
    %v6298 = vld [vmem:[#allocation11 + $0x3c] sm:$0xf]
    %v6299 = vld [vmem:[#allocation13] sm:$0x1]
    %v6301 = vlaneseq
    %v6302 = vshrl.u32 %v6301, 7
    %v6303 = vsub.s32 0, %v6302
    %v6304 = vrot.slane %v6299, %v6303
    %v6322 = vunpack.c.l.b16 %v6283
    %v6323 = vunpack.c.l.b16 %v6284
    %v6324 = vunpack.c.l.b16 %v6285
    %v6325 = vunpack.c.l.b16 %v6286
    %v6326 = vunpack.c.l.b16 %v6287
    %v6327 = vunpack.c.l.b16 %v6288
    %v6328 = vunpack.c.l.b16 %v6289
    %v6329 = vunpack.c.l.b16 %v6290
    %v6330 = vunpack.c.l.b16 %v6291
    %v6331 = vunpack.c.l.b16 %v6292
    %v6332 = vunpack.c.l.b16 %v6293
    %v6333 = vunpack.c.l.b16 %v6294
    %v6334 = vunpack.c.l.b16 %v6295
    %v6335 = vunpack.c.l.b16 %v6296
    %v6336 = vunpack.c.l.b16 %v6297
    %v6337 = vunpack.c.l.b16 %v6298
    %v6338 = vpack.c.b16 %v6323, %v6322
    %v6339 = vpack.c.b16 %v6325, %v6324
    %v6340 = vpack.c.b16 %v6327, %v6326
    %v6341 = vpack.c.b16 %v6329, %v6328
    %v6342 = vpack.c.b16 %v6331, %v6330
    %v6343 = vpack.c.b16 %v6333, %v6332
    %v6344 = vpack.c.b16 %v6335, %v6334
    %v6345 = vpack.c.b16 %v6337, %v6336
    %6354 = vmatprep.subr.bf16.mxu0 0
    %6355 = vmatpush1.bf16.msra.mxu0 %v6338
    %6356 = vmatprep.subr.bf16.mxu0 0
    %6357 = vmatpush1.bf16.msra.mxu0 %v6339
    %6358 = vmatprep.subr.bf16.mxu0 0
    %6359 = vmatpush1.bf16.msra.mxu0 %v6340
    %6360 = vmatprep.subr.bf16.mxu0 0
    %6361 = vmatpush1.bf16.msra.mxu0 %v6341
    %6362 = vmatprep.subr.bf16.mxu0 0
    %6363 = vmatpush1.bf16.msra.mxu0 %v6342
    %6364 = vmatprep.subr.bf16.mxu0 0
    %6365 = vmatpush1.bf16.msra.mxu0 %v6343
    %6366 = vmatprep.subr.bf16.mxu0 0
    %6367 = vmatpush1.bf16.msra.mxu0 %v6344
    %6368 = vmatprep.subr.bf16.mxu0 0
    %6369 = vmatpush1.bf16.msra.mxu0 %v6345
    %6370 = vmatprep.subr.bf16.mxu0 0
    %6371 = vmatpush1.bf16.msra.mxu0 0
    %6372 = vmatprep.subr.bf16.mxu0 0
    %6373 = vmatpush1.bf16.msra.mxu0 0
    %6374 = vmatprep.subr.bf16.mxu0 0
    %6375 = vmatpush1.bf16.msra.mxu0 0
    %6376 = vmatprep.subr.bf16.mxu0 0
    %6377 = vmatpush1.bf16.msra.mxu0 0
    %6378 = vmatprep.subr.bf16.mxu0 0
    %6379 = vmatpush1.bf16.msra.mxu0 0
    %6380 = vmatprep.subr.bf16.mxu0 0
    %6381 = vmatpush1.bf16.msra.mxu0 0
    %6382 = vmatprep.subr.bf16.mxu0 0
    %6383 = vmatpush1.bf16.msra.mxu0 0
    %6384 = vmatprep.subr.bf16.mxu0 0
    %6385 = vmatpush1.bf16.msra.mxu0 0
    %6386 = vmatprep.mubr.bf16.mxu0 0
    %6387 = vmatmul.mubr.bf16.gmra.mrb[0].mxu0 %v6282
    %v6388 = vpop.f32.mrb[0].mxu0
    %v6389 = vadd.f32 %v6304, %v6388
    %v6390 = vpop.f32.mrb[0].mxu0
    %v6391 = vpop.f32.mrb[0].mxu0
    %v6392 = vadd.f32 %v6304, %v6391
    %v6393 = vpop.f32.mrb[0].mxu0
    %6394 = vdwg.mxu0
    %6395 = vst [vmem:[#allocation14] sm:$0xff] %v6389
    %6396 = vst [vmem:[#allocation14 + $0x8] sm:$0xff] %v6392
    // Predicated region
    $region58: #{tpu_custom_call.1} parent=1 // pred_check
      _
    $region59: #{tpu_custom_call.1} parent=1 // pred_check_branch
      %6398 = sbr.rel (0) target = $region61
    $region60: #{tpu_custom_call.1} parent=1 // pred_region
      %s6400 = ssub.s32 256, 128
      %6401 = vsyncadd [#allocation4], %s6400
      %s6402 = sshll.u32 [#allocation14], 4
      %s6403 = int_to_ptr.vmem [resolvable:$true] %s6402
      %6408 = dma.vmem_to_hbm [thread:$0]  %s6403, 128, %s7, [#allocation4], 128, 128, 8
    $region61: #{tpu_custom_call.1} parent=1 // pred_fallthru
      _
    // Predicated region
    $region62: #{tpu_custom_call.1} parent=1 // pred_check
      _
    $region63: #{tpu_custom_call.1} parent=1 // pred_check_branch
      %6410 = sbr.rel (0) target = $region65
    $region64: #{tpu_custom_call.1} parent=1 // pred_region
      %6411 = dma.done [#allocation4], 256
    $region65: #{tpu_custom_call.1} parent=1 // pred_fallthru
      _
    %6412 = vsyncpa [#allocation3], 1
    %6413 = vsyncpa [#allocation6], 1
    %6414 = vsyncpa [#allocation9], 1
    %6415 = vsyncpa [#allocation12], 1
    %6416 = vsyncpa [#allocation4], 1

</llo_original>
